<compile_context>
chip_gen: v6e
topology: v6e:2x2x1
jax: 0.10.0
libtpu: 0.0.40
codegen_flags: <defaults>
</compile_context>

<pallas_src>
import functools

import jax
import jax.numpy as jnp
from jax.experimental import pallas as pl
from jax.experimental.pallas import tpu as pltpu


# ----------------------------------------------------------------------------
# small helpers / chip-aware budgets
# ----------------------------------------------------------------------------
def _round_up(x, m):
    return ((x + m - 1) // m) * m


def _pick_tile(dim, cap, align):
    """Largest tile <= cap that is a multiple of `align` and divides `dim`.
    If dim <= cap, use the full dim.  Falls back to (cap, padded dim)."""
    cap = max(align, (cap // align) * align)
    if dim <= cap:
        return dim, dim
    t = cap
    while t >= align:
        if dim % t == 0:
            return t, dim
        t -= align
    return cap, _round_up(dim, cap)


def _detect_chip():
    """Conservative chip detection: (big_vmem, two_cores)."""
    vmem = None
    try:
        vmem = int(pltpu.get_tpu_info().vmem_capacity_bytes)
    except Exception:
        vmem = None
    kind = ""
    try:
        kind = jax.devices()[0].device_kind.lower()
    except Exception:
        kind = ""
    is_v7 = ("v7" in kind) or ("7x" in kind)
    if vmem is None:
        vmem = 64 * 1024 * 1024          # unknown -> assume the small-VMEM chip
    big = (vmem >= 100 * 1024 * 1024) and not is_v7
    two_cores = is_v7 or not big
    return big, two_cores


_BIG_VMEM, _TWO_CORES = _detect_chip()

# Per-buffer budgets (Pallas double-buffers each pipelined operand).
_X_BLOCK_BYTES = (8 if _BIG_VMEM else 4) * 1024 * 1024
_W_BLOCK_BYTES = (16 if _BIG_VMEM else 10) * 1024 * 1024
_POOL_BLOCK_BYTES = 2 * 1024 * 1024
_VMEM_LIMIT = (64 if _BIG_VMEM else 40) * 1024 * 1024
_FULL_K_MAX = 10240                 # full-K (no K grid axis) up to this K
_MAX_TK = 7168                      # K tile for the huge-K fc1 layer

# Accuracy-affecting option (review-approved): store the fc1 weight as int8
# with per-column scales; dequantized to bf16 inside the kernel.
QUANTIZE_FC1_INT8 = True


# ----------------------------------------------------------------------------
# Pallas matmul kernels (bias + LeakyReLU fused in the epilogue, f32 math)
# ----------------------------------------------------------------------------
def _mm_fullk_kernel(x_ref, w_ref, b_ref, o_ref, *, negative_slope):
    y = jnp.dot(x_ref[...], w_ref[...], preferred_element_type=jnp.float32)
    y = y + b_ref[...]
    if negative_slope is not None:
        y = jnp.where(y > 0, y, negative_slope * y)
    o_ref[...] = y.astype(o_ref.dtype)


def _mm_fullk_q_kernel(x_ref, w_ref, s_ref, b_ref, o_ref, *, negative_slope):
    w = w_ref[...].astype(jnp.float32).astype(jnp.bfloat16)
    y = jnp.dot(x_ref[...], w, preferred_element_type=jnp.float32)
    y = y * s_ref[...] + b_ref[...]
    if negative_slope is not None:
        y = jnp.where(y > 0, y, negative_slope * y)
    o_ref[...] = y.astype(o_ref.dtype)


def _mm_ktiled_kernel(x_ref, w_ref, b_ref, o_ref, acc_ref, *, negative_slope):
    @pl.when(pl.program_id(2) == 0)
    def _():
        acc_ref[...] = jnp.zeros_like(acc_ref)

    acc_ref[...] += jnp.dot(x_ref[...], w_ref[...],
                            preferred_element_type=jnp.float32)

    @pl.when(pl.program_id(2) == pl.num_programs(2) - 1)
    def _():
        y = acc_ref[...] + b_ref[...]
        if negative_slope is not None:
            y = jnp.where(y > 0, y, negative_slope * y)
        o_ref[...] = y.astype(o_ref.dtype)


def _mm_ktiled_q_kernel(x_ref, w_ref, s_ref, b_ref, o_ref, acc_ref,
                        *, negative_slope):
    @pl.when(pl.program_id(2) == 0)
    def _():
        acc_ref[...] = jnp.zeros_like(acc_ref)

    w = w_ref[...].astype(jnp.float32).astype(jnp.bfloat16)   # int8 -> bf16
    acc_ref[...] += jnp.dot(x_ref[...], w, preferred_element_type=jnp.float32)

    @pl.when(pl.program_id(2) == pl.num_programs(2) - 1)
    def _():
        y = acc_ref[...] * s_ref[...] + b_ref[...]
        if negative_slope is not None:
            y = jnp.where(y > 0, y, negative_slope * y)
        o_ref[...] = y.astype(o_ref.dtype)


@functools.lru_cache(maxsize=None)
def _build_matmul_call(Mp, Kp, N, tm, tk, tn, negative_slope, out_dtype_name,
                       quantized):
    out_dtype = jnp.dtype(out_dtype_name)
    nm, nn, nk = Mp // tm, N // tn, Kp // tk
    if nk == 1:
        base = _mm_fullk_q_kernel if quantized else _mm_fullk_kernel
        kernel = functools.partial(base, negative_slope=negative_slope)
        grid = (nm, nn)
        x_spec = pl.BlockSpec((tm, tk), lambda i, j: (i, 0))
        w_spec = pl.BlockSpec((tk, tn), lambda i, j: (0, j))
        v_spec = pl.BlockSpec((1, tn), lambda i, j: (0, j))
        in_specs = [x_spec, w_spec] + ([v_spec] if quantized else []) + [v_spec]
        out_specs = pl.BlockSpec((tm, tn), lambda i, j: (i, j))
        scratch = []
        dims = ("parallel", "parallel")
    else:
        base = _mm_ktiled_q_kernel if quantized else _mm_ktiled_kernel
        kernel = functools.partial(base, negative_slope=negative_slope)
        grid = (nm, nn, nk)
        x_spec = pl.BlockSpec((tm, tk), lambda i, j, k: (i, k))
        w_spec = pl.BlockSpec((tk, tn), lambda i, j, k: (k, j))
        v_spec = pl.BlockSpec((1, tn), lambda i, j, k: (0, j))
        in_specs = [x_spec, w_spec] + ([v_spec] if quantized else []) + [v_spec]
        out_specs = pl.BlockSpec((tm, tn), lambda i, j, k: (i, j))
        scratch = [pltpu.VMEM((tm, tn), jnp.float32)]
        dims = ("parallel", "parallel", "arbitrary")

    return pl.pallas_call(
        kernel,
        out_shape=jax.ShapeDtypeStruct((Mp, N), out_dtype),
        grid_spec=pltpu.PrefetchScalarGridSpec(
            num_scalar_prefetch=0,
            grid=grid,
            in_specs=in_specs,
            out_specs=out_specs,
            scratch_shapes=scratch,
        ),
        compiler_params=pltpu.CompilerParams(
            dimension_semantics=dims, vmem_limit_bytes=_VMEM_LIMIT),
    )


def matmul_bias_act(x, w, b2d, *, scale=None, negative_slope=None,
                    out_dtype=jnp.bfloat16):
    """y = leaky_relu(x @ w [*scale] + b); x:(M,K) bf16, w:(K,N) bf16/int8,
    scale:(1,N) f32 or None, b2d:(1,N) f32."""
    orig_M, K = x.shape
    Kw, N = w.shape
    assert K == Kw and b2d.shape == (1, N)
    quantized = scale is not None

    # M padding: multiple of 16 (bf16 sublane packing; fc layers pad 1 -> 16).
    M = _round_up(max(orig_M, 1), 16)
    if M != orig_M:
        x = jnp.pad(x, ((0, M - orig_M), (0, 0)))

    # K blocking: full-K for every conv / fc2; tiled only for fc1 (K=50176).
    if K <= _FULL_K_MAX:
        tk, Kp = K, K
    else:
        tk, Kp = _pick_tile(K, _MAX_TK, 128)
    if Kp != K:
        x = jnp.pad(x, ((0, 0), (0, Kp - K)))
        w = jnp.pad(w, ((0, Kp - K), (0, 0)))

    # M blocking: largest divisor of M within the activation-block budget.
    x_cap = min(2048, max(16, (_X_BLOCK_BYTES // (tk * x.dtype.itemsize)) // 8 * 8))
    tm, Mp = _pick_tile(M, x_cap, 8)
    if Mp != M:
        x = jnp.pad(x, ((0, Mp - M), (0, 0)))
    nm = Mp // tm

    # N blocking: full-N when small, else the largest lane-dense tile that fits
    # the (chip-dependent) weight-block budget.
    w_bytes = w.dtype.itemsize
    if N <= 512:
        tn = N
    else:
        tn = N
        for cand in (2048, 1024, 512, 256, 128):
            if N % cand == 0 and tk * cand * w_bytes <= _W_BLOCK_BYTES:
                tn = cand
                break
    nn = N // tn
    # Give a second TensorCore something to split only on two-core chips.
    if _TWO_CORES and nm == 1 and nn == 1 and N >= 256 and N % 256 == 0:
        tn = N // 2

    call = _build_matmul_call(Mp, Kp, N, tm, tk, tn, negative_slope,
                              jnp.dtype(out_dtype).name, quantized)
    out = call(x, w, scale, b2d) if quantized else call(x, w, b2d)
    if Mp != orig_M:
        out = out[:orig_M]
    return out


# ----------------------------------------------------------------------------
# Tap-accumulation 3x3 stride-1 conv (no im2col materialization)
# ----------------------------------------------------------------------------
def _tap_conv_kernel(x_ref, w_ref, b_ref, o_ref, *, tr, W, Cin, negative_slope):
    # x_ref: full padded input (H+2, W+2, Cin), resident in VMEM.
    # w_ref: (9*Cin, tn) tap-major weight slab.  o_ref: (tr, W, tn).
    r0 = pl.program_id(1) * tr
    bias = b_ref[...]                                  # (1, tn) f32
    tn = o_ref.shape[-1]
    for t in range(tr):                                # unrolled (tr <= 8)
        acc = jnp.zeros((W, tn), jnp.float32)
        for dy in range(3):
            x_row = x_ref[r0 + t + dy]                 # (W+2, Cin)
            for dx in range(3):
                w_tap = w_ref[pl.ds((dy * 3 + dx) * Cin, Cin), :]
                acc = acc + jnp.dot(x_row[dx:dx + W, :], w_tap,
                                    preferred_element_type=jnp.float32)
        y = acc + bias
        y = jnp.where(y > 0, y, negative_slope * y)
        o_ref[t] = y.astype(o_ref.dtype)


@functools.lru_cache(maxsize=None)
def _build_tap_conv_call(H, W, Cin, Cout, tr, tn, negative_slope):
    Hp, Wp = H + 2, W + 2
    kernel = functools.partial(_tap_conv_kernel, tr=tr, W=W, Cin=Cin,
                               negative_slope=negative_slope)
    # Cout axis is the OUTER grid axis so each weight slab is fetched once and
    # reused for all row tiles; the input block index never changes (one DMA).
    grid = (Cout // tn, H // tr)
    return pl.pallas_call(
        kernel,
        out_shape=jax.ShapeDtypeStruct((H, W, Cout), jnp.bfloat16),
        grid_spec=pltpu.PrefetchScalarGridSpec(
            num_scalar_prefetch=0,
            grid=grid,
            in_specs=[
                pl.BlockSpec((Hp, Wp, Cin), lambda j, r: (0, 0, 0)),
                pl.BlockSpec((9 * Cin, tn), lambda j, r: (0, j)),
                pl.BlockSpec((1, tn), lambda j, r: (0, j)),
            ],
            out_specs=pl.BlockSpec((tr, W, tn), lambda j, r: (r, 0, j)),
        ),
        compiler_params=pltpu.CompilerParams(
            dimension_semantics=("parallel", "parallel"),
            vmem_limit_bytes=_VMEM_LIMIT),
    )


def conv3x3_tap(x, wmat, b2d, negative_slope=0.1):
    """3x3 stride-1 'same' conv via in-kernel tap accumulation.
    x: (1, H, W, Cin) bf16; wmat: (9*Cin, Cout) bf16 tap-major; b2d: (1, Cout)."""
    N, H, W, Cin = x.shape
    assert N == 1 and wmat.shape[0] == 9 * Cin
    Cout = wmat.shape[1]
    xp = jnp.pad(x[0], ((1, 1), (1, 1), (0, 0)))        # (H+2, W+2, Cin)
    tr = 1
    for cand in range(min(8, H), 0, -1):
        if H % cand == 0:
            tr = cand
            break
    # Keep the per-row f32 register accumulator small: cap the Cout tile at 256.
    tn = Cout if (Cout <= 256 or Cout % 256 != 0) else 256
    y = _build_tap_conv_call(H, W, Cin, Cout, tr, tn, float(negative_slope))(
        xp, wmat, b2d)
    return y[None]


# ----------------------------------------------------------------------------
# MaxPool2d(2, 2): single-input Pallas kernel over a free reshape
# ----------------------------------------------------------------------------
def _pool_kernel(x_ref, o_ref):
    C = o_ref.shape[-1]
    a = x_ref[:, 0]                     # (tm, Wo, 2C) -> even input rows
    b = x_ref[:, 1]                     # odd input rows
    m = jnp.maximum(a, b)
    o_ref[...] = jnp.maximum(m[..., :C], m[..., C:])


@functools.lru_cache(maxsize=None)
def _build_pool_call(Ho, Wo, C, tm, dtype_name):
    dtype = jnp.dtype(dtype_name)
    return pl.pallas_call(
        _pool_kernel,
        out_shape=jax.ShapeDtypeStruct((Ho, Wo, C), dtype),
        grid_spec=pltpu.PrefetchScalarGridSpec(
            num_scalar_prefetch=0,
            grid=(Ho // tm,),
            in_specs=[pl.BlockSpec((tm, 2, Wo, 2 * C), lambda i: (i, 0, 0, 0))],
            out_specs=pl.BlockSpec((tm, Wo, C), lambda i: (i, 0, 0)),
        ),
        compiler_params=pltpu.CompilerParams(
            dimension_semantics=("parallel",), vmem_limit_bytes=_VMEM_LIMIT),
    )


def maxpool2x2(x):
    """MaxPool2d(kernel=2, stride=2) on an NHWC tensor (N == 1)."""
    N, H, W, C = x.shape
    assert N == 1 and H % 2 == 0 and W % 2 == 0
    Ho, Wo = H // 2, W // 2
    xr = x.reshape(Ho, 2, Wo, 2 * C)            # pure reshape, no data movement
    row_bytes = 2 * Wo * 2 * C * x.dtype.itemsize
    cap = max(1, _POOL_BLOCK_BYTES // row_bytes)
    tm, _ = _pick_tile(Ho, cap, 1)
    out = _build_pool_call(Ho, Wo, C, tm, jnp.dtype(x.dtype).name)(xr)
    return out[None]


# ----------------------------------------------------------------------------
# Conv2d dispatch: tap-accumulation for big 3x3/s1 layers, im2col otherwise
# ----------------------------------------------------------------------------
def conv2d(x, wmat, b2d, k, stride, padding, negative_slope=0.1):
    """x: NHWC bf16; wmat: (k*k*Cin, Cout) bf16 tap-major; b2d: (1, Cout) f32."""
    N, H, W, Cin = x.shape
    Cout = wmat.shape[1]

    if (k == 3 and stride == 1 and padding == 1 and N == 1
            and min(H, W) >= 56):
        return conv3x3_tap(x, wmat, b2d, negative_slope)

    Ho = (H + 2 * padding - k) // stride + 1
    Wo = (W + 2 * padding - k) // stride + 1

    if k == 1 and stride == 1 and padding == 0:
        pmat = x.reshape(N * H * W, Cin)          # 1x1 conv: im2col is a reshape
    else:
        # Small-spatial / strided layers: the patch matrix is tiny, keep im2col.
        xp = jnp.pad(x, ((0, 0), (padding, padding), (padding, padding), (0, 0)))
        patches = []
        for dy in range(k):
            for dx in range(k):
                patches.append(
                    xp[:, dy: dy + (Ho - 1) * stride + 1: stride,
                          dx: dx + (Wo - 1) * stride + 1: stride, :])
        # feature ordering: ((dy*k + dx)*Cin + c)  -- matches wmat built at init
        pmat = jnp.concatenate(patches, axis=-1).reshape(N * Ho * Wo, k * k * Cin)

    y = matmul_bias_act(pmat, wmat, b2d, negative_slope=negative_slope,
                        out_dtype=jnp.bfloat16)
    return y.reshape(N, Ho, Wo, Cout)


# ----------------------------------------------------------------------------
# YOLOv1 architecture
# ----------------------------------------------------------------------------
# ("conv", cin, cout, k, stride, pad) / ("pool",)
CONV_CFG = [
    ("conv", 3, 64, 7, 2, 3), ("pool",),
    ("conv", 64, 192, 3, 1, 1), ("pool",),
    ("conv", 192, 128, 1, 1, 0),
    ("conv", 128, 256, 3, 1, 1),
    ("conv", 256, 256, 1, 1, 0),
    ("conv", 256, 512, 3, 1, 1), ("pool",),
    ("conv", 512, 256, 1, 1, 0),
    ("conv", 256, 512, 3, 1, 1),
    ("conv", 512, 256, 1, 1, 0),
    ("conv", 256, 512, 3, 1, 1),
    ("conv", 512, 256, 1, 1, 0),
    ("conv", 256, 512, 3, 1, 1),
    ("conv", 512, 512, 1, 1, 0),
    ("conv", 512, 1024, 3, 1, 1), ("pool",),
    ("conv", 1024, 512, 1, 1, 0),
    ("conv", 512, 1024, 3, 1, 1),
    ("conv", 1024, 512, 1, 1, 0),
    ("conv", 512, 1024, 3, 1, 1),
    ("conv", 1024, 1024, 3, 1, 1),
    ("conv", 1024, 1024, 3, 2, 1),
    ("conv", 1024, 1024, 3, 1, 1),
    ("conv", 1024, 1024, 3, 1, 1),
]


def init_params(key, S, B, nClasses):
    """He-style init; all weight layouts (tap-major im2col matrices, transposed
    FC weights, lane-padded widths, channel padding, fc1 int8) precomputed once."""
    params = {"conv": []}
    carried = 3                       # channels present in the incoming activation
    first_conv = True
    for layer in CONV_CFG:
        if layer[0] != "conv":
            continue
        _, cin, cout, k, _, _ = layer
        key, kw = jax.random.split(key)
        fan_in = cin * k * k
        w = jax.random.normal(kw, (cout, cin, k, k), jnp.float32) * jnp.sqrt(2.0 / fan_in)
        cin_eff = carried
        cout_eff = 128 if (first_conv and cout < 128) else cout   # lane-dense conv1
        first_conv = False
        if cin_eff > cin:                       # absorb zero-padded input channels
            w = jnp.pad(w, ((0, 0), (0, cin_eff - cin), (0, 0), (0, 0)))
        if cout_eff > cout:                     # emit zero output channels
            w = jnp.pad(w, ((0, cout_eff - cout), (0, 0), (0, 0), (0, 0)))
        # tap-major weight: W[(dy*k+dx)*Cin + c, co] = w[co, c, dy, dx]
        wmat = jnp.transpose(w, (2, 3, 1, 0)).reshape(
            k * k * cin_eff, cout_eff).astype(jnp.bfloat16)
        b2d = jnp.zeros((1, cout_eff), jnp.float32)
        params["conv"].append((wmat, b2d))
        carried = cout_eff
    assert carried == 1024

    in1, out1 = 1024 * 7 * 7, 4096
    out2 = S * S * (B * 5 + nClasses)
    out2_pad = _round_up(out2, 128)
    key, k1, k2 = jax.random.split(key, 3)
    # Linear weights generated directly in (K, N) layout (== PyTorch weight.T).
    w1 = (jax.random.normal(k1, (in1, out1), jnp.bfloat16)
          * jnp.bfloat16(jnp.sqrt(2.0 / in1)))
    b1 = jnp.zeros((1, out1), jnp.float32)
    if QUANTIZE_FC1_INT8:
        s1 = (jnp.maximum(jnp.max(jnp.abs(w1), axis=0, keepdims=True),
                          jnp.bfloat16(1e-6)).astype(jnp.float32)) / 127.0
        q1 = jnp.clip(jnp.round(w1 / s1.astype(jnp.bfloat16)),
                      -127, 127).astype(jnp.int8)
        params["fc1"] = (q1, s1, b1)
    else:
        params["fc1"] = (w1, None, b1)

    w2 = (jax.random.normal(k2, (out1, out2), jnp.float32)
          * jnp.sqrt(2.0 / out1)).astype(jnp.bfloat16)
    w2 = jnp.pad(w2, ((0, 0), (0, out2_pad - out2)))     # lane-align N once, at init
    b2 = jnp.zeros((1, out2_pad), jnp.float32)
    params["fc2"] = (w2, b2, out2)
    return params


def yolov1_forward(x_nchw, params, S, B, nClasses):
    x = jnp.transpose(x_nchw, (0, 2, 3, 1)).astype(jnp.bfloat16)  # NCHW -> NHWC bf16
    ci = 0
    for layer in CONV_CFG:
        if layer[0] == "pool":
            x = maxpool2x2(x)
        else:
            _, cin, cout, k, stride, pad = layer
            wmat, b2d = params["conv"][ci]
            ci += 1
            x = conv2d(x, wmat, b2d, k, stride, pad, negative_slope=0.1)

    # nn.Flatten operates on NCHW in PyTorch -> transpose back before flatten.
    N = x.shape[0]
    x = jnp.transpose(x, (0, 3, 1, 2)).reshape(N, -1)

    w1, s1, b1 = params["fc1"]
    x = matmul_bias_act(x, w1, b1, scale=s1, negative_slope=0.1,
                        out_dtype=jnp.bfloat16)
    # TODO(synk): nn.Dropout(0.5) is identity in inference mode (no RNG mask applied).
    w2, b2, out2 = params["fc2"]
    y = matmul_bias_act(x, w2, b2, negative_slope=None, out_dtype=jnp.float32)
    y = y[:, :out2]
    return y.reshape(-1, S, S, B * 5 + nClasses)


if __name__ == "__main__":
    nClasses, S, B = 20, 7, 2
    batch = 1  # small batch keeps compile + (forced) interpret runs fast
    key = jax.random.PRNGKey(0)
    key, kx, kp = jax.random.split(key, 3)

    # The fixed Linear(1024*7*7, 4096) forces a 448x448 input (smallest valid).
    x = jax.random.normal(kx, (batch, 3, 448, 448), jnp.float32)
    params = init_params(kp, S, B, nClasses)

    out = yolov1_forward(x, params, S, B, nClasses)
    out = jax.block_until_ready(out)
    assert out.shape == (batch, S, S, B * 5 + nClasses), out.shape
    assert bool(jnp.all(jnp.isfinite(out)))
    print("KERNEL_OK")
</pallas_src>

<mosaic_0001>
module attributes {stable_mosaic.version = 11 : i64} {
  func.func @_mm_fullk_kernel(%arg0: i32, %arg1: i32, %arg2: memref<1792x147xbf16, #tpu.memory_space<vmem>>, %arg3: memref<147x128xbf16, #tpu.memory_space<vmem>>, %arg4: memref<1x128xf32, #tpu.memory_space<vmem>>, %arg5: memref<1792x128xbf16, #tpu.memory_space<vmem>>) attributes {dimension_semantics = [#tpu.dimension_semantics<parallel>, #tpu.dimension_semantics<parallel>], iteration_bounds = array<i64: 28, 1>, scalar_prefetch = 0 : i64, scratch_operands = 0 : i64, tpu.core_type = #tpu.core_type<tc>, window_params = [{transform_indices = @transform_0, window_bounds = array<i64: 1792, 147>}, {transform_indices = @transform_1, window_bounds = array<i64: 147, 128>}, {transform_indices = @transform_2, window_bounds = array<i64: 1, 128>}, {transform_indices = @transform_3, window_bounds = array<i64: 1792, 128>}]} {
    %c0 = arith.constant 0 : index
    %c0_0 = arith.constant 0 : index
    %0 = vector.load %arg2[%c0, %c0_0] : memref<1792x147xbf16, #tpu.memory_space<vmem>>, vector<1792x147xbf16>
    %c0_1 = arith.constant 0 : index
    %c0_2 = arith.constant 0 : index
    %1 = vector.load %arg3[%c0_1, %c0_2] : memref<147x128xbf16, #tpu.memory_space<vmem>>, vector<147x128xbf16>
    %cst = arith.constant dense<0.000000e+00> : vector<1792x128xf32>
    %2 = tpu.matmul %0, %1, %cst {dimension_numbers = #tpu.dot_dimension_numbers<[1], [0], [0], [1], [0, 0, 1, 1], [], []>} : vector<1792x147xbf16>, vector<147x128xbf16>, vector<1792x128xf32> -> vector<1792x128xf32>
    %c0_3 = arith.constant 0 : index
    %c0_4 = arith.constant 0 : index
    %3 = vector.load %arg4[%c0_3, %c0_4] : memref<1x128xf32, #tpu.memory_space<vmem>>, vector<1x128xf32>
    %4 = vector.broadcast %3 : vector<1x128xf32> to vector<1792x128xf32>
    %5 = arith.addf %2, %4 : vector<1792x128xf32>
    %cst_5 = arith.constant 0.000000e+00 : f32
    %6 = vector.broadcast %cst_5 : f32 to vector<1792x128xf32>
    %7 = arith.cmpf ogt, %5, %6 : vector<1792x128xf32>
    %cst_6 = arith.constant 1.000000e-01 : f32
    %8 = vector.broadcast %cst_6 : f32 to vector<1792x128xf32>
    %9 = arith.mulf %8, %5 : vector<1792x128xf32>
    %10 = arith.select %7, %5, %9 : vector<1792x128xi1>, vector<1792x128xf32>
    %11 = arith.truncf %10 : vector<1792x128xf32> to vector<1792x128xbf16>
    %c0_7 = arith.constant 0 : index
    %c0_8 = arith.constant 0 : index
    %12 = vector.load %arg5[%c0_7, %c0_8] : memref<1792x128xbf16, #tpu.memory_space<vmem>>, vector<1792x128xbf16>
    tpu.vector_store %arg5[%c0_7, %c0_8], %11 {strides = array<i32>} : memref<1792x128xbf16, #tpu.memory_space<vmem>>, vector<1792x128xbf16>,
    return
  }
  func.func @transform_0(%arg0: i32, %arg1: i32) -> (i32, i32) {
    %c0_i32 = arith.constant 0 : i32
    %c0_i32_0 = arith.constant 0 : i32
    return %arg0, %c0_i32 : i32, i32
  }
  func.func @transform_1(%arg0: i32, %arg1: i32) -> (i32, i32) {
    %c0_i32 = arith.constant 0 : i32
    %c0_i32_0 = arith.constant 0 : i32
    return %c0_i32, %arg1 : i32, i32
  }
  func.func @transform_2(%arg0: i32, %arg1: i32) -> (i32, i32) {
    %c0_i32 = arith.constant 0 : i32
    %c0_i32_0 = arith.constant 0 : i32
    return %c0_i32, %arg1 : i32, i32
  }
  func.func @transform_3(%arg0: i32, %arg1: i32) -> (i32, i32) {
    %c0_i32 = arith.constant 0 : i32
    return %arg0, %arg1 : i32, i32
  }
}

</mosaic_0001>

<llo_original>
// kernel: tpu_custom_call.1
$region0: #{tpu_custom_call.1}
  #allocation0 [shape = 'u32[]', space=smem, size = 0x4, offset = 0x4, fixed_abs, tag = 'smem constant byte address 0x4 - core index']
  #allocation1 [shape = 'u32[144,128]{1,0:T(1,128)}', space=vmem, size = 0x12000, scoped, tag = 'internal scratch']
  %s0 = inlined_call_operand.vmem [shape: bf16[50176,147], index: 0, kind: input, shape index: {}]
  %s1 = inlined_call_operand.vmem [shape: bf16[147,128], index: 1, kind: input, shape index: {}]
  %s2 = inlined_call_operand.vmem [shape: f32[1,128], index: 2, kind: input, shape index: {}]
  %s3 = inlined_call_operand.hbm [shape: bf16[50176,128], index: 3, kind: output, shape index: {}]
  %s4 = sld [smem:[#allocation0]]
  $region45: #{tpu_custom_call.1} parent=0
    _
  %s6 = ssub.s32 1, %s4
  %s7 = scalar_select 0, %s6, %s4
  $region1: #{tpu_custom_call.1} parent=0
    #allocation2 [shape = 'u8[917504]{0}', space=vmem, size = 0xe0000, scoped, tag = 'output window, operand 0']
    #allocation3 [shape = 's32[2]{0}', space=sflag, size = 0x8, scoped, tag = 'scoped memory for tpu_custom_call.1']
    %8 = vsyncpa [#allocation3], 0
    %s9 = scalar_lea.sflag [#allocation3], 1
    %10 = vsyncpa %s9, 0
    loop: start=0, step=1, limit=30
    $region2: #{tpu_custom_call.1} parent=1 // loop_pre_header
      _
    $region3: #{tpu_custom_call.1} parent=1 // loop_header
      %s12 = sphi 0, %s16
      %p13 = scmp.ge.s32.totalorder %s12, 30
      %s19 = sphi 0, %s31
      %s20 = sphi 0, %s27
      %s21 = sphi 0, %s19
      %s22 = sphi 0, %s20
      %s23 = sphi 0, %s21
      %s24 = sphi 0, %s22
      %s34 = sphi 0, %s36
      %s37 = sphi 0, %s34
      %s38 = sphi 0, %s37
      %s54 = sphi 0, %s38
      %s60 = sphi 0, %s62
      %s63 = sphi 0, %s60
      %s64 = sphi 0, %s63
      %s80 = sphi 0, %s64
      %s86 = sphi 0, %s88
      %s89 = sphi 0, %s86
      %s90 = sphi 0, %s89
      %s106 = sphi 0, %s90
      %s114 = sphi 0, %s116
      %s117 = sphi 0, %s114
      %s118 = sphi 0, %s117
      %s134 = sphi 0, %s118
    $region4: #{tpu_custom_call.1} parent=1 // loop_header_branch
      %15 = sbr.rel (%p13) target = $region8
    $region5: #{tpu_custom_call.1} parent=1 // loop_body
      %s17 = ssub.s32 %s12, 1
      %s18 = ssub.s32 %s12, 2
      %s25 = sadd.s32 1, %s20
      %p26 = scmp.ge.s32.totalorder %s25, 1
      %s27 = scalar_select %p26, 0, %s25
      %s28 = sadd.s32 1, %s19
      %s29 = scalar_select %p26, %s28, %s19
      %p30 = scmp.ge.s32.totalorder %s29, 28
      %s31 = scalar_select %p30, 0, %s29
      %s32 = ssub.s32 %s19, %s31
      %p33 = scmp.eq.s32.totalorder %s32, 0
      %s35 = sadd.s32 %s34, 1
      %s36 = scalar_select %p33, %s34, %s35
      %p39 = pneg %p33
      %p40 = scmp.eq.s32.totalorder %s12, 27
      %p41 = por %p39, %p40
      %p42 = scmp.ne.s32.totalorder %s34, %s37
      %p43 = scmp.eq.s32.totalorder %s12, 0
      %p44 = por %p42, %p43
      %p45 = scmp.ne.s32.totalorder %s34, %s37
      %p46 = scmp.eq.s32.totalorder %s17, 27
      %p47 = por %p45, %p46
      %p48 = scmp.ne.s32.totalorder %s37, %s38
      %p49 = scmp.eq.s32.totalorder %s17, 0
      %p50 = por %p48, %p49
      %p51 = scmp.ne.s32.totalorder %s37, %s38
      %p52 = scmp.eq.s32.totalorder %s18, 27
      %p53 = por %p51, %p52
      %p55 = scmp.ne.s32.totalorder %s38, %s54
      %p56 = scmp.eq.s32.totalorder %s18, 0
      %p57 = por %p55, %p56
      %s58 = ssub.s32 %s20, %s27
      %p59 = scmp.eq.s32.totalorder %s58, 0
      %s61 = sadd.s32 %s60, 1
      %s62 = scalar_select %p59, %s60, %s61
      %p65 = pneg %p59
      %p66 = scmp.eq.s32.totalorder %s12, 27
      %p67 = por %p65, %p66
      %p68 = scmp.ne.s32.totalorder %s60, %s63
      %p69 = scmp.eq.s32.totalorder %s12, 0
      %p70 = por %p68, %p69
      %p71 = scmp.ne.s32.totalorder %s60, %s63
      %p72 = scmp.eq.s32.totalorder %s17, 27
      %p73 = por %p71, %p72
      %p74 = scmp.ne.s32.totalorder %s63, %s64
      %p75 = scmp.eq.s32.totalorder %s17, 0
      %p76 = por %p74, %p75
      %p77 = scmp.ne.s32.totalorder %s63, %s64
      %p78 = scmp.eq.s32.totalorder %s18, 27
      %p79 = por %p77, %p78
      %p81 = scmp.ne.s32.totalorder %s64, %s80
      %p82 = scmp.eq.s32.totalorder %s18, 0
      %p83 = por %p81, %p82
      %s84 = ssub.s32 %s20, %s27
      %p85 = scmp.eq.s32.totalorder %s84, 0
      %s87 = sadd.s32 %s86, 1
      %s88 = scalar_select %p85, %s86, %s87
      %p91 = pneg %p85
      %p92 = scmp.eq.s32.totalorder %s12, 27
      %p93 = por %p91, %p92
      %p94 = scmp.ne.s32.totalorder %s86, %s89
      %p95 = scmp.eq.s32.totalorder %s12, 0
      %p96 = por %p94, %p95
      %p97 = scmp.ne.s32.totalorder %s86, %s89
      %p98 = scmp.eq.s32.totalorder %s17, 27
      %p99 = por %p97, %p98
      %p100 = scmp.ne.s32.totalorder %s89, %s90
      %p101 = scmp.eq.s32.totalorder %s17, 0
      %p102 = por %p100, %p101
      %p103 = scmp.ne.s32.totalorder %s89, %s90
      %p104 = scmp.eq.s32.totalorder %s18, 27
      %p105 = por %p103, %p104
      %p107 = scmp.ne.s32.totalorder %s90, %s106
      %p108 = scmp.eq.s32.totalorder %s18, 0
      %p109 = por %p107, %p108
      %s110 = ssub.s32 %s19, %s31
      %s111 = ssub.s32 %s20, %s27
      %s112 = sor.u32 %s110, %s111
      %p113 = scmp.eq.s32.totalorder %s112, 0
      %s115 = sadd.s32 %s114, 1
      %s116 = scalar_select %p113, %s114, %s115
      %p119 = pneg %p113
      %p120 = scmp.eq.s32.totalorder %s12, 27
      %p121 = por %p119, %p120
      %p122 = scmp.ne.s32.totalorder %s114, %s117
      %p123 = scmp.eq.s32.totalorder %s12, 0
      %p124 = por %p122, %p123
      %p125 = scmp.ne.s32.totalorder %s114, %s117
      %p126 = scmp.eq.s32.totalorder %s17, 27
      %p127 = por %p125, %p126
      %p128 = scmp.ne.s32.totalorder %s117, %s118
      %p129 = scmp.eq.s32.totalorder %s17, 0
      %p130 = por %p128, %p129
      %p131 = scmp.ne.s32.totalorder %s117, %s118
      %p132 = scmp.eq.s32.totalorder %s18, 27
      %p133 = por %p131, %p132
      %p135 = scmp.ne.s32.totalorder %s118, %s134
      %p136 = scmp.eq.s32.totalorder %s18, 0
      %p137 = por %p135, %p136
      %p138 = scmp.le.s32.totalorder 1, %s12
      %p139 = scmp.lt.s32.totalorder %s12, 29
      %p140 = pnand %p138, %p139
      %p141 = pneg %p140
      // Predicated region
      $region9: #{tpu_custom_call.1} parent=5 // pred_check
        _
      $region10: #{tpu_custom_call.1} parent=5 // pred_check_branch
        %143 = sbr.rel (%p140) target = $region12
      $region11: #{tpu_custom_call.1} parent=5 // pred_region
        %s144 = ssub.s32 %s12, 1
        // Predicated region
        $region13: #{tpu_custom_call.1} parent=11 // pred_check
          %p145 = pneg %p76
        $region14: #{tpu_custom_call.1} parent=11 // pred_check_branch
          %147 = sbr.rel (%p145) target = $region16
        $region15: #{tpu_custom_call.1} parent=11 // pred_region
          %p148 = scmp.lt.s32.totalorder %s22, 0
          %s149 = scalar_select %p148, %s22, 0
          %s150 = smul.addr %s149, 4
          %s151 = scalar_lea.vmem %s1, %s150
        $region16: #{tpu_custom_call.1} parent=11 // pred_fallthru
          _
        // Predicated region
        $region17: #{tpu_custom_call.1} parent=11 // pred_check
          %p152 = pneg %p102
        $region18: #{tpu_custom_call.1} parent=11 // pred_check_branch
          %154 = sbr.rel (%p152) target = $region20
        $region19: #{tpu_custom_call.1} parent=11 // pred_region
          %p155 = scmp.lt.s32.totalorder %s22, 0
          %s156 = scalar_select %p155, %s22, 0
          %s157 = scalar_lea.vmem %s2, %s156
        $region20: #{tpu_custom_call.1} parent=11 // pred_fallthru
          _
      $region12: #{tpu_custom_call.1} parent=5 // pred_fallthru
        _
      %p158 = scmp.lt.s32.totalorder %s12, 28
      // Predicated region
      $region21: #{tpu_custom_call.1} parent=5 // pred_check
        %p159 = pneg %p158
      $region22: #{tpu_custom_call.1} parent=5 // pred_check_branch
        %161 = sbr.rel (%p159) target = $region24
      $region23: #{tpu_custom_call.1} parent=5 // pred_region
        // Predicated region
        $region25: #{tpu_custom_call.1} parent=23 // pred_check
          %p162 = pneg %p44
        $region26: #{tpu_custom_call.1} parent=23 // pred_check_branch
          %164 = sbr.rel (%p162) target = $region28
        $region27: #{tpu_custom_call.1} parent=23 // pred_region
          %s165 = smul.u32 224, %s19
          %p166 = scmp.lt.s32.totalorder %s165, 6271
          %s167 = scalar_select %p166, %s165, 6271
          %s168 = smul.addr %s167, 2
          %s169 = smul.addr %s168, 4
          %s170 = scalar_lea.vmem %s0, %s169
          %s171 = smul.u32 224, %s19
        $region28: #{tpu_custom_call.1} parent=23 // pred_fallthru
          _
      $region24: #{tpu_custom_call.1} parent=5 // pred_fallthru
        _
      %p172 = scmp.le.s32.totalorder 1, %s12
      %p173 = scmp.lt.s32.totalorder %s12, 29
      %p174 = pnand %p172, %p173
      %p175 = pneg %p174
      // Predicated region
      $region29: #{tpu_custom_call.1} parent=5 // pred_check
        _
      $region30: #{tpu_custom_call.1} parent=5 // pred_check_branch
        %177 = sbr.rel (%p174) target = $region32
      $region31: #{tpu_custom_call.1} parent=5 // pred_region
        %s178 = ssub.s32 %s12, 1
        %s179 = smul.u32 224, %s21
        %p180 = scmp.lt.s32.totalorder %s179, 6271
        %s181 = scalar_select %p180, %s179, 6271
        %s182 = smul.addr %s181, 2
        %s183 = smul.addr %s182, 4
        %s184 = scalar_lea.vmem %s0, %s183
        %p185 = pneg %p50
        %p186 = pneg %p47
        %p187 = scmp.lt.s32.totalorder %s22, 0
        %s188 = scalar_select %p187, %s22, 0
        %s189 = smul.addr %s188, 4
        %s190 = scalar_lea.vmem %s1, %s189
        %p191 = pneg %p76
        %p192 = pneg %p73
        %p193 = scmp.lt.s32.totalorder %s22, 0
        %s194 = scalar_select %p193, %s22, 0
        %s195 = scalar_lea.vmem %s2, %s194
        %p196 = pneg %p102
        %p197 = pneg %p99
        %p198 = pneg %p130
        %p199 = pneg %p127
        %s200 = sand.u32 %s117, 1
        %s201 = scalar_lea.sflag [#allocation3], %s200
        %s202 = sand.u32 %s117, 1
        %s203 = smul.addr %s202, 896
        %s204 = scalar_lea.vmem [#allocation2], %s203
        %s205 = smul.u32 224, %s21
        %p206 = scmp.lt.s32.totalorder %s205, 6271
        %s207 = scalar_select %p206, %s205, 6271
        %s208 = smul.addr %s207, 2
        %s209 = smul.addr %s208, 4
        %s210 = scalar_lea.vmem %s0, %s209
        %s211 = smul.u32 224, %s21
        %p212 = scmp.lt.s32.totalorder %s22, 0
        %s213 = scalar_select %p212, %s22, 0
        %s214 = smul.addr %s213, 4
        %s215 = scalar_lea.vmem %s1, %s214
        %p216 = scmp.lt.s32.totalorder %s22, 0
        %s217 = scalar_select %p216, %s22, 0
        %s218 = scalar_lea.vmem %s2, %s217
        %s219 = smul.u32 224, %s21
        %v221 = vld [vmem:[%s210] sm:$0xff]
        %v222 = vld [vmem:[%s210 + $0x8] sm:$0xff]
        %v223 = vld [vmem:[%s210 + $0x10] sm:$0xff]
        %v224 = vld [vmem:[%s210 + $0x18] sm:$0xff]
        %v225 = vld [vmem:[%s210 + $0x20] sm:$0xff]
        %v226 = vld [vmem:[%s210 + $0x28] sm:$0xff]
        %v227 = vld [vmem:[%s210 + $0x30] sm:$0xff]
        %v228 = vld [vmem:[%s210 + $0x38] sm:$0xff]
        %v229 = vld [vmem:[%s210 + $0x40] sm:$0xff]
        %v230 = vld [vmem:[%s210 + $0x48] sm:$0xff]
        %v231 = vld [vmem:[%s210 + $0x50] sm:$0xff]
        %v232 = vld [vmem:[%s210 + $0x58] sm:$0xff]
        %v233 = vld [vmem:[%s210 + $0x60] sm:$0xff]
        %v234 = vld [vmem:[%s210 + $0x68] sm:$0xff]
        %v235 = vld [vmem:[%s210 + $0x70] sm:$0xff]
        %v236 = vld [vmem:[%s210 + $0x78] sm:$0xff]
        %v237 = vld [vmem:[%s210 + $0x80] sm:$0xff]
        %v238 = vld [vmem:[%s210 + $0x88] sm:$0xff]
        %v239 = vld [vmem:[%s210 + $0x90] sm:$0xff]
        %v240 = vld [vmem:[%s210 + $0x98] sm:$0xff]
        %v241 = vld [vmem:[%s210 + $0xa0] sm:$0xff]
        %v242 = vld [vmem:[%s210 + $0xa8] sm:$0xff]
        %v243 = vld [vmem:[%s210 + $0xb0] sm:$0xff]
        %v244 = vld [vmem:[%s210 + $0xb8] sm:$0xff]
        %v245 = vld [vmem:[%s210 + $0xc0] sm:$0xff]
        %v246 = vld [vmem:[%s210 + $0xc8] sm:$0xff]
        %v247 = vld [vmem:[%s210 + $0xd0] sm:$0xff]
        %v248 = vld [vmem:[%s210 + $0xd8] sm:$0xff]
        %v249 = vld [vmem:[%s210 + $0xe0] sm:$0xff]
        %v250 = vld [vmem:[%s210 + $0xe8] sm:$0xff]
        %v251 = vld [vmem:[%s210 + $0xf0] sm:$0xff]
        %v252 = vld [vmem:[%s210 + $0xf8] sm:$0xff]
        %v253 = vld [vmem:[%s210 + $0x100] sm:$0xff]
        %v254 = vld [vmem:[%s210 + $0x108] sm:$0xff]
        %v255 = vld [vmem:[%s210 + $0x110] sm:$0xff]
        %v256 = vld [vmem:[%s210 + $0x118] sm:$0xff]
        %v257 = vld [vmem:[%s210 + $0x120] sm:$0xff]
        %v258 = vld [vmem:[%s210 + $0x128] sm:$0xff]
        %v259 = vld [vmem:[%s210 + $0x130] sm:$0xff]
        %v260 = vld [vmem:[%s210 + $0x138] sm:$0xff]
        %v261 = vld [vmem:[%s210 + $0x140] sm:$0xff]
        %v262 = vld [vmem:[%s210 + $0x148] sm:$0xff]
        %v263 = vld [vmem:[%s210 + $0x150] sm:$0xff]
        %v264 = vld [vmem:[%s210 + $0x158] sm:$0xff]
        %v265 = vld [vmem:[%s210 + $0x160] sm:$0xff]
        %v266 = vld [vmem:[%s210 + $0x168] sm:$0xff]
        %v267 = vld [vmem:[%s210 + $0x170] sm:$0xff]
        %v268 = vld [vmem:[%s210 + $0x178] sm:$0xff]
        %v269 = vld [vmem:[%s210 + $0x180] sm:$0xff]
        %v270 = vld [vmem:[%s210 + $0x188] sm:$0xff]
        %v271 = vld [vmem:[%s210 + $0x190] sm:$0xff]
        %v272 = vld [vmem:[%s210 + $0x198] sm:$0xff]
        %v273 = vld [vmem:[%s210 + $0x1a0] sm:$0xff]
        %v274 = vld [vmem:[%s210 + $0x1a8] sm:$0xff]
        %v275 = vld [vmem:[%s210 + $0x1b0] sm:$0xff]
        %v276 = vld [vmem:[%s210 + $0x1b8] sm:$0xff]
        %v277 = vld [vmem:[%s210 + $0x1c0] sm:$0xff]
        %v278 = vld [vmem:[%s210 + $0x1c8] sm:$0xff]
        %v279 = vld [vmem:[%s210 + $0x1d0] sm:$0xff]
        %v280 = vld [vmem:[%s210 + $0x1d8] sm:$0xff]
        %v281 = vld [vmem:[%s210 + $0x1e0] sm:$0xff]
        %v282 = vld [vmem:[%s210 + $0x1e8] sm:$0xff]
        %v283 = vld [vmem:[%s210 + $0x1f0] sm:$0xff]
        %v284 = vld [vmem:[%s210 + $0x1f8] sm:$0xff]
        %v285 = vld [vmem:[%s210 + $0x200] sm:$0xff]
        %v286 = vld [vmem:[%s210 + $0x208] sm:$0xff]
        %v287 = vld [vmem:[%s210 + $0x210] sm:$0xff]
        %v288 = vld [vmem:[%s210 + $0x218] sm:$0xff]
        %v289 = vld [vmem:[%s210 + $0x220] sm:$0xff]
        %v290 = vld [vmem:[%s210 + $0x228] sm:$0xff]
        %v291 = vld [vmem:[%s210 + $0x230] sm:$0xff]
        %v292 = vld [vmem:[%s210 + $0x238] sm:$0xff]
        %v293 = vld [vmem:[%s210 + $0x240] sm:$0xff]
        %v294 = vld [vmem:[%s210 + $0x248] sm:$0xff]
        %v295 = vld [vmem:[%s210 + $0x250] sm:$0xff]
        %v296 = vld [vmem:[%s210 + $0x258] sm:$0xff]
        %v297 = vld [vmem:[%s210 + $0x260] sm:$0xff]
        %v298 = vld [vmem:[%s210 + $0x268] sm:$0xff]
        %v299 = vld [vmem:[%s210 + $0x270] sm:$0xff]
        %v300 = vld [vmem:[%s210 + $0x278] sm:$0xff]
        %v301 = vld [vmem:[%s210 + $0x280] sm:$0xff]
        %v302 = vld [vmem:[%s210 + $0x288] sm:$0xff]
        %v303 = vld [vmem:[%s210 + $0x290] sm:$0xff]
        %v304 = vld [vmem:[%s210 + $0x298] sm:$0xff]
        %v305 = vld [vmem:[%s210 + $0x2a0] sm:$0xff]
        %v306 = vld [vmem:[%s210 + $0x2a8] sm:$0xff]
        %v307 = vld [vmem:[%s210 + $0x2b0] sm:$0xff]
        %v308 = vld [vmem:[%s210 + $0x2b8] sm:$0xff]
        %v309 = vld [vmem:[%s210 + $0x2c0] sm:$0xff]
        %v310 = vld [vmem:[%s210 + $0x2c8] sm:$0xff]
        %v311 = vld [vmem:[%s210 + $0x2d0] sm:$0xff]
        %v312 = vld [vmem:[%s210 + $0x2d8] sm:$0xff]
        %v313 = vld [vmem:[%s210 + $0x2e0] sm:$0xff]
        %v314 = vld [vmem:[%s210 + $0x2e8] sm:$0xff]
        %v315 = vld [vmem:[%s210 + $0x2f0] sm:$0xff]
        %v316 = vld [vmem:[%s210 + $0x2f8] sm:$0xff]
        %v317 = vld [vmem:[%s210 + $0x300] sm:$0xff]
        %v318 = vld [vmem:[%s210 + $0x308] sm:$0xff]
        %v319 = vld [vmem:[%s210 + $0x310] sm:$0xff]
        %v320 = vld [vmem:[%s210 + $0x318] sm:$0xff]
        %v321 = vld [vmem:[%s210 + $0x320] sm:$0xff]
        %v322 = vld [vmem:[%s210 + $0x328] sm:$0xff]
        %v323 = vld [vmem:[%s210 + $0x330] sm:$0xff]
        %v324 = vld [vmem:[%s210 + $0x338] sm:$0xff]
        %v325 = vld [vmem:[%s210 + $0x340] sm:$0xff]
        %v326 = vld [vmem:[%s210 + $0x348] sm:$0xff]
        %v327 = vld [vmem:[%s210 + $0x350] sm:$0xff]
        %v328 = vld [vmem:[%s210 + $0x358] sm:$0xff]
        %v329 = vld [vmem:[%s210 + $0x360] sm:$0xff]
        %v330 = vld [vmem:[%s210 + $0x368] sm:$0xff]
        %v331 = vld [vmem:[%s210 + $0x370] sm:$0xff]
        %v332 = vld [vmem:[%s210 + $0x378] sm:$0xff]
        %v333 = vld [vmem:[%s210 + $0x380] sm:$0xff]
        %v334 = vld [vmem:[%s210 + $0x388] sm:$0xff]
        %v335 = vld [vmem:[%s210 + $0x390] sm:$0xff]
        %v336 = vld [vmem:[%s210 + $0x398] sm:$0xff]
        %v337 = vld [vmem:[%s210 + $0x3a0] sm:$0xff]
        %v338 = vld [vmem:[%s210 + $0x3a8] sm:$0xff]
        %v339 = vld [vmem:[%s210 + $0x3b0] sm:$0xff]
        %v340 = vld [vmem:[%s210 + $0x3b8] sm:$0xff]
        %v341 = vld [vmem:[%s210 + $0x3c0] sm:$0xff]
        %v342 = vld [vmem:[%s210 + $0x3c8] sm:$0xff]
        %v343 = vld [vmem:[%s210 + $0x3d0] sm:$0xff]
        %v344 = vld [vmem:[%s210 + $0x3d8] sm:$0xff]
        %v345 = vld [vmem:[%s210 + $0x3e0] sm:$0xff]
        %v346 = vld [vmem:[%s210 + $0x3e8] sm:$0xff]
        %v347 = vld [vmem:[%s210 + $0x3f0] sm:$0xff]
        %v348 = vld [vmem:[%s210 + $0x3f8] sm:$0xff]
        %v349 = vld [vmem:[%s210 + $0x400] sm:$0xff]
        %v350 = vld [vmem:[%s210 + $0x408] sm:$0xff]
        %v351 = vld [vmem:[%s210 + $0x410] sm:$0xff]
        %v352 = vld [vmem:[%s210 + $0x418] sm:$0xff]
        %v353 = vld [vmem:[%s210 + $0x420] sm:$0xff]
        %v354 = vld [vmem:[%s210 + $0x428] sm:$0xff]
        %v355 = vld [vmem:[%s210 + $0x430] sm:$0xff]
        %v356 = vld [vmem:[%s210 + $0x438] sm:$0xff]
        %v357 = vld [vmem:[%s210 + $0x440] sm:$0xff]
        %v358 = vld [vmem:[%s210 + $0x448] sm:$0xff]
        %v359 = vld [vmem:[%s210 + $0x450] sm:$0xff]
        %v360 = vld [vmem:[%s210 + $0x458] sm:$0xff]
        %v361 = vld [vmem:[%s210 + $0x460] sm:$0xff]
        %v362 = vld [vmem:[%s210 + $0x468] sm:$0xff]
        %v363 = vld [vmem:[%s210 + $0x470] sm:$0xff]
        %v364 = vld [vmem:[%s210 + $0x478] sm:$0xff]
        %v365 = vld [vmem:[%s210 + $0x480] sm:$0xff]
        %v366 = vld [vmem:[%s210 + $0x488] sm:$0xff]
        %v367 = vld [vmem:[%s210 + $0x490] sm:$0xff]
        %v368 = vld [vmem:[%s210 + $0x498] sm:$0xff]
        %v369 = vld [vmem:[%s210 + $0x4a0] sm:$0xff]
        %v370 = vld [vmem:[%s210 + $0x4a8] sm:$0xff]
        %v371 = vld [vmem:[%s210 + $0x4b0] sm:$0xff]
        %v372 = vld [vmem:[%s210 + $0x4b8] sm:$0xff]
        %v373 = vld [vmem:[%s210 + $0x4c0] sm:$0xff]
        %v374 = vld [vmem:[%s210 + $0x4c8] sm:$0xff]
        %v375 = vld [vmem:[%s210 + $0x4d0] sm:$0xff]
        %v376 = vld [vmem:[%s210 + $0x4d8] sm:$0xff]
        %v377 = vld [vmem:[%s210 + $0x4e0] sm:$0xff]
        %v378 = vld [vmem:[%s210 + $0x4e8] sm:$0xff]
        %v379 = vld [vmem:[%s210 + $0x4f0] sm:$0xff]
        %v380 = vld [vmem:[%s210 + $0x4f8] sm:$0xff]
        %v381 = vld [vmem:[%s210 + $0x500] sm:$0xff]
        %v382 = vld [vmem:[%s210 + $0x508] sm:$0xff]
        %v383 = vld [vmem:[%s210 + $0x510] sm:$0xff]
        %v384 = vld [vmem:[%s210 + $0x518] sm:$0xff]
        %v385 = vld [vmem:[%s210 + $0x520] sm:$0xff]
        %v386 = vld [vmem:[%s210 + $0x528] sm:$0xff]
        %v387 = vld [vmem:[%s210 + $0x530] sm:$0xff]
        %v388 = vld [vmem:[%s210 + $0x538] sm:$0xff]
        %v389 = vld [vmem:[%s210 + $0x540] sm:$0xff]
        %v390 = vld [vmem:[%s210 + $0x548] sm:$0xff]
        %v391 = vld [vmem:[%s210 + $0x550] sm:$0xff]
        %v392 = vld [vmem:[%s210 + $0x558] sm:$0xff]
        %v393 = vld [vmem:[%s210 + $0x560] sm:$0xff]
        %v394 = vld [vmem:[%s210 + $0x568] sm:$0xff]
        %v395 = vld [vmem:[%s210 + $0x570] sm:$0xff]
        %v396 = vld [vmem:[%s210 + $0x578] sm:$0xff]
        %v397 = vld [vmem:[%s210 + $0x580] sm:$0xff]
        %v398 = vld [vmem:[%s210 + $0x588] sm:$0xff]
        %v399 = vld [vmem:[%s210 + $0x590] sm:$0xff]
        %v400 = vld [vmem:[%s210 + $0x598] sm:$0xff]
        %v401 = vld [vmem:[%s210 + $0x5a0] sm:$0xff]
        %v402 = vld [vmem:[%s210 + $0x5a8] sm:$0xff]
        %v403 = vld [vmem:[%s210 + $0x5b0] sm:$0xff]
        %v404 = vld [vmem:[%s210 + $0x5b8] sm:$0xff]
        %v405 = vld [vmem:[%s210 + $0x5c0] sm:$0xff]
        %v406 = vld [vmem:[%s210 + $0x5c8] sm:$0xff]
        %v407 = vld [vmem:[%s210 + $0x5d0] sm:$0xff]
        %v408 = vld [vmem:[%s210 + $0x5d8] sm:$0xff]
        %v409 = vld [vmem:[%s210 + $0x5e0] sm:$0xff]
        %v410 = vld [vmem:[%s210 + $0x5e8] sm:$0xff]
        %v411 = vld [vmem:[%s210 + $0x5f0] sm:$0xff]
        %v412 = vld [vmem:[%s210 + $0x5f8] sm:$0xff]
        %v413 = vld [vmem:[%s210 + $0x600] sm:$0xff]
        %v414 = vld [vmem:[%s210 + $0x608] sm:$0xff]
        %v415 = vld [vmem:[%s210 + $0x610] sm:$0xff]
        %v416 = vld [vmem:[%s210 + $0x618] sm:$0xff]
        %v417 = vld [vmem:[%s210 + $0x620] sm:$0xff]
        %v418 = vld [vmem:[%s210 + $0x628] sm:$0xff]
        %v419 = vld [vmem:[%s210 + $0x630] sm:$0xff]
        %v420 = vld [vmem:[%s210 + $0x638] sm:$0xff]
        %v421 = vld [vmem:[%s210 + $0x640] sm:$0xff]
        %v422 = vld [vmem:[%s210 + $0x648] sm:$0xff]
        %v423 = vld [vmem:[%s210 + $0x650] sm:$0xff]
        %v424 = vld [vmem:[%s210 + $0x658] sm:$0xff]
        %v425 = vld [vmem:[%s210 + $0x660] sm:$0xff]
        %v426 = vld [vmem:[%s210 + $0x668] sm:$0xff]
        %v427 = vld [vmem:[%s210 + $0x670] sm:$0xff]
        %v428 = vld [vmem:[%s210 + $0x678] sm:$0xff]
        %v429 = vld [vmem:[%s210 + $0x680] sm:$0xff]
        %v430 = vld [vmem:[%s210 + $0x688] sm:$0xff]
        %v431 = vld [vmem:[%s210 + $0x690] sm:$0xff]
        %v432 = vld [vmem:[%s210 + $0x698] sm:$0xff]
        %v433 = vld [vmem:[%s210 + $0x6a0] sm:$0xff]
        %v434 = vld [vmem:[%s210 + $0x6a8] sm:$0xff]
        %v435 = vld [vmem:[%s210 + $0x6b0] sm:$0xff]
        %v436 = vld [vmem:[%s210 + $0x6b8] sm:$0xff]
        %v437 = vld [vmem:[%s210 + $0x6c0] sm:$0xff]
        %v438 = vld [vmem:[%s210 + $0x6c8] sm:$0xff]
        %v439 = vld [vmem:[%s210 + $0x6d0] sm:$0xff]
        %v440 = vld [vmem:[%s210 + $0x6d8] sm:$0xff]
        %v441 = vld [vmem:[%s210 + $0x6e0] sm:$0xff]
        %v442 = vld [vmem:[%s210 + $0x6e8] sm:$0xff]
        %v443 = vld [vmem:[%s210 + $0x6f0] sm:$0xff]
        %v444 = vld [vmem:[%s210 + $0x6f8] sm:$0xff]
        %v445 = vld [vmem:[%s215] sm:$0xf]
        %v446 = vld [vmem:[%s215 + $0x4] sm:$0xf]
        %v447 = vld [vmem:[%s215 + $0x8] sm:$0xf]
        %v448 = vld [vmem:[%s215 + $0xc] sm:$0xf]
        %v449 = vld [vmem:[%s215 + $0x10] sm:$0xf]
        %v450 = vld [vmem:[%s215 + $0x14] sm:$0xf]
        %v451 = vld [vmem:[%s215 + $0x18] sm:$0xf]
        %v452 = vld [vmem:[%s215 + $0x1c] sm:$0xf]
        %v453 = vld [vmem:[%s215 + $0x20] sm:$0xf]
        %v454 = vld [vmem:[%s215 + $0x24] sm:$0xf]
        %v455 = vld [vmem:[%s215 + $0x28] sm:$0xf]
        %v456 = vld [vmem:[%s215 + $0x2c] sm:$0xf]
        %v457 = vld [vmem:[%s215 + $0x30] sm:$0xf]
        %v458 = vld [vmem:[%s215 + $0x34] sm:$0xf]
        %v459 = vld [vmem:[%s215 + $0x38] sm:$0xf]
        %v460 = vld [vmem:[%s215 + $0x3c] sm:$0xf]
        %v461 = vld [vmem:[%s215 + $0x40] sm:$0xf]
        %v462 = vld [vmem:[%s215 + $0x44] sm:$0xf]
        %v463 = vld [vmem:[%s215 + $0x48] sm:$0x3]
        %v464 = vld [vmem:[%s218] sm:$0x1]
        %v466 = vlaneseq
        %v467 = vshrl.u32 %v466, 7
        %v468 = vsub.s32 0, %v467
        %v469 = vrot.slane %v464, %v468
        %v695 = vunpack.c.l.b16 %v221
        %v696 = vunpack.c.h.b16 %v221
        %v697 = vunpack.c.l.b16 %v222
        %v698 = vunpack.c.h.b16 %v222
        %v699 = vunpack.c.l.b16 %v223
        %v700 = vunpack.c.h.b16 %v223
        %v701 = vunpack.c.l.b16 %v224
        %v702 = vunpack.c.h.b16 %v224
        %v703 = vunpack.c.l.b16 %v225
        %v704 = vunpack.c.h.b16 %v225
        %v705 = vunpack.c.l.b16 %v226
        %v706 = vunpack.c.h.b16 %v226
        %v707 = vunpack.c.l.b16 %v227
        %v708 = vunpack.c.h.b16 %v227
        %v709 = vunpack.c.l.b16 %v228
        %v710 = vunpack.c.h.b16 %v228
        %v711 = vunpack.c.l.b16 %v229
        %v712 = vunpack.c.h.b16 %v229
        %v713 = vunpack.c.l.b16 %v230
        %v714 = vunpack.c.h.b16 %v230
        %v715 = vunpack.c.l.b16 %v231
        %v716 = vunpack.c.h.b16 %v231
        %v717 = vunpack.c.l.b16 %v232
        %v718 = vunpack.c.h.b16 %v232
        %v719 = vunpack.c.l.b16 %v233
        %v720 = vunpack.c.h.b16 %v233
        %v721 = vunpack.c.l.b16 %v234
        %v722 = vunpack.c.h.b16 %v234
        %v723 = vunpack.c.l.b16 %v235
        %v724 = vunpack.c.h.b16 %v235
        %v725 = vunpack.c.l.b16 %v236
        %v726 = vunpack.c.h.b16 %v236
        %v727 = vunpack.c.l.b16 %v237
        %v728 = vunpack.c.h.b16 %v237
        %v729 = vunpack.c.l.b16 %v238
        %v730 = vunpack.c.h.b16 %v238
        %v731 = vunpack.c.l.b16 %v239
        %v732 = vunpack.c.h.b16 %v239
        %v733 = vunpack.c.l.b16 %v240
        %v734 = vunpack.c.h.b16 %v240
        %v735 = vunpack.c.l.b16 %v241
        %v736 = vunpack.c.h.b16 %v241
        %v737 = vunpack.c.l.b16 %v242
        %v738 = vunpack.c.h.b16 %v242
        %v739 = vunpack.c.l.b16 %v243
        %v740 = vunpack.c.h.b16 %v243
        %v741 = vunpack.c.l.b16 %v244
        %v742 = vunpack.c.h.b16 %v244
        %v743 = vunpack.c.l.b16 %v245
        %v744 = vunpack.c.h.b16 %v245
        %v745 = vunpack.c.l.b16 %v246
        %v746 = vunpack.c.h.b16 %v246
        %v747 = vunpack.c.l.b16 %v247
        %v748 = vunpack.c.h.b16 %v247
        %v749 = vunpack.c.l.b16 %v248
        %v750 = vunpack.c.h.b16 %v248
        %v751 = vunpack.c.l.b16 %v249
        %v752 = vunpack.c.h.b16 %v249
        %v753 = vunpack.c.l.b16 %v250
        %v754 = vunpack.c.h.b16 %v250
        %v755 = vunpack.c.l.b16 %v251
        %v756 = vunpack.c.h.b16 %v251
        %v757 = vunpack.c.l.b16 %v252
        %v758 = vunpack.c.h.b16 %v252
        %v759 = vunpack.c.l.b16 %v253
        %v760 = vunpack.c.h.b16 %v253
        %v761 = vunpack.c.l.b16 %v254
        %v762 = vunpack.c.h.b16 %v254
        %v763 = vunpack.c.l.b16 %v255
        %v764 = vunpack.c.h.b16 %v255
        %v765 = vunpack.c.l.b16 %v256
        %v766 = vunpack.c.h.b16 %v256
        %v767 = vunpack.c.l.b16 %v257
        %v768 = vunpack.c.h.b16 %v257
        %v769 = vunpack.c.l.b16 %v258
        %v770 = vunpack.c.h.b16 %v258
        %v771 = vunpack.c.l.b16 %v259
        %v772 = vunpack.c.h.b16 %v259
        %v773 = vunpack.c.l.b16 %v260
        %v774 = vunpack.c.h.b16 %v260
        %v775 = vunpack.c.l.b16 %v261
        %v776 = vunpack.c.h.b16 %v261
        %v777 = vunpack.c.l.b16 %v262
        %v778 = vunpack.c.h.b16 %v262
        %v779 = vunpack.c.l.b16 %v263
        %v780 = vunpack.c.h.b16 %v263
        %v781 = vunpack.c.l.b16 %v264
        %v782 = vunpack.c.h.b16 %v264
        %v783 = vunpack.c.l.b16 %v265
        %v784 = vunpack.c.h.b16 %v265
        %v785 = vunpack.c.l.b16 %v266
        %v786 = vunpack.c.h.b16 %v266
        %v787 = vunpack.c.l.b16 %v267
        %v788 = vunpack.c.h.b16 %v267
        %v789 = vunpack.c.l.b16 %v268
        %v790 = vunpack.c.h.b16 %v268
        %v791 = vunpack.c.l.b16 %v269
        %v792 = vunpack.c.h.b16 %v269
        %v793 = vunpack.c.l.b16 %v270
        %v794 = vunpack.c.h.b16 %v270
        %v795 = vunpack.c.l.b16 %v271
        %v796 = vunpack.c.h.b16 %v271
        %v797 = vunpack.c.l.b16 %v272
        %v798 = vunpack.c.h.b16 %v272
        %v799 = vunpack.c.l.b16 %v273
        %v800 = vunpack.c.h.b16 %v273
        %v801 = vunpack.c.l.b16 %v274
        %v802 = vunpack.c.h.b16 %v274
        %v803 = vunpack.c.l.b16 %v275
        %v804 = vunpack.c.h.b16 %v275
        %v805 = vunpack.c.l.b16 %v276
        %v806 = vunpack.c.h.b16 %v276
        %v807 = vunpack.c.l.b16 %v277
        %v808 = vunpack.c.h.b16 %v277
        %v809 = vunpack.c.l.b16 %v278
        %v810 = vunpack.c.h.b16 %v278
        %v811 = vunpack.c.l.b16 %v279
        %v812 = vunpack.c.h.b16 %v279
        %v813 = vunpack.c.l.b16 %v280
        %v814 = vunpack.c.h.b16 %v280
        %v815 = vunpack.c.l.b16 %v281
        %v816 = vunpack.c.h.b16 %v281
        %v817 = vunpack.c.l.b16 %v282
        %v818 = vunpack.c.h.b16 %v282
        %v819 = vunpack.c.l.b16 %v283
        %v820 = vunpack.c.h.b16 %v283
        %v821 = vunpack.c.l.b16 %v284
        %v822 = vunpack.c.h.b16 %v284
        %v823 = vunpack.c.l.b16 %v285
        %v824 = vunpack.c.h.b16 %v285
        %v825 = vunpack.c.l.b16 %v286
        %v826 = vunpack.c.h.b16 %v286
        %v827 = vunpack.c.l.b16 %v287
        %v828 = vunpack.c.h.b16 %v287
        %v829 = vunpack.c.l.b16 %v288
        %v830 = vunpack.c.h.b16 %v288
        %v831 = vunpack.c.l.b16 %v289
        %v832 = vunpack.c.h.b16 %v289
        %v833 = vunpack.c.l.b16 %v290
        %v834 = vunpack.c.h.b16 %v290
        %v835 = vunpack.c.l.b16 %v291
        %v836 = vunpack.c.h.b16 %v291
        %v837 = vunpack.c.l.b16 %v292
        %v838 = vunpack.c.h.b16 %v292
        %v839 = vunpack.c.l.b16 %v293
        %v840 = vunpack.c.h.b16 %v293
        %v841 = vunpack.c.l.b16 %v294
        %v842 = vunpack.c.h.b16 %v294
        %v843 = vunpack.c.l.b16 %v295
        %v844 = vunpack.c.h.b16 %v295
        %v845 = vunpack.c.l.b16 %v296
        %v846 = vunpack.c.h.b16 %v296
        %v847 = vunpack.c.l.b16 %v297
        %v848 = vunpack.c.h.b16 %v297
        %v849 = vunpack.c.l.b16 %v298
        %v850 = vunpack.c.h.b16 %v298
        %v851 = vunpack.c.l.b16 %v299
        %v852 = vunpack.c.h.b16 %v299
        %v853 = vunpack.c.l.b16 %v300
        %v854 = vunpack.c.h.b16 %v300
        %v855 = vunpack.c.l.b16 %v301
        %v856 = vunpack.c.h.b16 %v301
        %v857 = vunpack.c.l.b16 %v302
        %v858 = vunpack.c.h.b16 %v302
        %v859 = vunpack.c.l.b16 %v303
        %v860 = vunpack.c.h.b16 %v303
        %v861 = vunpack.c.l.b16 %v304
        %v862 = vunpack.c.h.b16 %v304
        %v863 = vunpack.c.l.b16 %v305
        %v864 = vunpack.c.h.b16 %v305
        %v865 = vunpack.c.l.b16 %v306
        %v866 = vunpack.c.h.b16 %v306
        %v867 = vunpack.c.l.b16 %v307
        %v868 = vunpack.c.h.b16 %v307
        %v869 = vunpack.c.l.b16 %v308
        %v870 = vunpack.c.h.b16 %v308
        %v871 = vunpack.c.l.b16 %v309
        %v872 = vunpack.c.h.b16 %v309
        %v873 = vunpack.c.l.b16 %v310
        %v874 = vunpack.c.h.b16 %v310
        %v875 = vunpack.c.l.b16 %v311
        %v876 = vunpack.c.h.b16 %v311
        %v877 = vunpack.c.l.b16 %v312
        %v878 = vunpack.c.h.b16 %v312
        %v879 = vunpack.c.l.b16 %v313
        %v880 = vunpack.c.h.b16 %v313
        %v881 = vunpack.c.l.b16 %v314
        %v882 = vunpack.c.h.b16 %v314
        %v883 = vunpack.c.l.b16 %v315
        %v884 = vunpack.c.h.b16 %v315
        %v885 = vunpack.c.l.b16 %v316
        %v886 = vunpack.c.h.b16 %v316
        %v887 = vunpack.c.l.b16 %v317
        %v888 = vunpack.c.h.b16 %v317
        %v889 = vunpack.c.l.b16 %v318
        %v890 = vunpack.c.h.b16 %v318
        %v891 = vunpack.c.l.b16 %v319
        %v892 = vunpack.c.h.b16 %v319
        %v893 = vunpack.c.l.b16 %v320
        %v894 = vunpack.c.h.b16 %v320
        %v895 = vunpack.c.l.b16 %v321
        %v896 = vunpack.c.h.b16 %v321
        %v897 = vunpack.c.l.b16 %v322
        %v898 = vunpack.c.h.b16 %v322
        %v899 = vunpack.c.l.b16 %v323
        %v900 = vunpack.c.h.b16 %v323
        %v901 = vunpack.c.l.b16 %v324
        %v902 = vunpack.c.h.b16 %v324
        %v903 = vunpack.c.l.b16 %v325
        %v904 = vunpack.c.h.b16 %v325
        %v905 = vunpack.c.l.b16 %v326
        %v906 = vunpack.c.h.b16 %v326
        %v907 = vunpack.c.l.b16 %v327
        %v908 = vunpack.c.h.b16 %v327
        %v909 = vunpack.c.l.b16 %v328
        %v910 = vunpack.c.h.b16 %v328
        %v911 = vunpack.c.l.b16 %v329
        %v912 = vunpack.c.h.b16 %v329
        %v913 = vunpack.c.l.b16 %v330
        %v914 = vunpack.c.h.b16 %v330
        %v915 = vunpack.c.l.b16 %v331
        %v916 = vunpack.c.h.b16 %v331
        %v917 = vunpack.c.l.b16 %v332
        %v918 = vunpack.c.h.b16 %v332
        %v919 = vunpack.c.l.b16 %v333
        %v920 = vunpack.c.h.b16 %v333
        %v921 = vunpack.c.l.b16 %v334
        %v922 = vunpack.c.h.b16 %v334
        %v923 = vunpack.c.l.b16 %v335
        %v924 = vunpack.c.h.b16 %v335
        %v925 = vunpack.c.l.b16 %v336
        %v926 = vunpack.c.h.b16 %v336
        %v927 = vunpack.c.l.b16 %v337
        %v928 = vunpack.c.h.b16 %v337
        %v929 = vunpack.c.l.b16 %v338
        %v930 = vunpack.c.h.b16 %v338
        %v931 = vunpack.c.l.b16 %v339
        %v932 = vunpack.c.h.b16 %v339
        %v933 = vunpack.c.l.b16 %v340
        %v934 = vunpack.c.h.b16 %v340
        %v935 = vunpack.c.l.b16 %v341
        %v936 = vunpack.c.h.b16 %v341
        %v937 = vunpack.c.l.b16 %v342
        %v938 = vunpack.c.h.b16 %v342
        %v939 = vunpack.c.l.b16 %v343
        %v940 = vunpack.c.h.b16 %v343
        %v941 = vunpack.c.l.b16 %v344
        %v942 = vunpack.c.h.b16 %v344
        %v943 = vunpack.c.l.b16 %v345
        %v944 = vunpack.c.h.b16 %v345
        %v945 = vunpack.c.l.b16 %v346
        %v946 = vunpack.c.h.b16 %v346
        %v947 = vunpack.c.l.b16 %v347
        %v948 = vunpack.c.h.b16 %v347
        %v949 = vunpack.c.l.b16 %v348
        %v950 = vunpack.c.h.b16 %v348
        %v951 = vunpack.c.l.b16 %v349
        %v952 = vunpack.c.h.b16 %v349
        %v953 = vunpack.c.l.b16 %v350
        %v954 = vunpack.c.h.b16 %v350
        %v955 = vunpack.c.l.b16 %v351
        %v956 = vunpack.c.h.b16 %v351
        %v957 = vunpack.c.l.b16 %v352
        %v958 = vunpack.c.h.b16 %v352
        %v959 = vunpack.c.l.b16 %v353
        %v960 = vunpack.c.h.b16 %v353
        %v961 = vunpack.c.l.b16 %v354
        %v962 = vunpack.c.h.b16 %v354
        %v963 = vunpack.c.l.b16 %v355
        %v964 = vunpack.c.h.b16 %v355
        %v965 = vunpack.c.l.b16 %v356
        %v966 = vunpack.c.h.b16 %v356
        %v967 = vunpack.c.l.b16 %v357
        %v968 = vunpack.c.h.b16 %v357
        %v969 = vunpack.c.l.b16 %v358
        %v970 = vunpack.c.h.b16 %v358
        %v971 = vunpack.c.l.b16 %v359
        %v972 = vunpack.c.h.b16 %v359
        %v973 = vunpack.c.l.b16 %v360
        %v974 = vunpack.c.h.b16 %v360
        %v975 = vunpack.c.l.b16 %v361
        %v976 = vunpack.c.h.b16 %v361
        %v977 = vunpack.c.l.b16 %v362
        %v978 = vunpack.c.h.b16 %v362
        %v979 = vunpack.c.l.b16 %v363
        %v980 = vunpack.c.h.b16 %v363
        %v981 = vunpack.c.l.b16 %v364
        %v982 = vunpack.c.h.b16 %v364
        %v983 = vunpack.c.l.b16 %v365
        %v984 = vunpack.c.h.b16 %v365
        %v985 = vunpack.c.l.b16 %v366
        %v986 = vunpack.c.h.b16 %v366
        %v987 = vunpack.c.l.b16 %v367
        %v988 = vunpack.c.h.b16 %v367
        %v989 = vunpack.c.l.b16 %v368
        %v990 = vunpack.c.h.b16 %v368
        %v991 = vunpack.c.l.b16 %v369
        %v992 = vunpack.c.h.b16 %v369
        %v993 = vunpack.c.l.b16 %v370
        %v994 = vunpack.c.h.b16 %v370
        %v995 = vunpack.c.l.b16 %v371
        %v996 = vunpack.c.h.b16 %v371
        %v997 = vunpack.c.l.b16 %v372
        %v998 = vunpack.c.h.b16 %v372
        %v999 = vunpack.c.l.b16 %v373
        %v1000 = vunpack.c.h.b16 %v373
        %v1001 = vunpack.c.l.b16 %v374
        %v1002 = vunpack.c.h.b16 %v374
        %v1003 = vunpack.c.l.b16 %v375
        %v1004 = vunpack.c.h.b16 %v375
        %v1005 = vunpack.c.l.b16 %v376
        %v1006 = vunpack.c.h.b16 %v376
        %v1007 = vunpack.c.l.b16 %v377
        %v1008 = vunpack.c.h.b16 %v377
        %v1009 = vunpack.c.l.b16 %v378
        %v1010 = vunpack.c.h.b16 %v378
        %v1011 = vunpack.c.l.b16 %v379
        %v1012 = vunpack.c.h.b16 %v379
        %v1013 = vunpack.c.l.b16 %v380
        %v1014 = vunpack.c.h.b16 %v380
        %v1015 = vunpack.c.l.b16 %v381
        %v1016 = vunpack.c.h.b16 %v381
        %v1017 = vunpack.c.l.b16 %v382
        %v1018 = vunpack.c.h.b16 %v382
        %v1019 = vunpack.c.l.b16 %v383
        %v1020 = vunpack.c.h.b16 %v383
        %v1021 = vunpack.c.l.b16 %v384
        %v1022 = vunpack.c.h.b16 %v384
        %v1023 = vunpack.c.l.b16 %v385
        %v1024 = vunpack.c.h.b16 %v385
        %v1025 = vunpack.c.l.b16 %v386
        %v1026 = vunpack.c.h.b16 %v386
        %v1027 = vunpack.c.l.b16 %v387
        %v1028 = vunpack.c.h.b16 %v387
        %v1029 = vunpack.c.l.b16 %v388
        %v1030 = vunpack.c.h.b16 %v388
        %v1031 = vunpack.c.l.b16 %v389
        %v1032 = vunpack.c.h.b16 %v389
        %v1033 = vunpack.c.l.b16 %v390
        %v1034 = vunpack.c.h.b16 %v390
        %v1035 = vunpack.c.l.b16 %v391
        %v1036 = vunpack.c.h.b16 %v391
        %v1037 = vunpack.c.l.b16 %v392
        %v1038 = vunpack.c.h.b16 %v392
        %v1039 = vunpack.c.l.b16 %v393
        %v1040 = vunpack.c.h.b16 %v393
        %v1041 = vunpack.c.l.b16 %v394
        %v1042 = vunpack.c.h.b16 %v394
        %v1043 = vunpack.c.l.b16 %v395
        %v1044 = vunpack.c.h.b16 %v395
        %v1045 = vunpack.c.l.b16 %v396
        %v1046 = vunpack.c.h.b16 %v396
        %v1047 = vunpack.c.l.b16 %v397
        %v1048 = vunpack.c.h.b16 %v397
        %v1049 = vunpack.c.l.b16 %v398
        %v1050 = vunpack.c.h.b16 %v398
        %v1051 = vunpack.c.l.b16 %v399
        %v1052 = vunpack.c.h.b16 %v399
        %v1053 = vunpack.c.l.b16 %v400
        %v1054 = vunpack.c.h.b16 %v400
        %v1055 = vunpack.c.l.b16 %v401
        %v1056 = vunpack.c.h.b16 %v401
        %v1057 = vunpack.c.l.b16 %v402
        %v1058 = vunpack.c.h.b16 %v402
        %v1059 = vunpack.c.l.b16 %v403
        %v1060 = vunpack.c.h.b16 %v403
        %v1061 = vunpack.c.l.b16 %v404
        %v1062 = vunpack.c.h.b16 %v404
        %v1063 = vunpack.c.l.b16 %v405
        %v1064 = vunpack.c.h.b16 %v405
        %v1065 = vunpack.c.l.b16 %v406
        %v1066 = vunpack.c.h.b16 %v406
        %v1067 = vunpack.c.l.b16 %v407
        %v1068 = vunpack.c.h.b16 %v407
        %v1069 = vunpack.c.l.b16 %v408
        %v1070 = vunpack.c.h.b16 %v408
        %v1071 = vunpack.c.l.b16 %v409
        %v1072 = vunpack.c.h.b16 %v409
        %v1073 = vunpack.c.l.b16 %v410
        %v1074 = vunpack.c.h.b16 %v410
        %v1075 = vunpack.c.l.b16 %v411
        %v1076 = vunpack.c.h.b16 %v411
        %v1077 = vunpack.c.l.b16 %v412
        %v1078 = vunpack.c.h.b16 %v412
        %v1079 = vunpack.c.l.b16 %v413
        %v1080 = vunpack.c.h.b16 %v413
        %v1081 = vunpack.c.l.b16 %v414
        %v1082 = vunpack.c.h.b16 %v414
        %v1083 = vunpack.c.l.b16 %v415
        %v1084 = vunpack.c.h.b16 %v415
        %v1085 = vunpack.c.l.b16 %v416
        %v1086 = vunpack.c.h.b16 %v416
        %v1087 = vunpack.c.l.b16 %v417
        %v1088 = vunpack.c.h.b16 %v417
        %v1089 = vunpack.c.l.b16 %v418
        %v1090 = vunpack.c.h.b16 %v418
        %v1091 = vunpack.c.l.b16 %v419
        %v1092 = vunpack.c.h.b16 %v419
        %v1093 = vunpack.c.l.b16 %v420
        %v1094 = vunpack.c.h.b16 %v420
        %v1095 = vunpack.c.l.b16 %v421
        %v1096 = vunpack.c.h.b16 %v421
        %v1097 = vunpack.c.l.b16 %v422
        %v1098 = vunpack.c.h.b16 %v422
        %v1099 = vunpack.c.l.b16 %v423
        %v1100 = vunpack.c.h.b16 %v423
        %v1101 = vunpack.c.l.b16 %v424
        %v1102 = vunpack.c.h.b16 %v424
        %v1103 = vunpack.c.l.b16 %v425
        %v1104 = vunpack.c.h.b16 %v425
        %v1105 = vunpack.c.l.b16 %v426
        %v1106 = vunpack.c.h.b16 %v426
        %v1107 = vunpack.c.l.b16 %v427
        %v1108 = vunpack.c.h.b16 %v427
        %v1109 = vunpack.c.l.b16 %v428
        %v1110 = vunpack.c.h.b16 %v428
        %v1111 = vunpack.c.l.b16 %v429
        %v1112 = vunpack.c.h.b16 %v429
        %v1113 = vunpack.c.l.b16 %v430
        %v1114 = vunpack.c.h.b16 %v430
        %v1115 = vunpack.c.l.b16 %v431
        %v1116 = vunpack.c.h.b16 %v431
        %v1117 = vunpack.c.l.b16 %v432
        %v1118 = vunpack.c.h.b16 %v432
        %v1119 = vunpack.c.l.b16 %v433
        %v1120 = vunpack.c.h.b16 %v433
        %v1121 = vunpack.c.l.b16 %v434
        %v1122 = vunpack.c.h.b16 %v434
        %v1123 = vunpack.c.l.b16 %v435
        %v1124 = vunpack.c.h.b16 %v435
        %v1125 = vunpack.c.l.b16 %v436
        %v1126 = vunpack.c.h.b16 %v436
        %v1127 = vunpack.c.l.b16 %v437
        %v1128 = vunpack.c.h.b16 %v437
        %v1129 = vunpack.c.l.b16 %v438
        %v1130 = vunpack.c.h.b16 %v438
        %v1131 = vunpack.c.l.b16 %v439
        %v1132 = vunpack.c.h.b16 %v439
        %v1133 = vunpack.c.l.b16 %v440
        %v1134 = vunpack.c.h.b16 %v440
        %v1135 = vunpack.c.l.b16 %v441
        %v1136 = vunpack.c.h.b16 %v441
        %v1137 = vunpack.c.l.b16 %v442
        %v1138 = vunpack.c.h.b16 %v442
        %v1139 = vunpack.c.l.b16 %v443
        %v1140 = vunpack.c.h.b16 %v443
        %v1141 = vunpack.c.l.b16 %v444
        %v1142 = vunpack.c.h.b16 %v444
        %v1143 = vpack.c.b16 %v697, %v695
        %v1144 = vpack.c.b16 %v698, %v696
        %v1145 = vpack.c.b16 %v701, %v699
        %v1146 = vpack.c.b16 %v702, %v700
        %v1147 = vpack.c.b16 %v705, %v703
        %v1148 = vpack.c.b16 %v706, %v704
        %v1149 = vpack.c.b16 %v709, %v707
        %v1150 = vpack.c.b16 %v710, %v708
        %v1151 = vpack.c.b16 %v713, %v711
        %v1152 = vpack.c.b16 %v714, %v712
        %v1153 = vpack.c.b16 %v717, %v715
        %v1154 = vpack.c.b16 %v718, %v716
        %v1155 = vpack.c.b16 %v721, %v719
        %v1156 = vpack.c.b16 %v722, %v720
        %v1157 = vpack.c.b16 %v725, %v723
        %v1158 = vpack.c.b16 %v726, %v724
        %v1159 = vpack.c.b16 %v729, %v727
        %v1160 = vpack.c.b16 %v730, %v728
        %v1161 = vpack.c.b16 %v733, %v731
        %v1162 = vpack.c.b16 %v734, %v732
        %v1163 = vpack.c.b16 %v737, %v735
        %v1164 = vpack.c.b16 %v738, %v736
        %v1165 = vpack.c.b16 %v741, %v739
        %v1166 = vpack.c.b16 %v742, %v740
        %v1167 = vpack.c.b16 %v745, %v743
        %v1168 = vpack.c.b16 %v746, %v744
        %v1169 = vpack.c.b16 %v749, %v747
        %v1170 = vpack.c.b16 %v750, %v748
        %v1171 = vpack.c.b16 %v753, %v751
        %v1172 = vpack.c.b16 %v754, %v752
        %v1173 = vpack.c.b16 %v757, %v755
        %v1174 = vpack.c.b16 %v758, %v756
        %v1175 = vpack.c.b16 %v761, %v759
        %v1176 = vpack.c.b16 %v762, %v760
        %v1177 = vpack.c.b16 %v765, %v763
        %v1178 = vpack.c.b16 %v766, %v764
        %v1179 = vpack.c.b16 %v769, %v767
        %v1180 = vpack.c.b16 %v770, %v768
        %v1181 = vpack.c.b16 %v773, %v771
        %v1182 = vpack.c.b16 %v774, %v772
        %v1183 = vpack.c.b16 %v777, %v775
        %v1184 = vpack.c.b16 %v778, %v776
        %v1185 = vpack.c.b16 %v781, %v779
        %v1186 = vpack.c.b16 %v782, %v780
        %v1187 = vpack.c.b16 %v785, %v783
        %v1188 = vpack.c.b16 %v786, %v784
        %v1189 = vpack.c.b16 %v789, %v787
        %v1190 = vpack.c.b16 %v790, %v788
        %v1191 = vpack.c.b16 %v793, %v791
        %v1192 = vpack.c.b16 %v794, %v792
        %v1193 = vpack.c.b16 %v797, %v795
        %v1194 = vpack.c.b16 %v798, %v796
        %v1195 = vpack.c.b16 %v801, %v799
        %v1196 = vpack.c.b16 %v802, %v800
        %v1197 = vpack.c.b16 %v805, %v803
        %v1198 = vpack.c.b16 %v806, %v804
        %v1199 = vpack.c.b16 %v809, %v807
        %v1200 = vpack.c.b16 %v810, %v808
        %v1201 = vpack.c.b16 %v813, %v811
        %v1202 = vpack.c.b16 %v814, %v812
        %v1203 = vpack.c.b16 %v817, %v815
        %v1204 = vpack.c.b16 %v818, %v816
        %v1205 = vpack.c.b16 %v821, %v819
        %v1206 = vpack.c.b16 %v822, %v820
        %v1207 = vpack.c.b16 %v825, %v823
        %v1208 = vpack.c.b16 %v826, %v824
        %v1209 = vpack.c.b16 %v829, %v827
        %v1210 = vpack.c.b16 %v830, %v828
        %v1211 = vpack.c.b16 %v833, %v831
        %v1212 = vpack.c.b16 %v834, %v832
        %v1213 = vpack.c.b16 %v837, %v835
        %v1214 = vpack.c.b16 %v838, %v836
        %v1215 = vpack.c.b16 %v841, %v839
        %v1216 = vpack.c.b16 %v842, %v840
        %v1217 = vpack.c.b16 %v845, %v843
        %v1218 = vpack.c.b16 %v846, %v844
        %v1219 = vpack.c.b16 %v849, %v847
        %v1220 = vpack.c.b16 %v850, %v848
        %v1221 = vpack.c.b16 %v853, %v851
        %v1222 = vpack.c.b16 %v854, %v852
        %v1223 = vpack.c.b16 %v857, %v855
        %v1224 = vpack.c.b16 %v858, %v856
        %v1225 = vpack.c.b16 %v861, %v859
        %v1226 = vpack.c.b16 %v862, %v860
        %v1227 = vpack.c.b16 %v865, %v863
        %v1228 = vpack.c.b16 %v866, %v864
        %v1229 = vpack.c.b16 %v869, %v867
        %v1230 = vpack.c.b16 %v870, %v868
        %v1231 = vpack.c.b16 %v873, %v871
        %v1232 = vpack.c.b16 %v874, %v872
        %v1233 = vpack.c.b16 %v877, %v875
        %v1234 = vpack.c.b16 %v878, %v876
        %v1235 = vpack.c.b16 %v881, %v879
        %v1236 = vpack.c.b16 %v882, %v880
        %v1237 = vpack.c.b16 %v885, %v883
        %v1238 = vpack.c.b16 %v886, %v884
        %v1239 = vpack.c.b16 %v889, %v887
        %v1240 = vpack.c.b16 %v890, %v888
        %v1241 = vpack.c.b16 %v893, %v891
        %v1242 = vpack.c.b16 %v894, %v892
        %v1243 = vpack.c.b16 %v897, %v895
        %v1244 = vpack.c.b16 %v898, %v896
        %v1245 = vpack.c.b16 %v901, %v899
        %v1246 = vpack.c.b16 %v902, %v900
        %v1247 = vpack.c.b16 %v905, %v903
        %v1248 = vpack.c.b16 %v906, %v904
        %v1249 = vpack.c.b16 %v909, %v907
        %v1250 = vpack.c.b16 %v910, %v908
        %v1251 = vpack.c.b16 %v913, %v911
        %v1252 = vpack.c.b16 %v914, %v912
        %v1253 = vpack.c.b16 %v917, %v915
        %v1254 = vpack.c.b16 %v918, %v916
        %v1255 = vpack.c.b16 %v921, %v919
        %v1256 = vpack.c.b16 %v922, %v920
        %v1257 = vpack.c.b16 %v925, %v923
        %v1258 = vpack.c.b16 %v926, %v924
        %v1259 = vpack.c.b16 %v929, %v927
        %v1260 = vpack.c.b16 %v930, %v928
        %v1261 = vpack.c.b16 %v933, %v931
        %v1262 = vpack.c.b16 %v934, %v932
        %v1263 = vpack.c.b16 %v937, %v935
        %v1264 = vpack.c.b16 %v938, %v936
        %v1265 = vpack.c.b16 %v941, %v939
        %v1266 = vpack.c.b16 %v942, %v940
        %v1267 = vpack.c.b16 %v945, %v943
        %v1268 = vpack.c.b16 %v946, %v944
        %v1269 = vpack.c.b16 %v949, %v947
        %v1270 = vpack.c.b16 %v950, %v948
        %v1271 = vpack.c.b16 %v953, %v951
        %v1272 = vpack.c.b16 %v954, %v952
        %v1273 = vpack.c.b16 %v957, %v955
        %v1274 = vpack.c.b16 %v958, %v956
        %v1275 = vpack.c.b16 %v961, %v959
        %v1276 = vpack.c.b16 %v962, %v960
        %v1277 = vpack.c.b16 %v965, %v963
        %v1278 = vpack.c.b16 %v966, %v964
        %v1279 = vpack.c.b16 %v969, %v967
        %v1280 = vpack.c.b16 %v970, %v968
        %v1281 = vpack.c.b16 %v973, %v971
        %v1282 = vpack.c.b16 %v974, %v972
        %v1283 = vpack.c.b16 %v977, %v975
        %v1284 = vpack.c.b16 %v978, %v976
        %v1285 = vpack.c.b16 %v981, %v979
        %v1286 = vpack.c.b16 %v982, %v980
        %v1287 = vpack.c.b16 %v985, %v983
        %v1288 = vpack.c.b16 %v986, %v984
        %v1289 = vpack.c.b16 %v989, %v987
        %v1290 = vpack.c.b16 %v990, %v988
        %v1291 = vpack.c.b16 %v993, %v991
        %v1292 = vpack.c.b16 %v994, %v992
        %v1293 = vpack.c.b16 %v997, %v995
        %v1294 = vpack.c.b16 %v998, %v996
        %v1295 = vpack.c.b16 %v1001, %v999
        %v1296 = vpack.c.b16 %v1002, %v1000
        %v1297 = vpack.c.b16 %v1005, %v1003
        %v1298 = vpack.c.b16 %v1006, %v1004
        %v1299 = vpack.c.b16 %v1009, %v1007
        %v1300 = vpack.c.b16 %v1010, %v1008
        %v1301 = vpack.c.b16 %v1013, %v1011
        %v1302 = vpack.c.b16 %v1014, %v1012
        %v1303 = vpack.c.b16 %v1017, %v1015
        %v1304 = vpack.c.b16 %v1018, %v1016
        %v1305 = vpack.c.b16 %v1021, %v1019
        %v1306 = vpack.c.b16 %v1022, %v1020
        %v1307 = vpack.c.b16 %v1025, %v1023
        %v1308 = vpack.c.b16 %v1026, %v1024
        %v1309 = vpack.c.b16 %v1029, %v1027
        %v1310 = vpack.c.b16 %v1030, %v1028
        %v1311 = vpack.c.b16 %v1033, %v1031
        %v1312 = vpack.c.b16 %v1034, %v1032
        %v1313 = vpack.c.b16 %v1037, %v1035
        %v1314 = vpack.c.b16 %v1038, %v1036
        %v1315 = vpack.c.b16 %v1041, %v1039
        %v1316 = vpack.c.b16 %v1042, %v1040
        %v1317 = vpack.c.b16 %v1045, %v1043
        %v1318 = vpack.c.b16 %v1046, %v1044
        %v1319 = vpack.c.b16 %v1049, %v1047
        %v1320 = vpack.c.b16 %v1050, %v1048
        %v1321 = vpack.c.b16 %v1053, %v1051
        %v1322 = vpack.c.b16 %v1054, %v1052
        %v1323 = vpack.c.b16 %v1057, %v1055
        %v1324 = vpack.c.b16 %v1058, %v1056
        %v1325 = vpack.c.b16 %v1061, %v1059
        %v1326 = vpack.c.b16 %v1062, %v1060
        %v1327 = vpack.c.b16 %v1065, %v1063
        %v1328 = vpack.c.b16 %v1066, %v1064
        %v1329 = vpack.c.b16 %v1069, %v1067
        %v1330 = vpack.c.b16 %v1070, %v1068
        %v1331 = vpack.c.b16 %v1073, %v1071
        %v1332 = vpack.c.b16 %v1074, %v1072
        %v1333 = vpack.c.b16 %v1077, %v1075
        %v1334 = vpack.c.b16 %v1078, %v1076
        %v1335 = vpack.c.b16 %v1081, %v1079
        %v1336 = vpack.c.b16 %v1082, %v1080
        %v1337 = vpack.c.b16 %v1085, %v1083
        %v1338 = vpack.c.b16 %v1086, %v1084
        %v1339 = vpack.c.b16 %v1089, %v1087
        %v1340 = vpack.c.b16 %v1090, %v1088
        %v1341 = vpack.c.b16 %v1093, %v1091
        %v1342 = vpack.c.b16 %v1094, %v1092
        %v1343 = vpack.c.b16 %v1097, %v1095
        %v1344 = vpack.c.b16 %v1098, %v1096
        %v1345 = vpack.c.b16 %v1101, %v1099
        %v1346 = vpack.c.b16 %v1102, %v1100
        %v1347 = vpack.c.b16 %v1105, %v1103
        %v1348 = vpack.c.b16 %v1106, %v1104
        %v1349 = vpack.c.b16 %v1109, %v1107
        %v1350 = vpack.c.b16 %v1110, %v1108
        %v1351 = vpack.c.b16 %v1113, %v1111
        %v1352 = vpack.c.b16 %v1114, %v1112
        %v1353 = vpack.c.b16 %v1117, %v1115
        %v1354 = vpack.c.b16 %v1118, %v1116
        %v1355 = vpack.c.b16 %v1121, %v1119
        %v1356 = vpack.c.b16 %v1122, %v1120
        %v1357 = vpack.c.b16 %v1125, %v1123
        %v1358 = vpack.c.b16 %v1126, %v1124
        %v1359 = vpack.c.b16 %v1129, %v1127
        %v1360 = vpack.c.b16 %v1130, %v1128
        %v1361 = vpack.c.b16 %v1133, %v1131
        %v1362 = vpack.c.b16 %v1134, %v1132
        %v1363 = vpack.c.b16 %v1137, %v1135
        %v1364 = vpack.c.b16 %v1138, %v1136
        %v1365 = vpack.c.b16 %v1141, %v1139
        %v1366 = vpack.c.b16 %v1142, %v1140
        %v1498 = vunpack.c.l.b16 %v445
        %v1499 = vunpack.c.l.b16 %v446
        %v1500 = vunpack.c.l.b16 %v447
        %v1501 = vunpack.c.l.b16 %v448
        %v1502 = vunpack.c.l.b16 %v449
        %v1503 = vunpack.c.l.b16 %v450
        %v1504 = vunpack.c.l.b16 %v451
        %v1505 = vunpack.c.l.b16 %v452
        %v1506 = vunpack.c.l.b16 %v453
        %v1507 = vunpack.c.l.b16 %v454
        %v1508 = vunpack.c.l.b16 %v455
        %v1509 = vunpack.c.l.b16 %v456
        %v1510 = vunpack.c.l.b16 %v457
        %v1511 = vunpack.c.l.b16 %v458
        %v1512 = vunpack.c.l.b16 %v459
        %v1513 = vunpack.c.l.b16 %v460
        %v1514 = vunpack.c.l.b16 %v461
        %v1515 = vunpack.c.l.b16 %v462
        %v1516 = vunpack.c.l.b16 %v463
        %v1517 = vpack.c.b16 %v1499, %v1498
        %v1518 = vpack.c.b16 %v1501, %v1500
        %v1519 = vpack.c.b16 %v1503, %v1502
        %v1520 = vpack.c.b16 %v1505, %v1504
        %v1521 = vpack.c.b16 %v1507, %v1506
        %v1522 = vpack.c.b16 %v1509, %v1508
        %v1523 = vpack.c.b16 %v1511, %v1510
        %v1524 = vpack.c.b16 %v1513, %v1512
        %v1525 = vpack.c.b16 %v1515, %v1514
        %v1526 = vpack.c.b16 %v1516, %v1516
        %vm1536 = vcmask 154624
        %v1538 = vsel %vm1536, %v1144, 0
        %v1541 = vsel %vm1536, %v1146, 0
        %v1544 = vsel %vm1536, %v1148, 0
        %v1547 = vsel %vm1536, %v1150, 0
        %v1550 = vsel %vm1536, %v1152, 0
        %v1553 = vsel %vm1536, %v1154, 0
        %v1556 = vsel %vm1536, %v1156, 0
        %v1559 = vsel %vm1536, %v1158, 0
        %v1562 = vsel %vm1536, %v1160, 0
        %v1565 = vsel %vm1536, %v1162, 0
        %v1568 = vsel %vm1536, %v1164, 0
        %v1571 = vsel %vm1536, %v1166, 0
        %v1574 = vsel %vm1536, %v1168, 0
        %v1577 = vsel %vm1536, %v1170, 0
        %v1580 = vsel %vm1536, %v1172, 0
        %v1583 = vsel %vm1536, %v1174, 0
        %v1586 = vsel %vm1536, %v1176, 0
        %v1589 = vsel %vm1536, %v1178, 0
        %v1592 = vsel %vm1536, %v1180, 0
        %v1595 = vsel %vm1536, %v1182, 0
        %v1598 = vsel %vm1536, %v1184, 0
        %v1601 = vsel %vm1536, %v1186, 0
        %v1604 = vsel %vm1536, %v1188, 0
        %v1607 = vsel %vm1536, %v1190, 0
        %v1610 = vsel %vm1536, %v1192, 0
        %v1613 = vsel %vm1536, %v1194, 0
        %v1616 = vsel %vm1536, %v1196, 0
        %v1619 = vsel %vm1536, %v1198, 0
        %v1622 = vsel %vm1536, %v1200, 0
        %v1625 = vsel %vm1536, %v1202, 0
        %v1628 = vsel %vm1536, %v1204, 0
        %v1631 = vsel %vm1536, %v1206, 0
        %v1634 = vsel %vm1536, %v1208, 0
        %v1637 = vsel %vm1536, %v1210, 0
        %v1640 = vsel %vm1536, %v1212, 0
        %v1643 = vsel %vm1536, %v1214, 0
        %v1646 = vsel %vm1536, %v1216, 0
        %v1649 = vsel %vm1536, %v1218, 0
        %v1652 = vsel %vm1536, %v1220, 0
        %v1655 = vsel %vm1536, %v1222, 0
        %v1658 = vsel %vm1536, %v1224, 0
        %v1661 = vsel %vm1536, %v1226, 0
        %v1664 = vsel %vm1536, %v1228, 0
        %v1667 = vsel %vm1536, %v1230, 0
        %v1670 = vsel %vm1536, %v1232, 0
        %v1673 = vsel %vm1536, %v1234, 0
        %v1676 = vsel %vm1536, %v1236, 0
        %v1679 = vsel %vm1536, %v1238, 0
        %v1682 = vsel %vm1536, %v1240, 0
        %v1685 = vsel %vm1536, %v1242, 0
        %v1688 = vsel %vm1536, %v1244, 0
        %v1691 = vsel %vm1536, %v1246, 0
        %v1694 = vsel %vm1536, %v1248, 0
        %v1697 = vsel %vm1536, %v1250, 0
        %v1700 = vsel %vm1536, %v1252, 0
        %v1703 = vsel %vm1536, %v1254, 0
        %v1706 = vsel %vm1536, %v1256, 0
        %v1709 = vsel %vm1536, %v1258, 0
        %v1712 = vsel %vm1536, %v1260, 0
        %v1715 = vsel %vm1536, %v1262, 0
        %v1718 = vsel %vm1536, %v1264, 0
        %v1721 = vsel %vm1536, %v1266, 0
        %v1724 = vsel %vm1536, %v1268, 0
        %v1727 = vsel %vm1536, %v1270, 0
        %v1730 = vsel %vm1536, %v1272, 0
        %v1733 = vsel %vm1536, %v1274, 0
        %v1736 = vsel %vm1536, %v1276, 0
        %v1739 = vsel %vm1536, %v1278, 0
        %v1742 = vsel %vm1536, %v1280, 0
        %v1745 = vsel %vm1536, %v1282, 0
        %v1748 = vsel %vm1536, %v1284, 0
        %v1751 = vsel %vm1536, %v1286, 0
        %v1754 = vsel %vm1536, %v1288, 0
        %v1757 = vsel %vm1536, %v1290, 0
        %v1760 = vsel %vm1536, %v1292, 0
        %v1763 = vsel %vm1536, %v1294, 0
        %v1766 = vsel %vm1536, %v1296, 0
        %v1769 = vsel %vm1536, %v1298, 0
        %v1772 = vsel %vm1536, %v1300, 0
        %v1775 = vsel %vm1536, %v1302, 0
        %v1778 = vsel %vm1536, %v1304, 0
        %v1781 = vsel %vm1536, %v1306, 0
        %v1784 = vsel %vm1536, %v1308, 0
        %v1787 = vsel %vm1536, %v1310, 0
        %v1790 = vsel %vm1536, %v1312, 0
        %v1793 = vsel %vm1536, %v1314, 0
        %v1796 = vsel %vm1536, %v1316, 0
        %v1799 = vsel %vm1536, %v1318, 0
        %v1802 = vsel %vm1536, %v1320, 0
        %v1805 = vsel %vm1536, %v1322, 0
        %v1808 = vsel %vm1536, %v1324, 0
        %v1811 = vsel %vm1536, %v1326, 0
        %v1814 = vsel %vm1536, %v1328, 0
        %v1817 = vsel %vm1536, %v1330, 0
        %v1820 = vsel %vm1536, %v1332, 0
        %v1823 = vsel %vm1536, %v1334, 0
        %v1826 = vsel %vm1536, %v1336, 0
        %v1829 = vsel %vm1536, %v1338, 0
        %v1832 = vsel %vm1536, %v1340, 0
        %v1835 = vsel %vm1536, %v1342, 0
        %v1838 = vsel %vm1536, %v1344, 0
        %v1841 = vsel %vm1536, %v1346, 0
        %v1844 = vsel %vm1536, %v1348, 0
        %v1847 = vsel %vm1536, %v1350, 0
        %v1850 = vsel %vm1536, %v1352, 0
        %v1853 = vsel %vm1536, %v1354, 0
        %v1856 = vsel %vm1536, %v1356, 0
        %v1859 = vsel %vm1536, %v1358, 0
        %v1862 = vsel %vm1536, %v1360, 0
        %v1865 = vsel %vm1536, %v1362, 0
        %v1868 = vsel %vm1536, %v1364, 0
        %v1871 = vsel %vm1536, %v1366, 0
        %vm1873 = vcmask 1040384
        %vm1874 = vcmask 1041408
        %v1875 = vsel %vm1873, 4294967295, 65535
        %v1876 = vsel %vm1874, %v1875, 0
        %v1878 = vand.u32 %v1526, %v1876
        %1880 = vmatprep.subr.bf16.mxu0 0
        %1881 = vmatpush1.bf16.msra.mxu0 %v1524
        %1882 = vmatprep.subr.bf16.mxu0 0
        %1883 = vmatpush1.bf16.msra.mxu0 %v1523
        %1884 = vmatprep.subr.bf16.mxu0 0
        %1885 = vmatpush1.bf16.msra.mxu0 %v1522
        %1886 = vmatprep.subr.bf16.mxu0 0
        %1887 = vmatpush1.bf16.msra.mxu0 %v1521
        %1888 = vmatprep.subr.bf16.mxu0 0
        %1889 = vmatpush1.bf16.msra.mxu0 %v1520
        %1890 = vmatprep.subr.bf16.mxu0 0
        %1891 = vmatpush1.bf16.msra.mxu0 %v1519
        %1892 = vmatprep.subr.bf16.mxu0 0
        %1893 = vmatpush1.bf16.msra.mxu0 %v1518
        %1894 = vmatprep.subr.bf16.mxu0 0
        %1895 = vmatpush1.bf16.msra.mxu0 %v1517
        %1896 = vmatprep.subr.bf16.mxu0 0
        %1897 = vmatpush2.bf16.msra.mxu0 0
        %1898 = vmatprep.subr.bf16.mxu0 0
        %1899 = vmatpush2.bf16.msra.mxu0 0
        %1900 = vmatprep.subr.bf16.mxu0 0
        %1901 = vmatpush2.bf16.msra.mxu0 0
        %1902 = vmatprep.subr.bf16.mxu0 0
        %1903 = vmatpush2.bf16.msra.mxu0 0
        %1904 = vmatprep.subr.bf16.mxu0 0
        %1905 = vmatpush2.bf16.msra.mxu0 0
        %1906 = vmatprep.subr.bf16.mxu0 0
        %1907 = vmatpush2.bf16.msra.mxu0 0
        %1908 = vmatprep.subr.bf16.mxu0 0
        %1909 = vmatpush2.bf16.msra.mxu0 %v1878
        %1910 = vmatprep.subr.bf16.mxu0 0
        %1911 = vmatpush2.bf16.msra.mxu0 %v1525
        %1912 = vmatprep.mubr.bf16.mxu0 %v1538
        %1913 = vmatmul.mubr.bf16.gmra.mxu0 %v1143
        %v1914 = vpop.f32.mrf.mxu0
        %v1915 = vadd.f32 %v469, %v1914
        %v1916 = vpop.f32.mrf.mxu0
        %v1917 = vpop.f32.mrf.mxu0
        %v1918 = vadd.f32 %v469, %v1917
        %v1919 = vpop.f32.mrf.mxu0
        %1920 = vmatprep.mubr.bf16.mxu0 %v1541
        %1921 = vmatmul.mubr.bf16.gmra.mxu0 %v1145
        %v1922 = vpop.f32.mrf.mxu0
        %v1923 = vadd.f32 %v469, %v1922
        %v1924 = vpop.f32.mrf.mxu0
        %v1925 = vpop.f32.mrf.mxu0
        %v1926 = vadd.f32 %v469, %v1925
        %v1927 = vpop.f32.mrf.mxu0
        %1928 = vmatprep.mubr.bf16.mxu0 %v1544
        %1929 = vmatmul.mubr.bf16.gmra.mxu0 %v1147
        %v1930 = vpop.f32.mrf.mxu0
        %v1931 = vadd.f32 %v469, %v1930
        %v1932 = vpop.f32.mrf.mxu0
        %v1933 = vpop.f32.mrf.mxu0
        %v1934 = vadd.f32 %v469, %v1933
        %v1935 = vpop.f32.mrf.mxu0
        %1936 = vmatprep.mubr.bf16.mxu0 %v1547
        %1937 = vmatmul.mubr.bf16.gmra.mxu0 %v1149
        %v1938 = vpop.f32.mrf.mxu0
        %v1939 = vadd.f32 %v469, %v1938
        %v1940 = vpop.f32.mrf.mxu0
        %v1941 = vpop.f32.mrf.mxu0
        %v1942 = vadd.f32 %v469, %v1941
        %v1943 = vpop.f32.mrf.mxu0
        %1944 = vmatprep.mubr.bf16.mxu0 %v1550
        %1945 = vmatmul.mubr.bf16.gmra.mxu0 %v1151
        %v1946 = vpop.f32.mrf.mxu0
        %v1947 = vadd.f32 %v469, %v1946
        %v1948 = vpop.f32.mrf.mxu0
        %v1949 = vpop.f32.mrf.mxu0
        %v1950 = vadd.f32 %v469, %v1949
        %v1951 = vpop.f32.mrf.mxu0
        %1952 = vmatprep.mubr.bf16.mxu0 %v1553
        %1953 = vmatmul.mubr.bf16.gmra.mxu0 %v1153
        %v1954 = vpop.f32.mrf.mxu0
        %v1955 = vadd.f32 %v469, %v1954
        %v1956 = vpop.f32.mrf.mxu0
        %v1957 = vpop.f32.mrf.mxu0
        %v1958 = vadd.f32 %v469, %v1957
        %v1959 = vpop.f32.mrf.mxu0
        %1960 = vmatprep.mubr.bf16.mxu0 %v1556
        %1961 = vmatmul.mubr.bf16.gmra.mxu0 %v1155
        %v1962 = vpop.f32.mrf.mxu0
        %v1963 = vadd.f32 %v469, %v1962
        %v1964 = vpop.f32.mrf.mxu0
        %v1965 = vpop.f32.mrf.mxu0
        %v1966 = vadd.f32 %v469, %v1965
        %v1967 = vpop.f32.mrf.mxu0
        %1968 = vmatprep.mubr.bf16.mxu0 %v1559
        %1969 = vmatmul.mubr.bf16.gmra.mxu0 %v1157
        %v1970 = vpop.f32.mrf.mxu0
        %v1971 = vadd.f32 %v469, %v1970
        %v1972 = vpop.f32.mrf.mxu0
        %v1973 = vpop.f32.mrf.mxu0
        %v1974 = vadd.f32 %v469, %v1973
        %v1975 = vpop.f32.mrf.mxu0
        %1976 = vmatprep.mubr.bf16.mxu0 %v1562
        %1977 = vmatmul.mubr.bf16.gmra.mxu0 %v1159
        %v1978 = vpop.f32.mrf.mxu0
        %v1979 = vadd.f32 %v469, %v1978
        %v1980 = vpop.f32.mrf.mxu0
        %v1981 = vpop.f32.mrf.mxu0
        %v1982 = vadd.f32 %v469, %v1981
        %v1983 = vpop.f32.mrf.mxu0
        %1984 = vmatprep.mubr.bf16.mxu0 %v1565
        %1985 = vmatmul.mubr.bf16.gmra.mxu0 %v1161
        %v1986 = vpop.f32.mrf.mxu0
        %v1987 = vadd.f32 %v469, %v1986
        %v1988 = vpop.f32.mrf.mxu0
        %v1989 = vpop.f32.mrf.mxu0
        %v1990 = vadd.f32 %v469, %v1989
        %v1991 = vpop.f32.mrf.mxu0
        %1992 = vmatprep.mubr.bf16.mxu0 %v1568
        %1993 = vmatmul.mubr.bf16.gmra.mxu0 %v1163
        %v1994 = vpop.f32.mrf.mxu0
        %v1995 = vadd.f32 %v469, %v1994
        %v1996 = vpop.f32.mrf.mxu0
        %v1997 = vpop.f32.mrf.mxu0
        %v1998 = vadd.f32 %v469, %v1997
        %v1999 = vpop.f32.mrf.mxu0
        %2000 = vmatprep.mubr.bf16.mxu0 %v1571
        %2001 = vmatmul.mubr.bf16.gmra.mxu0 %v1165
        %v2002 = vpop.f32.mrf.mxu0
        %v2003 = vadd.f32 %v469, %v2002
        %v2004 = vpop.f32.mrf.mxu0
        %v2005 = vpop.f32.mrf.mxu0
        %v2006 = vadd.f32 %v469, %v2005
        %v2007 = vpop.f32.mrf.mxu0
        %2008 = vmatprep.mubr.bf16.mxu0 %v1574
        %2009 = vmatmul.mubr.bf16.gmra.mxu0 %v1167
        %v2010 = vpop.f32.mrf.mxu0
        %v2011 = vadd.f32 %v469, %v2010
        %v2012 = vpop.f32.mrf.mxu0
        %v2013 = vpop.f32.mrf.mxu0
        %v2014 = vadd.f32 %v469, %v2013
        %v2015 = vpop.f32.mrf.mxu0
        %2016 = vmatprep.mubr.bf16.mxu0 %v1577
        %2017 = vmatmul.mubr.bf16.gmra.mxu0 %v1169
        %v2018 = vpop.f32.mrf.mxu0
        %v2019 = vadd.f32 %v469, %v2018
        %v2020 = vpop.f32.mrf.mxu0
        %v2021 = vpop.f32.mrf.mxu0
        %v2022 = vadd.f32 %v469, %v2021
        %v2023 = vpop.f32.mrf.mxu0
        %2024 = vmatprep.mubr.bf16.mxu0 %v1580
        %2025 = vmatmul.mubr.bf16.gmra.mxu0 %v1171
        %v2026 = vpop.f32.mrf.mxu0
        %v2027 = vadd.f32 %v469, %v2026
        %v2028 = vpop.f32.mrf.mxu0
        %v2029 = vpop.f32.mrf.mxu0
        %v2030 = vadd.f32 %v469, %v2029
        %v2031 = vpop.f32.mrf.mxu0
        %2032 = vmatprep.mubr.bf16.mxu0 %v1583
        %2033 = vmatmul.mubr.bf16.gmra.mxu0 %v1173
        %v2034 = vpop.f32.mrf.mxu0
        %v2035 = vadd.f32 %v469, %v2034
        %v2036 = vpop.f32.mrf.mxu0
        %v2037 = vpop.f32.mrf.mxu0
        %v2038 = vadd.f32 %v469, %v2037
        %v2039 = vpop.f32.mrf.mxu0
        %2040 = vmatprep.mubr.bf16.mxu0 %v1586
        %2041 = vmatmul.mubr.bf16.gmra.mxu0 %v1175
        %v2042 = vpop.f32.mrf.mxu0
        %v2043 = vadd.f32 %v469, %v2042
        %v2044 = vpop.f32.mrf.mxu0
        %v2045 = vpop.f32.mrf.mxu0
        %v2046 = vadd.f32 %v469, %v2045
        %v2047 = vpop.f32.mrf.mxu0
        %2048 = vmatprep.mubr.bf16.mxu0 %v1589
        %2049 = vmatmul.mubr.bf16.gmra.mxu0 %v1177
        %v2050 = vpop.f32.mrf.mxu0
        %v2051 = vadd.f32 %v469, %v2050
        %v2052 = vpop.f32.mrf.mxu0
        %v2053 = vpop.f32.mrf.mxu0
        %v2054 = vadd.f32 %v469, %v2053
        %v2055 = vpop.f32.mrf.mxu0
        %2056 = vmatprep.mubr.bf16.mxu0 %v1592
        %2057 = vmatmul.mubr.bf16.gmra.mxu0 %v1179
        %v2058 = vpop.f32.mrf.mxu0
        %v2059 = vadd.f32 %v469, %v2058
        %v2060 = vpop.f32.mrf.mxu0
        %v2061 = vpop.f32.mrf.mxu0
        %v2062 = vadd.f32 %v469, %v2061
        %v2063 = vpop.f32.mrf.mxu0
        %2064 = vmatprep.mubr.bf16.mxu0 %v1595
        %2065 = vmatmul.mubr.bf16.gmra.mxu0 %v1181
        %v2066 = vpop.f32.mrf.mxu0
        %v2067 = vadd.f32 %v469, %v2066
        %v2068 = vpop.f32.mrf.mxu0
        %v2069 = vpop.f32.mrf.mxu0
        %v2070 = vadd.f32 %v469, %v2069
        %v2071 = vpop.f32.mrf.mxu0
        %2072 = vmatprep.mubr.bf16.mxu0 %v1598
        %2073 = vmatmul.mubr.bf16.gmra.mxu0 %v1183
        %v2074 = vpop.f32.mrf.mxu0
        %v2075 = vadd.f32 %v469, %v2074
        %v2076 = vpop.f32.mrf.mxu0
        %v2077 = vpop.f32.mrf.mxu0
        %v2078 = vadd.f32 %v469, %v2077
        %v2079 = vpop.f32.mrf.mxu0
        %2080 = vmatprep.mubr.bf16.mxu0 %v1601
        %2081 = vmatmul.mubr.bf16.gmra.mxu0 %v1185
        %v2082 = vpop.f32.mrf.mxu0
        %v2083 = vadd.f32 %v469, %v2082
        %v2084 = vpop.f32.mrf.mxu0
        %v2085 = vpop.f32.mrf.mxu0
        %v2086 = vadd.f32 %v469, %v2085
        %v2087 = vpop.f32.mrf.mxu0
        %2088 = vmatprep.mubr.bf16.mxu0 %v1604
        %2089 = vmatmul.mubr.bf16.gmra.mxu0 %v1187
        %v2090 = vpop.f32.mrf.mxu0
        %v2091 = vadd.f32 %v469, %v2090
        %v2092 = vpop.f32.mrf.mxu0
        %v2093 = vpop.f32.mrf.mxu0
        %v2094 = vadd.f32 %v469, %v2093
        %v2095 = vpop.f32.mrf.mxu0
        %2096 = vmatprep.mubr.bf16.mxu0 %v1607
        %2097 = vmatmul.mubr.bf16.gmra.mxu0 %v1189
        %v2098 = vpop.f32.mrf.mxu0
        %v2099 = vadd.f32 %v469, %v2098
        %v2100 = vpop.f32.mrf.mxu0
        %v2101 = vpop.f32.mrf.mxu0
        %v2102 = vadd.f32 %v469, %v2101
        %v2103 = vpop.f32.mrf.mxu0
        %2104 = vmatprep.mubr.bf16.mxu0 %v1610
        %2105 = vmatmul.mubr.bf16.gmra.mxu0 %v1191
        %v2106 = vpop.f32.mrf.mxu0
        %v2107 = vadd.f32 %v469, %v2106
        %v2108 = vpop.f32.mrf.mxu0
        %v2109 = vpop.f32.mrf.mxu0
        %v2110 = vadd.f32 %v469, %v2109
        %v2111 = vpop.f32.mrf.mxu0
        %2112 = vmatprep.mubr.bf16.mxu0 %v1613
        %2113 = vmatmul.mubr.bf16.gmra.mxu0 %v1193
        %v2114 = vpop.f32.mrf.mxu0
        %v2115 = vadd.f32 %v469, %v2114
        %v2116 = vpop.f32.mrf.mxu0
        %v2117 = vpop.f32.mrf.mxu0
        %v2118 = vadd.f32 %v469, %v2117
        %v2119 = vpop.f32.mrf.mxu0
        %2120 = vmatprep.mubr.bf16.mxu0 %v1616
        %2121 = vmatmul.mubr.bf16.gmra.mxu0 %v1195
        %v2122 = vpop.f32.mrf.mxu0
        %v2123 = vadd.f32 %v469, %v2122
        %v2124 = vpop.f32.mrf.mxu0
        %v2125 = vpop.f32.mrf.mxu0
        %v2126 = vadd.f32 %v469, %v2125
        %v2127 = vpop.f32.mrf.mxu0
        %2128 = vmatprep.mubr.bf16.mxu0 %v1619
        %2129 = vmatmul.mubr.bf16.gmra.mxu0 %v1197
        %v2130 = vpop.f32.mrf.mxu0
        %v2131 = vadd.f32 %v469, %v2130
        %v2132 = vpop.f32.mrf.mxu0
        %v2133 = vpop.f32.mrf.mxu0
        %v2134 = vadd.f32 %v469, %v2133
        %v2135 = vpop.f32.mrf.mxu0
        %2136 = vmatprep.mubr.bf16.mxu0 %v1622
        %2137 = vmatmul.mubr.bf16.gmra.mxu0 %v1199
        %v2138 = vpop.f32.mrf.mxu0
        %v2139 = vadd.f32 %v469, %v2138
        %v2140 = vpop.f32.mrf.mxu0
        %v2141 = vpop.f32.mrf.mxu0
        %v2142 = vadd.f32 %v469, %v2141
        %v2143 = vpop.f32.mrf.mxu0
        %2144 = vmatprep.mubr.bf16.mxu0 %v1625
        %2145 = vmatmul.mubr.bf16.gmra.mxu0 %v1201
        %v2146 = vpop.f32.mrf.mxu0
        %v2147 = vadd.f32 %v469, %v2146
        %v2148 = vpop.f32.mrf.mxu0
        %v2149 = vpop.f32.mrf.mxu0
        %v2150 = vadd.f32 %v469, %v2149
        %v2151 = vpop.f32.mrf.mxu0
        %2152 = vmatprep.mubr.bf16.mxu0 %v1628
        %2153 = vmatmul.mubr.bf16.gmra.mxu0 %v1203
        %v2154 = vpop.f32.mrf.mxu0
        %v2155 = vadd.f32 %v469, %v2154
        %v2156 = vpop.f32.mrf.mxu0
        %v2157 = vpop.f32.mrf.mxu0
        %v2158 = vadd.f32 %v469, %v2157
        %v2159 = vpop.f32.mrf.mxu0
        %2160 = vmatprep.mubr.bf16.mxu0 %v1631
        %2161 = vmatmul.mubr.bf16.gmra.mxu0 %v1205
        %v2162 = vpop.f32.mrf.mxu0
        %v2163 = vadd.f32 %v469, %v2162
        %v2164 = vpop.f32.mrf.mxu0
        %v2165 = vpop.f32.mrf.mxu0
        %v2166 = vadd.f32 %v469, %v2165
        %v2167 = vpop.f32.mrf.mxu0
        %2168 = vmatprep.mubr.bf16.mxu0 %v1634
        %2169 = vmatmul.mubr.bf16.gmra.mxu0 %v1207
        %v2170 = vpop.f32.mrf.mxu0
        %v2171 = vadd.f32 %v469, %v2170
        %v2172 = vpop.f32.mrf.mxu0
        %v2173 = vpop.f32.mrf.mxu0
        %v2174 = vadd.f32 %v469, %v2173
        %v2175 = vpop.f32.mrf.mxu0
        %2176 = vmatprep.mubr.bf16.mxu0 %v1637
        %2177 = vmatmul.mubr.bf16.gmra.mxu0 %v1209
        %v2178 = vpop.f32.mrf.mxu0
        %v2179 = vadd.f32 %v469, %v2178
        %v2180 = vpop.f32.mrf.mxu0
        %v2181 = vpop.f32.mrf.mxu0
        %v2182 = vadd.f32 %v469, %v2181
        %v2183 = vpop.f32.mrf.mxu0
        %2184 = vmatprep.mubr.bf16.mxu0 %v1640
        %2185 = vmatmul.mubr.bf16.gmra.mxu0 %v1211
        %v2186 = vpop.f32.mrf.mxu0
        %v2187 = vadd.f32 %v469, %v2186
        %v2188 = vpop.f32.mrf.mxu0
        %v2189 = vpop.f32.mrf.mxu0
        %v2190 = vadd.f32 %v469, %v2189
        %v2191 = vpop.f32.mrf.mxu0
        %2192 = vmatprep.mubr.bf16.mxu0 %v1643
        %2193 = vmatmul.mubr.bf16.gmra.mxu0 %v1213
        %v2194 = vpop.f32.mrf.mxu0
        %v2195 = vadd.f32 %v469, %v2194
        %v2196 = vpop.f32.mrf.mxu0
        %v2197 = vpop.f32.mrf.mxu0
        %v2198 = vadd.f32 %v469, %v2197
        %v2199 = vpop.f32.mrf.mxu0
        %2200 = vmatprep.mubr.bf16.mxu0 %v1646
        %2201 = vmatmul.mubr.bf16.gmra.mxu0 %v1215
        %v2202 = vpop.f32.mrf.mxu0
        %v2203 = vadd.f32 %v469, %v2202
        %v2204 = vpop.f32.mrf.mxu0
        %v2205 = vpop.f32.mrf.mxu0
        %v2206 = vadd.f32 %v469, %v2205
        %v2207 = vpop.f32.mrf.mxu0
        %2208 = vmatprep.mubr.bf16.mxu0 %v1649
        %2209 = vmatmul.mubr.bf16.gmra.mxu0 %v1217
        %v2210 = vpop.f32.mrf.mxu0
        %v2211 = vadd.f32 %v469, %v2210
        %v2212 = vpop.f32.mrf.mxu0
        %v2213 = vpop.f32.mrf.mxu0
        %v2214 = vadd.f32 %v469, %v2213
        %v2215 = vpop.f32.mrf.mxu0
        %2216 = vmatprep.mubr.bf16.mxu0 %v1652
        %2217 = vmatmul.mubr.bf16.gmra.mxu0 %v1219
        %v2218 = vpop.f32.mrf.mxu0
        %v2219 = vadd.f32 %v469, %v2218
        %v2220 = vpop.f32.mrf.mxu0
        %v2221 = vpop.f32.mrf.mxu0
        %v2222 = vadd.f32 %v469, %v2221
        %v2223 = vpop.f32.mrf.mxu0
        %2224 = vmatprep.mubr.bf16.mxu0 %v1655
        %2225 = vmatmul.mubr.bf16.gmra.mxu0 %v1221
        %v2226 = vpop.f32.mrf.mxu0
        %v2227 = vadd.f32 %v469, %v2226
        %v2228 = vpop.f32.mrf.mxu0
        %v2229 = vpop.f32.mrf.mxu0
        %v2230 = vadd.f32 %v469, %v2229
        %v2231 = vpop.f32.mrf.mxu0
        %2232 = vmatprep.mubr.bf16.mxu0 %v1658
        %2233 = vmatmul.mubr.bf16.gmra.mxu0 %v1223
        %v2234 = vpop.f32.mrf.mxu0
        %v2235 = vadd.f32 %v469, %v2234
        %v2236 = vpop.f32.mrf.mxu0
        %v2237 = vpop.f32.mrf.mxu0
        %v2238 = vadd.f32 %v469, %v2237
        %v2239 = vpop.f32.mrf.mxu0
        %2240 = vmatprep.mubr.bf16.mxu0 %v1661
        %2241 = vmatmul.mubr.bf16.gmra.mxu0 %v1225
        %v2242 = vpop.f32.mrf.mxu0
        %v2243 = vadd.f32 %v469, %v2242
        %v2244 = vpop.f32.mrf.mxu0
        %v2245 = vpop.f32.mrf.mxu0
        %v2246 = vadd.f32 %v469, %v2245
        %v2247 = vpop.f32.mrf.mxu0
        %2248 = vmatprep.mubr.bf16.mxu0 %v1664
        %2249 = vmatmul.mubr.bf16.gmra.mxu0 %v1227
        %v2250 = vpop.f32.mrf.mxu0
        %v2251 = vadd.f32 %v469, %v2250
        %v2252 = vpop.f32.mrf.mxu0
        %v2253 = vpop.f32.mrf.mxu0
        %v2254 = vadd.f32 %v469, %v2253
        %v2255 = vpop.f32.mrf.mxu0
        %2256 = vmatprep.mubr.bf16.mxu0 %v1667
        %2257 = vmatmul.mubr.bf16.gmra.mxu0 %v1229
        %v2258 = vpop.f32.mrf.mxu0
        %v2259 = vadd.f32 %v469, %v2258
        %v2260 = vpop.f32.mrf.mxu0
        %v2261 = vpop.f32.mrf.mxu0
        %v2262 = vadd.f32 %v469, %v2261
        %v2263 = vpop.f32.mrf.mxu0
        %2264 = vmatprep.mubr.bf16.mxu0 %v1670
        %2265 = vmatmul.mubr.bf16.gmra.mxu0 %v1231
        %v2266 = vpop.f32.mrf.mxu0
        %v2267 = vadd.f32 %v469, %v2266
        %v2268 = vpop.f32.mrf.mxu0
        %v2269 = vpop.f32.mrf.mxu0
        %v2270 = vadd.f32 %v469, %v2269
        %v2271 = vpop.f32.mrf.mxu0
        %2272 = vmatprep.mubr.bf16.mxu0 %v1673
        %2273 = vmatmul.mubr.bf16.gmra.mxu0 %v1233
        %v2274 = vpop.f32.mrf.mxu0
        %v2275 = vadd.f32 %v469, %v2274
        %v2276 = vpop.f32.mrf.mxu0
        %v2277 = vpop.f32.mrf.mxu0
        %v2278 = vadd.f32 %v469, %v2277
        %v2279 = vpop.f32.mrf.mxu0
        %2280 = vmatprep.mubr.bf16.mxu0 %v1676
        %2281 = vmatmul.mubr.bf16.gmra.mxu0 %v1235
        %v2282 = vpop.f32.mrf.mxu0
        %v2283 = vadd.f32 %v469, %v2282
        %v2284 = vpop.f32.mrf.mxu0
        %v2285 = vpop.f32.mrf.mxu0
        %v2286 = vadd.f32 %v469, %v2285
        %v2287 = vpop.f32.mrf.mxu0
        %2288 = vmatprep.mubr.bf16.mxu0 %v1679
        %2289 = vmatmul.mubr.bf16.gmra.mxu0 %v1237
        %v2290 = vpop.f32.mrf.mxu0
        %v2291 = vadd.f32 %v469, %v2290
        %v2292 = vpop.f32.mrf.mxu0
        %v2293 = vpop.f32.mrf.mxu0
        %v2294 = vadd.f32 %v469, %v2293
        %v2295 = vpop.f32.mrf.mxu0
        %2296 = vmatprep.mubr.bf16.mxu0 %v1682
        %2297 = vmatmul.mubr.bf16.gmra.mxu0 %v1239
        %v2298 = vpop.f32.mrf.mxu0
        %v2299 = vadd.f32 %v469, %v2298
        %v2300 = vpop.f32.mrf.mxu0
        %v2301 = vpop.f32.mrf.mxu0
        %v2302 = vadd.f32 %v469, %v2301
        %v2303 = vpop.f32.mrf.mxu0
        %2304 = vmatprep.mubr.bf16.mxu0 %v1685
        %2305 = vmatmul.mubr.bf16.gmra.mxu0 %v1241
        %v2306 = vpop.f32.mrf.mxu0
        %v2307 = vadd.f32 %v469, %v2306
        %v2308 = vpop.f32.mrf.mxu0
        %v2309 = vpop.f32.mrf.mxu0
        %v2310 = vadd.f32 %v469, %v2309
        %v2311 = vpop.f32.mrf.mxu0
        %2312 = vmatprep.mubr.bf16.mxu0 %v1688
        %2313 = vmatmul.mubr.bf16.gmra.mxu0 %v1243
        %v2314 = vpop.f32.mrf.mxu0
        %v2315 = vadd.f32 %v469, %v2314
        %v2316 = vpop.f32.mrf.mxu0
        %v2317 = vpop.f32.mrf.mxu0
        %v2318 = vadd.f32 %v469, %v2317
        %v2319 = vpop.f32.mrf.mxu0
        %2320 = vmatprep.mubr.bf16.mxu0 %v1691
        %2321 = vmatmul.mubr.bf16.gmra.mxu0 %v1245
        %v2322 = vpop.f32.mrf.mxu0
        %v2323 = vadd.f32 %v469, %v2322
        %v2324 = vpop.f32.mrf.mxu0
        %v2325 = vpop.f32.mrf.mxu0
        %v2326 = vadd.f32 %v469, %v2325
        %v2327 = vpop.f32.mrf.mxu0
        %2328 = vmatprep.mubr.bf16.mxu0 %v1694
        %2329 = vmatmul.mubr.bf16.gmra.mxu0 %v1247
        %v2330 = vpop.f32.mrf.mxu0
        %v2331 = vadd.f32 %v469, %v2330
        %v2332 = vpop.f32.mrf.mxu0
        %v2333 = vpop.f32.mrf.mxu0
        %v2334 = vadd.f32 %v469, %v2333
        %v2335 = vpop.f32.mrf.mxu0
        %2336 = vmatprep.mubr.bf16.mxu0 %v1697
        %2337 = vmatmul.mubr.bf16.gmra.mxu0 %v1249
        %v2338 = vpop.f32.mrf.mxu0
        %v2339 = vadd.f32 %v469, %v2338
        %v2340 = vpop.f32.mrf.mxu0
        %v2341 = vpop.f32.mrf.mxu0
        %v2342 = vadd.f32 %v469, %v2341
        %v2343 = vpop.f32.mrf.mxu0
        %2344 = vmatprep.mubr.bf16.mxu0 %v1700
        %2345 = vmatmul.mubr.bf16.gmra.mxu0 %v1251
        %v2346 = vpop.f32.mrf.mxu0
        %v2347 = vadd.f32 %v469, %v2346
        %v2348 = vpop.f32.mrf.mxu0
        %v2349 = vpop.f32.mrf.mxu0
        %v2350 = vadd.f32 %v469, %v2349
        %v2351 = vpop.f32.mrf.mxu0
        %2352 = vmatprep.mubr.bf16.mxu0 %v1703
        %2353 = vmatmul.mubr.bf16.gmra.mxu0 %v1253
        %v2354 = vpop.f32.mrf.mxu0
        %v2355 = vadd.f32 %v469, %v2354
        %v2356 = vpop.f32.mrf.mxu0
        %v2357 = vpop.f32.mrf.mxu0
        %v2358 = vadd.f32 %v469, %v2357
        %v2359 = vpop.f32.mrf.mxu0
        %2360 = vmatprep.mubr.bf16.mxu0 %v1706
        %2361 = vmatmul.mubr.bf16.gmra.mxu0 %v1255
        %v2362 = vpop.f32.mrf.mxu0
        %v2363 = vadd.f32 %v469, %v2362
        %v2364 = vpop.f32.mrf.mxu0
        %v2365 = vpop.f32.mrf.mxu0
        %v2366 = vadd.f32 %v469, %v2365
        %v2367 = vpop.f32.mrf.mxu0
        %2368 = vmatprep.mubr.bf16.mxu0 %v1709
        %2369 = vmatmul.mubr.bf16.gmra.mxu0 %v1257
        %v2370 = vpop.f32.mrf.mxu0
        %v2371 = vadd.f32 %v469, %v2370
        %v2372 = vpop.f32.mrf.mxu0
        %v2373 = vpop.f32.mrf.mxu0
        %v2374 = vadd.f32 %v469, %v2373
        %v2375 = vpop.f32.mrf.mxu0
        %2376 = vmatprep.mubr.bf16.mxu0 %v1712
        %2377 = vmatmul.mubr.bf16.gmra.mxu0 %v1259
        %v2378 = vpop.f32.mrf.mxu0
        %v2379 = vadd.f32 %v469, %v2378
        %v2380 = vpop.f32.mrf.mxu0
        %v2381 = vpop.f32.mrf.mxu0
        %v2382 = vadd.f32 %v469, %v2381
        %v2383 = vpop.f32.mrf.mxu0
        %2384 = vmatprep.mubr.bf16.mxu0 %v1715
        %2385 = vmatmul.mubr.bf16.gmra.mxu0 %v1261
        %v2386 = vpop.f32.mrf.mxu0
        %v2387 = vadd.f32 %v469, %v2386
        %v2388 = vpop.f32.mrf.mxu0
        %v2389 = vpop.f32.mrf.mxu0
        %v2390 = vadd.f32 %v469, %v2389
        %v2391 = vpop.f32.mrf.mxu0
        %2392 = vmatprep.mubr.bf16.mxu0 %v1718
        %2393 = vmatmul.mubr.bf16.gmra.mxu0 %v1263
        %v2394 = vpop.f32.mrf.mxu0
        %v2395 = vadd.f32 %v469, %v2394
        %v2396 = vpop.f32.mrf.mxu0
        %v2397 = vpop.f32.mrf.mxu0
        %v2398 = vadd.f32 %v469, %v2397
        %v2399 = vpop.f32.mrf.mxu0
        %2400 = vmatprep.mubr.bf16.mxu0 %v1721
        %2401 = vmatmul.mubr.bf16.gmra.mxu0 %v1265
        %v2402 = vpop.f32.mrf.mxu0
        %v2403 = vadd.f32 %v469, %v2402
        %v2404 = vpop.f32.mrf.mxu0
        %v2405 = vpop.f32.mrf.mxu0
        %v2406 = vadd.f32 %v469, %v2405
        %v2407 = vpop.f32.mrf.mxu0
        %2408 = vmatprep.mubr.bf16.mxu0 %v1724
        %2409 = vmatmul.mubr.bf16.gmra.mxu0 %v1267
        %v2410 = vpop.f32.mrf.mxu0
        %v2411 = vadd.f32 %v469, %v2410
        %v2412 = vpop.f32.mrf.mxu0
        %v2413 = vpop.f32.mrf.mxu0
        %v2414 = vadd.f32 %v469, %v2413
        %v2415 = vpop.f32.mrf.mxu0
        %2416 = vmatprep.mubr.bf16.mxu0 %v1727
        %2417 = vmatmul.mubr.bf16.gmra.mxu0 %v1269
        %v2418 = vpop.f32.mrf.mxu0
        %v2419 = vadd.f32 %v469, %v2418
        %v2420 = vpop.f32.mrf.mxu0
        %v2421 = vpop.f32.mrf.mxu0
        %v2422 = vadd.f32 %v469, %v2421
        %v2423 = vpop.f32.mrf.mxu0
        %2424 = vmatprep.mubr.bf16.mxu0 %v1730
        %2425 = vmatmul.mubr.bf16.gmra.mxu0 %v1271
        %v2426 = vpop.f32.mrf.mxu0
        %v2427 = vadd.f32 %v469, %v2426
        %v2428 = vpop.f32.mrf.mxu0
        %v2429 = vpop.f32.mrf.mxu0
        %v2430 = vadd.f32 %v469, %v2429
        %v2431 = vpop.f32.mrf.mxu0
        %2432 = vmatprep.mubr.bf16.mxu0 %v1733
        %2433 = vmatmul.mubr.bf16.gmra.mxu0 %v1273
        %v2434 = vpop.f32.mrf.mxu0
        %v2435 = vadd.f32 %v469, %v2434
        %v2436 = vpop.f32.mrf.mxu0
        %v2437 = vpop.f32.mrf.mxu0
        %v2438 = vadd.f32 %v469, %v2437
        %v2439 = vpop.f32.mrf.mxu0
        %2440 = vmatprep.mubr.bf16.mxu0 %v1736
        %2441 = vmatmul.mubr.bf16.gmra.mxu0 %v1275
        %v2442 = vpop.f32.mrf.mxu0
        %v2443 = vadd.f32 %v469, %v2442
        %v2444 = vpop.f32.mrf.mxu0
        %v2445 = vpop.f32.mrf.mxu0
        %v2446 = vadd.f32 %v469, %v2445
        %v2447 = vpop.f32.mrf.mxu0
        %2448 = vmatprep.mubr.bf16.mxu0 %v1739
        %2449 = vmatmul.mubr.bf16.gmra.mxu0 %v1277
        %v2450 = vpop.f32.mrf.mxu0
        %v2451 = vadd.f32 %v469, %v2450
        %v2452 = vpop.f32.mrf.mxu0
        %v2453 = vpop.f32.mrf.mxu0
        %v2454 = vadd.f32 %v469, %v2453
        %v2455 = vpop.f32.mrf.mxu0
        %2456 = vmatprep.mubr.bf16.mxu0 %v1742
        %2457 = vmatmul.mubr.bf16.gmra.mxu0 %v1279
        %v2458 = vpop.f32.mrf.mxu0
        %v2459 = vadd.f32 %v469, %v2458
        %v2460 = vpop.f32.mrf.mxu0
        %v2461 = vpop.f32.mrf.mxu0
        %v2462 = vadd.f32 %v469, %v2461
        %v2463 = vpop.f32.mrf.mxu0
        %2464 = vmatprep.mubr.bf16.mxu0 %v1745
        %2465 = vmatmul.mubr.bf16.gmra.mxu0 %v1281
        %v2466 = vpop.f32.mrf.mxu0
        %v2467 = vadd.f32 %v469, %v2466
        %v2468 = vpop.f32.mrf.mxu0
        %v2469 = vpop.f32.mrf.mxu0
        %v2470 = vadd.f32 %v469, %v2469
        %v2471 = vpop.f32.mrf.mxu0
        %2472 = vmatprep.mubr.bf16.mxu0 %v1748
        %2473 = vmatmul.mubr.bf16.gmra.mxu0 %v1283
        %v2474 = vpop.f32.mrf.mxu0
        %v2475 = vadd.f32 %v469, %v2474
        %v2476 = vpop.f32.mrf.mxu0
        %v2477 = vpop.f32.mrf.mxu0
        %v2478 = vadd.f32 %v469, %v2477
        %v2479 = vpop.f32.mrf.mxu0
        %2480 = vmatprep.mubr.bf16.mxu0 %v1751
        %2481 = vmatmul.mubr.bf16.gmra.mxu0 %v1285
        %v2482 = vpop.f32.mrf.mxu0
        %v2483 = vadd.f32 %v469, %v2482
        %v2484 = vpop.f32.mrf.mxu0
        %v2485 = vpop.f32.mrf.mxu0
        %v2486 = vadd.f32 %v469, %v2485
        %v2487 = vpop.f32.mrf.mxu0
        %2488 = vmatprep.mubr.bf16.mxu0 %v1754
        %2489 = vmatmul.mubr.bf16.gmra.mxu0 %v1287
        %v2490 = vpop.f32.mrf.mxu0
        %v2491 = vadd.f32 %v469, %v2490
        %v2492 = vpop.f32.mrf.mxu0
        %v2493 = vpop.f32.mrf.mxu0
        %v2494 = vadd.f32 %v469, %v2493
        %v2495 = vpop.f32.mrf.mxu0
        %2496 = vmatprep.mubr.bf16.mxu0 %v1757
        %2497 = vmatmul.mubr.bf16.gmra.mxu0 %v1289
        %v2498 = vpop.f32.mrf.mxu0
        %v2499 = vadd.f32 %v469, %v2498
        %v2500 = vpop.f32.mrf.mxu0
        %v2501 = vpop.f32.mrf.mxu0
        %v2502 = vadd.f32 %v469, %v2501
        %v2503 = vpop.f32.mrf.mxu0
        %2504 = vmatprep.mubr.bf16.mxu0 %v1760
        %2505 = vmatmul.mubr.bf16.gmra.mxu0 %v1291
        %v2506 = vpop.f32.mrf.mxu0
        %v2507 = vadd.f32 %v469, %v2506
        %v2508 = vpop.f32.mrf.mxu0
        %v2509 = vpop.f32.mrf.mxu0
        %v2510 = vadd.f32 %v469, %v2509
        %v2511 = vpop.f32.mrf.mxu0
        %2512 = vmatprep.mubr.bf16.mxu0 %v1763
        %2513 = vmatmul.mubr.bf16.gmra.mxu0 %v1293
        %v2514 = vpop.f32.mrf.mxu0
        %v2515 = vadd.f32 %v469, %v2514
        %v2516 = vpop.f32.mrf.mxu0
        %v2517 = vpop.f32.mrf.mxu0
        %v2518 = vadd.f32 %v469, %v2517
        %v2519 = vpop.f32.mrf.mxu0
        %2520 = vmatprep.mubr.bf16.mxu0 %v1766
        %2521 = vmatmul.mubr.bf16.gmra.mxu0 %v1295
        %v2522 = vpop.f32.mrf.mxu0
        %v2523 = vadd.f32 %v469, %v2522
        %v2524 = vpop.f32.mrf.mxu0
        %v2525 = vpop.f32.mrf.mxu0
        %v2526 = vadd.f32 %v469, %v2525
        %v2527 = vpop.f32.mrf.mxu0
        %2528 = vmatprep.mubr.bf16.mxu0 %v1769
        %2529 = vmatmul.mubr.bf16.gmra.mxu0 %v1297
        %v2530 = vpop.f32.mrf.mxu0
        %v2531 = vadd.f32 %v469, %v2530
        %v2532 = vpop.f32.mrf.mxu0
        %v2533 = vpop.f32.mrf.mxu0
        %v2534 = vadd.f32 %v469, %v2533
        %v2535 = vpop.f32.mrf.mxu0
        %2536 = vmatprep.mubr.bf16.mxu0 %v1772
        %2537 = vmatmul.mubr.bf16.gmra.mxu0 %v1299
        %v2538 = vpop.f32.mrf.mxu0
        %v2539 = vadd.f32 %v469, %v2538
        %v2540 = vpop.f32.mrf.mxu0
        %v2541 = vpop.f32.mrf.mxu0
        %v2542 = vadd.f32 %v469, %v2541
        %v2543 = vpop.f32.mrf.mxu0
        %2544 = vmatprep.mubr.bf16.mxu0 %v1775
        %2545 = vmatmul.mubr.bf16.gmra.mxu0 %v1301
        %v2546 = vpop.f32.mrf.mxu0
        %v2547 = vadd.f32 %v469, %v2546
        %v2548 = vpop.f32.mrf.mxu0
        %v2549 = vpop.f32.mrf.mxu0
        %v2550 = vadd.f32 %v469, %v2549
        %v2551 = vpop.f32.mrf.mxu0
        %2552 = vmatprep.mubr.bf16.mxu0 %v1778
        %2553 = vmatmul.mubr.bf16.gmra.mxu0 %v1303
        %v2554 = vpop.f32.mrf.mxu0
        %v2555 = vadd.f32 %v469, %v2554
        %v2556 = vpop.f32.mrf.mxu0
        %v2557 = vpop.f32.mrf.mxu0
        %v2558 = vadd.f32 %v469, %v2557
        %v2559 = vpop.f32.mrf.mxu0
        %2560 = vmatprep.mubr.bf16.mxu0 %v1781
        %2561 = vmatmul.mubr.bf16.gmra.mxu0 %v1305
        %v2562 = vpop.f32.mrf.mxu0
        %v2563 = vadd.f32 %v469, %v2562
        %v2564 = vpop.f32.mrf.mxu0
        %v2565 = vpop.f32.mrf.mxu0
        %v2566 = vadd.f32 %v469, %v2565
        %v2567 = vpop.f32.mrf.mxu0
        %2568 = vmatprep.mubr.bf16.mxu0 %v1784
        %2569 = vmatmul.mubr.bf16.gmra.mxu0 %v1307
        %v2570 = vpop.f32.mrf.mxu0
        %v2571 = vadd.f32 %v469, %v2570
        %v2572 = vpop.f32.mrf.mxu0
        %v2573 = vpop.f32.mrf.mxu0
        %v2574 = vadd.f32 %v469, %v2573
        %v2575 = vpop.f32.mrf.mxu0
        %2576 = vmatprep.mubr.bf16.mxu0 %v1787
        %2577 = vmatmul.mubr.bf16.gmra.mxu0 %v1309
        %v2578 = vpop.f32.mrf.mxu0
        %v2579 = vadd.f32 %v469, %v2578
        %v2580 = vpop.f32.mrf.mxu0
        %v2581 = vpop.f32.mrf.mxu0
        %v2582 = vadd.f32 %v469, %v2581
        %v2583 = vpop.f32.mrf.mxu0
        %2584 = vmatprep.mubr.bf16.mxu0 %v1790
        %2585 = vmatmul.mubr.bf16.gmra.mxu0 %v1311
        %v2586 = vpop.f32.mrf.mxu0
        %v2587 = vadd.f32 %v469, %v2586
        %v2588 = vpop.f32.mrf.mxu0
        %v2589 = vpop.f32.mrf.mxu0
        %v2590 = vadd.f32 %v469, %v2589
        %v2591 = vpop.f32.mrf.mxu0
        %2592 = vmatprep.mubr.bf16.mxu0 %v1793
        %2593 = vmatmul.mubr.bf16.gmra.mxu0 %v1313
        %v2594 = vpop.f32.mrf.mxu0
        %v2595 = vadd.f32 %v469, %v2594
        %v2596 = vpop.f32.mrf.mxu0
        %v2597 = vpop.f32.mrf.mxu0
        %v2598 = vadd.f32 %v469, %v2597
        %v2599 = vpop.f32.mrf.mxu0
        %2600 = vmatprep.mubr.bf16.mxu0 %v1796
        %2601 = vmatmul.mubr.bf16.gmra.mxu0 %v1315
        %v2602 = vpop.f32.mrf.mxu0
        %v2603 = vadd.f32 %v469, %v2602
        %v2604 = vpop.f32.mrf.mxu0
        %v2605 = vpop.f32.mrf.mxu0
        %v2606 = vadd.f32 %v469, %v2605
        %v2607 = vpop.f32.mrf.mxu0
        %2608 = vmatprep.mubr.bf16.mxu0 %v1799
        %2609 = vmatmul.mubr.bf16.gmra.mxu0 %v1317
        %v2610 = vpop.f32.mrf.mxu0
        %v2611 = vadd.f32 %v469, %v2610
        %v2612 = vpop.f32.mrf.mxu0
        %v2613 = vpop.f32.mrf.mxu0
        %v2614 = vadd.f32 %v469, %v2613
        %v2615 = vpop.f32.mrf.mxu0
        %2616 = vmatprep.mubr.bf16.mxu0 %v1802
        %2617 = vmatmul.mubr.bf16.gmra.mxu0 %v1319
        %v2618 = vpop.f32.mrf.mxu0
        %v2619 = vadd.f32 %v469, %v2618
        %v2620 = vpop.f32.mrf.mxu0
        %v2621 = vpop.f32.mrf.mxu0
        %v2622 = vadd.f32 %v469, %v2621
        %v2623 = vpop.f32.mrf.mxu0
        %2624 = vmatprep.mubr.bf16.mxu0 %v1805
        %2625 = vmatmul.mubr.bf16.gmra.mxu0 %v1321
        %v2626 = vpop.f32.mrf.mxu0
        %v2627 = vadd.f32 %v469, %v2626
        %v2628 = vpop.f32.mrf.mxu0
        %v2629 = vpop.f32.mrf.mxu0
        %v2630 = vadd.f32 %v469, %v2629
        %v2631 = vpop.f32.mrf.mxu0
        %2632 = vmatprep.mubr.bf16.mxu0 %v1808
        %2633 = vmatmul.mubr.bf16.gmra.mxu0 %v1323
        %v2634 = vpop.f32.mrf.mxu0
        %v2635 = vadd.f32 %v469, %v2634
        %v2636 = vpop.f32.mrf.mxu0
        %v2637 = vpop.f32.mrf.mxu0
        %v2638 = vadd.f32 %v469, %v2637
        %v2639 = vpop.f32.mrf.mxu0
        %2640 = vmatprep.mubr.bf16.mxu0 %v1811
        %2641 = vmatmul.mubr.bf16.gmra.mxu0 %v1325
        %v2642 = vpop.f32.mrf.mxu0
        %v2643 = vadd.f32 %v469, %v2642
        %v2644 = vpop.f32.mrf.mxu0
        %v2645 = vpop.f32.mrf.mxu0
        %v2646 = vadd.f32 %v469, %v2645
        %v2647 = vpop.f32.mrf.mxu0
        %2648 = vmatprep.mubr.bf16.mxu0 %v1814
        %2649 = vmatmul.mubr.bf16.gmra.mxu0 %v1327
        %v2650 = vpop.f32.mrf.mxu0
        %v2651 = vadd.f32 %v469, %v2650
        %v2652 = vpop.f32.mrf.mxu0
        %v2653 = vpop.f32.mrf.mxu0
        %v2654 = vadd.f32 %v469, %v2653
        %v2655 = vpop.f32.mrf.mxu0
        %2656 = vmatprep.mubr.bf16.mxu0 %v1817
        %2657 = vmatmul.mubr.bf16.gmra.mxu0 %v1329
        %v2658 = vpop.f32.mrf.mxu0
        %v2659 = vadd.f32 %v469, %v2658
        %v2660 = vpop.f32.mrf.mxu0
        %v2661 = vpop.f32.mrf.mxu0
        %v2662 = vadd.f32 %v469, %v2661
        %v2663 = vpop.f32.mrf.mxu0
        %2664 = vmatprep.mubr.bf16.mxu0 %v1820
        %2665 = vmatmul.mubr.bf16.gmra.mxu0 %v1331
        %v2666 = vpop.f32.mrf.mxu0
        %v2667 = vadd.f32 %v469, %v2666
        %v2668 = vpop.f32.mrf.mxu0
        %v2669 = vpop.f32.mrf.mxu0
        %v2670 = vadd.f32 %v469, %v2669
        %v2671 = vpop.f32.mrf.mxu0
        %2672 = vmatprep.mubr.bf16.mxu0 %v1823
        %2673 = vmatmul.mubr.bf16.gmra.mxu0 %v1333
        %v2674 = vpop.f32.mrf.mxu0
        %v2675 = vadd.f32 %v469, %v2674
        %v2676 = vpop.f32.mrf.mxu0
        %v2677 = vpop.f32.mrf.mxu0
        %v2678 = vadd.f32 %v469, %v2677
        %v2679 = vpop.f32.mrf.mxu0
        %2680 = vmatprep.mubr.bf16.mxu0 %v1826
        %2681 = vmatmul.mubr.bf16.gmra.mxu0 %v1335
        %v2682 = vpop.f32.mrf.mxu0
        %v2683 = vadd.f32 %v469, %v2682
        %v2684 = vpop.f32.mrf.mxu0
        %v2685 = vpop.f32.mrf.mxu0
        %v2686 = vadd.f32 %v469, %v2685
        %v2687 = vpop.f32.mrf.mxu0
        %2688 = vmatprep.mubr.bf16.mxu0 %v1829
        %2689 = vmatmul.mubr.bf16.gmra.mxu0 %v1337
        %v2690 = vpop.f32.mrf.mxu0
        %v2691 = vadd.f32 %v469, %v2690
        %v2692 = vpop.f32.mrf.mxu0
        %v2693 = vpop.f32.mrf.mxu0
        %v2694 = vadd.f32 %v469, %v2693
        %v2695 = vpop.f32.mrf.mxu0
        %2696 = vmatprep.mubr.bf16.mxu0 %v1832
        %2697 = vmatmul.mubr.bf16.gmra.mxu0 %v1339
        %v2698 = vpop.f32.mrf.mxu0
        %v2699 = vadd.f32 %v469, %v2698
        %v2700 = vpop.f32.mrf.mxu0
        %v2701 = vpop.f32.mrf.mxu0
        %v2702 = vadd.f32 %v469, %v2701
        %v2703 = vpop.f32.mrf.mxu0
        %2704 = vmatprep.mubr.bf16.mxu0 %v1835
        %2705 = vmatmul.mubr.bf16.gmra.mxu0 %v1341
        %v2706 = vpop.f32.mrf.mxu0
        %v2707 = vadd.f32 %v469, %v2706
        %v2708 = vpop.f32.mrf.mxu0
        %v2709 = vpop.f32.mrf.mxu0
        %v2710 = vadd.f32 %v469, %v2709
        %v2711 = vpop.f32.mrf.mxu0
        %2712 = vmatprep.mubr.bf16.mxu0 %v1838
        %2713 = vmatmul.mubr.bf16.gmra.mxu0 %v1343
        %v2714 = vpop.f32.mrf.mxu0
        %v2715 = vadd.f32 %v469, %v2714
        %v2716 = vpop.f32.mrf.mxu0
        %v2717 = vpop.f32.mrf.mxu0
        %v2718 = vadd.f32 %v469, %v2717
        %v2719 = vpop.f32.mrf.mxu0
        %2720 = vmatprep.mubr.bf16.mxu0 %v1841
        %2721 = vmatmul.mubr.bf16.gmra.mxu0 %v1345
        %v2722 = vpop.f32.mrf.mxu0
        %v2723 = vadd.f32 %v469, %v2722
        %v2724 = vpop.f32.mrf.mxu0
        %v2725 = vpop.f32.mrf.mxu0
        %v2726 = vadd.f32 %v469, %v2725
        %v2727 = vpop.f32.mrf.mxu0
        %2728 = vmatprep.mubr.bf16.mxu0 %v1844
        %2729 = vmatmul.mubr.bf16.gmra.mxu0 %v1347
        %v2730 = vpop.f32.mrf.mxu0
        %v2731 = vadd.f32 %v469, %v2730
        %v2732 = vpop.f32.mrf.mxu0
        %v2733 = vpop.f32.mrf.mxu0
        %v2734 = vadd.f32 %v469, %v2733
        %v2735 = vpop.f32.mrf.mxu0
        %2736 = vmatprep.mubr.bf16.mxu0 %v1847
        %2737 = vmatmul.mubr.bf16.gmra.mxu0 %v1349
        %v2738 = vpop.f32.mrf.mxu0
        %v2739 = vadd.f32 %v469, %v2738
        %v2740 = vpop.f32.mrf.mxu0
        %v2741 = vpop.f32.mrf.mxu0
        %v2742 = vadd.f32 %v469, %v2741
        %v2743 = vpop.f32.mrf.mxu0
        %2744 = vmatprep.mubr.bf16.mxu0 %v1850
        %2745 = vmatmul.mubr.bf16.gmra.mxu0 %v1351
        %v2746 = vpop.f32.mrf.mxu0
        %v2747 = vadd.f32 %v469, %v2746
        %v2748 = vpop.f32.mrf.mxu0
        %v2749 = vpop.f32.mrf.mxu0
        %v2750 = vadd.f32 %v469, %v2749
        %v2751 = vpop.f32.mrf.mxu0
        %2752 = vmatprep.mubr.bf16.mxu0 %v1853
        %2753 = vmatmul.mubr.bf16.gmra.mxu0 %v1353
        %v2754 = vpop.f32.mrf.mxu0
        %v2755 = vadd.f32 %v469, %v2754
        %v2756 = vpop.f32.mrf.mxu0
        %v2757 = vpop.f32.mrf.mxu0
        %v2758 = vadd.f32 %v469, %v2757
        %v2759 = vpop.f32.mrf.mxu0
        %2760 = vmatprep.mubr.bf16.mxu0 %v1856
        %2761 = vmatmul.mubr.bf16.gmra.mxu0 %v1355
        %v2762 = vpop.f32.mrf.mxu0
        %v2763 = vadd.f32 %v469, %v2762
        %v2764 = vpop.f32.mrf.mxu0
        %v2765 = vpop.f32.mrf.mxu0
        %v2766 = vadd.f32 %v469, %v2765
        %v2767 = vpop.f32.mrf.mxu0
        %2768 = vmatprep.mubr.bf16.mxu0 %v1859
        %2769 = vmatmul.mubr.bf16.gmra.mxu0 %v1357
        %v2770 = vpop.f32.mrf.mxu0
        %v2771 = vadd.f32 %v469, %v2770
        %v2772 = vpop.f32.mrf.mxu0
        %v2773 = vpop.f32.mrf.mxu0
        %v2774 = vadd.f32 %v469, %v2773
        %v2775 = vpop.f32.mrf.mxu0
        %2776 = vmatprep.mubr.bf16.mxu0 %v1862
        %2777 = vmatmul.mubr.bf16.gmra.mxu0 %v1359
        %v2778 = vpop.f32.mrf.mxu0
        %v2779 = vadd.f32 %v469, %v2778
        %v2780 = vpop.f32.mrf.mxu0
        %v2781 = vpop.f32.mrf.mxu0
        %v2782 = vadd.f32 %v469, %v2781
        %v2783 = vpop.f32.mrf.mxu0
        %2784 = vmatprep.mubr.bf16.mxu0 %v1865
        %2785 = vmatmul.mubr.bf16.gmra.mxu0 %v1361
        %v2786 = vpop.f32.mrf.mxu0
        %v2787 = vadd.f32 %v469, %v2786
        %v2788 = vpop.f32.mrf.mxu0
        %v2789 = vpop.f32.mrf.mxu0
        %v2790 = vadd.f32 %v469, %v2789
        %v2791 = vpop.f32.mrf.mxu0
        %2792 = vmatprep.mubr.bf16.mxu0 %v1868
        %2793 = vmatmul.mubr.bf16.gmra.mxu0 %v1363
        %v2794 = vpop.f32.mrf.mxu0
        %v2795 = vadd.f32 %v469, %v2794
        %v2796 = vpop.f32.mrf.mxu0
        %v2797 = vpop.f32.mrf.mxu0
        %v2798 = vadd.f32 %v469, %v2797
        %v2799 = vpop.f32.mrf.mxu0
        %2800 = vmatprep.mubr.bf16.mxu0 %v1871
        %2801 = vmatmul.mubr.bf16.gmra.mxu0 %v1365
        %v2802 = vpop.f32.mrf.mxu0
        %v2803 = vadd.f32 %v469, %v2802
        %v2804 = vpop.f32.mrf.mxu0
        %v2805 = vpop.f32.mrf.mxu0
        %v2806 = vadd.f32 %v469, %v2805
        %v2807 = vpop.f32.mrf.mxu0
        %2808 = vdwg.mxu0
        %vm2809 = vcmp.gt.f32.partialorder %v1915, 0.0
        %vm2810 = vcmp.gt.f32.partialorder %v1918, 0.0
        %vm2811 = vcmp.gt.f32.partialorder %v1923, 0.0
        %vm2812 = vcmp.gt.f32.partialorder %v1926, 0.0
        %vm2813 = vcmp.gt.f32.partialorder %v1931, 0.0
        %vm2814 = vcmp.gt.f32.partialorder %v1934, 0.0
        %vm2815 = vcmp.gt.f32.partialorder %v1939, 0.0
        %vm2816 = vcmp.gt.f32.partialorder %v1942, 0.0
        %vm2817 = vcmp.gt.f32.partialorder %v1947, 0.0
        %vm2818 = vcmp.gt.f32.partialorder %v1950, 0.0
        %vm2819 = vcmp.gt.f32.partialorder %v1955, 0.0
        %vm2820 = vcmp.gt.f32.partialorder %v1958, 0.0
        %vm2821 = vcmp.gt.f32.partialorder %v1963, 0.0
        %vm2822 = vcmp.gt.f32.partialorder %v1966, 0.0
        %vm2823 = vcmp.gt.f32.partialorder %v1971, 0.0
        %vm2824 = vcmp.gt.f32.partialorder %v1974, 0.0
        %vm2825 = vcmp.gt.f32.partialorder %v1979, 0.0
        %vm2826 = vcmp.gt.f32.partialorder %v1982, 0.0
        %vm2827 = vcmp.gt.f32.partialorder %v1987, 0.0
        %vm2828 = vcmp.gt.f32.partialorder %v1990, 0.0
        %vm2829 = vcmp.gt.f32.partialorder %v1995, 0.0
        %vm2830 = vcmp.gt.f32.partialorder %v1998, 0.0
        %vm2831 = vcmp.gt.f32.partialorder %v2003, 0.0
        %vm2832 = vcmp.gt.f32.partialorder %v2006, 0.0
        %vm2833 = vcmp.gt.f32.partialorder %v2011, 0.0
        %vm2834 = vcmp.gt.f32.partialorder %v2014, 0.0
        %vm2835 = vcmp.gt.f32.partialorder %v2019, 0.0
        %vm2836 = vcmp.gt.f32.partialorder %v2022, 0.0
        %vm2837 = vcmp.gt.f32.partialorder %v2027, 0.0
        %vm2838 = vcmp.gt.f32.partialorder %v2030, 0.0
        %vm2839 = vcmp.gt.f32.partialorder %v2035, 0.0
        %vm2840 = vcmp.gt.f32.partialorder %v2038, 0.0
        %vm2841 = vcmp.gt.f32.partialorder %v2043, 0.0
        %vm2842 = vcmp.gt.f32.partialorder %v2046, 0.0
        %vm2843 = vcmp.gt.f32.partialorder %v2051, 0.0
        %vm2844 = vcmp.gt.f32.partialorder %v2054, 0.0
        %vm2845 = vcmp.gt.f32.partialorder %v2059, 0.0
        %vm2846 = vcmp.gt.f32.partialorder %v2062, 0.0
        %vm2847 = vcmp.gt.f32.partialorder %v2067, 0.0
        %vm2848 = vcmp.gt.f32.partialorder %v2070, 0.0
        %vm2849 = vcmp.gt.f32.partialorder %v2075, 0.0
        %vm2850 = vcmp.gt.f32.partialorder %v2078, 0.0
        %vm2851 = vcmp.gt.f32.partialorder %v2083, 0.0
        %vm2852 = vcmp.gt.f32.partialorder %v2086, 0.0
        %vm2853 = vcmp.gt.f32.partialorder %v2091, 0.0
        %vm2854 = vcmp.gt.f32.partialorder %v2094, 0.0
        %vm2855 = vcmp.gt.f32.partialorder %v2099, 0.0
        %vm2856 = vcmp.gt.f32.partialorder %v2102, 0.0
        %vm2857 = vcmp.gt.f32.partialorder %v2107, 0.0
        %vm2858 = vcmp.gt.f32.partialorder %v2110, 0.0
        %vm2859 = vcmp.gt.f32.partialorder %v2115, 0.0
        %vm2860 = vcmp.gt.f32.partialorder %v2118, 0.0
        %vm2861 = vcmp.gt.f32.partialorder %v2123, 0.0
        %vm2862 = vcmp.gt.f32.partialorder %v2126, 0.0
        %vm2863 = vcmp.gt.f32.partialorder %v2131, 0.0
        %vm2864 = vcmp.gt.f32.partialorder %v2134, 0.0
        %vm2865 = vcmp.gt.f32.partialorder %v2139, 0.0
        %vm2866 = vcmp.gt.f32.partialorder %v2142, 0.0
        %vm2867 = vcmp.gt.f32.partialorder %v2147, 0.0
        %vm2868 = vcmp.gt.f32.partialorder %v2150, 0.0
        %vm2869 = vcmp.gt.f32.partialorder %v2155, 0.0
        %vm2870 = vcmp.gt.f32.partialorder %v2158, 0.0
        %vm2871 = vcmp.gt.f32.partialorder %v2163, 0.0
        %vm2872 = vcmp.gt.f32.partialorder %v2166, 0.0
        %vm2873 = vcmp.gt.f32.partialorder %v2171, 0.0
        %vm2874 = vcmp.gt.f32.partialorder %v2174, 0.0
        %vm2875 = vcmp.gt.f32.partialorder %v2179, 0.0
        %vm2876 = vcmp.gt.f32.partialorder %v2182, 0.0
        %vm2877 = vcmp.gt.f32.partialorder %v2187, 0.0
        %vm2878 = vcmp.gt.f32.partialorder %v2190, 0.0
        %vm2879 = vcmp.gt.f32.partialorder %v2195, 0.0
        %vm2880 = vcmp.gt.f32.partialorder %v2198, 0.0
        %vm2881 = vcmp.gt.f32.partialorder %v2203, 0.0
        %vm2882 = vcmp.gt.f32.partialorder %v2206, 0.0
        %vm2883 = vcmp.gt.f32.partialorder %v2211, 0.0
        %vm2884 = vcmp.gt.f32.partialorder %v2214, 0.0
        %vm2885 = vcmp.gt.f32.partialorder %v2219, 0.0
        %vm2886 = vcmp.gt.f32.partialorder %v2222, 0.0
        %vm2887 = vcmp.gt.f32.partialorder %v2227, 0.0
        %vm2888 = vcmp.gt.f32.partialorder %v2230, 0.0
        %vm2889 = vcmp.gt.f32.partialorder %v2235, 0.0
        %vm2890 = vcmp.gt.f32.partialorder %v2238, 0.0
        %vm2891 = vcmp.gt.f32.partialorder %v2243, 0.0
        %vm2892 = vcmp.gt.f32.partialorder %v2246, 0.0
        %vm2893 = vcmp.gt.f32.partialorder %v2251, 0.0
        %vm2894 = vcmp.gt.f32.partialorder %v2254, 0.0
        %vm2895 = vcmp.gt.f32.partialorder %v2259, 0.0
        %vm2896 = vcmp.gt.f32.partialorder %v2262, 0.0
        %vm2897 = vcmp.gt.f32.partialorder %v2267, 0.0
        %vm2898 = vcmp.gt.f32.partialorder %v2270, 0.0
        %vm2899 = vcmp.gt.f32.partialorder %v2275, 0.0
        %vm2900 = vcmp.gt.f32.partialorder %v2278, 0.0
        %vm2901 = vcmp.gt.f32.partialorder %v2283, 0.0
        %vm2902 = vcmp.gt.f32.partialorder %v2286, 0.0
        %vm2903 = vcmp.gt.f32.partialorder %v2291, 0.0
        %vm2904 = vcmp.gt.f32.partialorder %v2294, 0.0
        %vm2905 = vcmp.gt.f32.partialorder %v2299, 0.0
        %vm2906 = vcmp.gt.f32.partialorder %v2302, 0.0
        %vm2907 = vcmp.gt.f32.partialorder %v2307, 0.0
        %vm2908 = vcmp.gt.f32.partialorder %v2310, 0.0
        %vm2909 = vcmp.gt.f32.partialorder %v2315, 0.0
        %vm2910 = vcmp.gt.f32.partialorder %v2318, 0.0
        %vm2911 = vcmp.gt.f32.partialorder %v2323, 0.0
        %vm2912 = vcmp.gt.f32.partialorder %v2326, 0.0
        %vm2913 = vcmp.gt.f32.partialorder %v2331, 0.0
        %vm2914 = vcmp.gt.f32.partialorder %v2334, 0.0
        %vm2915 = vcmp.gt.f32.partialorder %v2339, 0.0
        %vm2916 = vcmp.gt.f32.partialorder %v2342, 0.0
        %vm2917 = vcmp.gt.f32.partialorder %v2347, 0.0
        %vm2918 = vcmp.gt.f32.partialorder %v2350, 0.0
        %vm2919 = vcmp.gt.f32.partialorder %v2355, 0.0
        %vm2920 = vcmp.gt.f32.partialorder %v2358, 0.0
        %vm2921 = vcmp.gt.f32.partialorder %v2363, 0.0
        %vm2922 = vcmp.gt.f32.partialorder %v2366, 0.0
        %vm2923 = vcmp.gt.f32.partialorder %v2371, 0.0
        %vm2924 = vcmp.gt.f32.partialorder %v2374, 0.0
        %vm2925 = vcmp.gt.f32.partialorder %v2379, 0.0
        %vm2926 = vcmp.gt.f32.partialorder %v2382, 0.0
        %vm2927 = vcmp.gt.f32.partialorder %v2387, 0.0
        %vm2928 = vcmp.gt.f32.partialorder %v2390, 0.0
        %vm2929 = vcmp.gt.f32.partialorder %v2395, 0.0
        %vm2930 = vcmp.gt.f32.partialorder %v2398, 0.0
        %vm2931 = vcmp.gt.f32.partialorder %v2403, 0.0
        %vm2932 = vcmp.gt.f32.partialorder %v2406, 0.0
        %vm2933 = vcmp.gt.f32.partialorder %v2411, 0.0
        %vm2934 = vcmp.gt.f32.partialorder %v2414, 0.0
        %vm2935 = vcmp.gt.f32.partialorder %v2419, 0.0
        %vm2936 = vcmp.gt.f32.partialorder %v2422, 0.0
        %vm2937 = vcmp.gt.f32.partialorder %v2427, 0.0
        %vm2938 = vcmp.gt.f32.partialorder %v2430, 0.0
        %vm2939 = vcmp.gt.f32.partialorder %v2435, 0.0
        %vm2940 = vcmp.gt.f32.partialorder %v2438, 0.0
        %vm2941 = vcmp.gt.f32.partialorder %v2443, 0.0
        %vm2942 = vcmp.gt.f32.partialorder %v2446, 0.0
        %vm2943 = vcmp.gt.f32.partialorder %v2451, 0.0
        %vm2944 = vcmp.gt.f32.partialorder %v2454, 0.0
        %vm2945 = vcmp.gt.f32.partialorder %v2459, 0.0
        %vm2946 = vcmp.gt.f32.partialorder %v2462, 0.0
        %vm2947 = vcmp.gt.f32.partialorder %v2467, 0.0
        %vm2948 = vcmp.gt.f32.partialorder %v2470, 0.0
        %vm2949 = vcmp.gt.f32.partialorder %v2475, 0.0
        %vm2950 = vcmp.gt.f32.partialorder %v2478, 0.0
        %vm2951 = vcmp.gt.f32.partialorder %v2483, 0.0
        %vm2952 = vcmp.gt.f32.partialorder %v2486, 0.0
        %vm2953 = vcmp.gt.f32.partialorder %v2491, 0.0
        %vm2954 = vcmp.gt.f32.partialorder %v2494, 0.0
        %vm2955 = vcmp.gt.f32.partialorder %v2499, 0.0
        %vm2956 = vcmp.gt.f32.partialorder %v2502, 0.0
        %vm2957 = vcmp.gt.f32.partialorder %v2507, 0.0
        %vm2958 = vcmp.gt.f32.partialorder %v2510, 0.0
        %vm2959 = vcmp.gt.f32.partialorder %v2515, 0.0
        %vm2960 = vcmp.gt.f32.partialorder %v2518, 0.0
        %vm2961 = vcmp.gt.f32.partialorder %v2523, 0.0
        %vm2962 = vcmp.gt.f32.partialorder %v2526, 0.0
        %vm2963 = vcmp.gt.f32.partialorder %v2531, 0.0
        %vm2964 = vcmp.gt.f32.partialorder %v2534, 0.0
        %vm2965 = vcmp.gt.f32.partialorder %v2539, 0.0
        %vm2966 = vcmp.gt.f32.partialorder %v2542, 0.0
        %vm2967 = vcmp.gt.f32.partialorder %v2547, 0.0
        %vm2968 = vcmp.gt.f32.partialorder %v2550, 0.0
        %vm2969 = vcmp.gt.f32.partialorder %v2555, 0.0
        %vm2970 = vcmp.gt.f32.partialorder %v2558, 0.0
        %vm2971 = vcmp.gt.f32.partialorder %v2563, 0.0
        %vm2972 = vcmp.gt.f32.partialorder %v2566, 0.0
        %vm2973 = vcmp.gt.f32.partialorder %v2571, 0.0
        %vm2974 = vcmp.gt.f32.partialorder %v2574, 0.0
        %vm2975 = vcmp.gt.f32.partialorder %v2579, 0.0
        %vm2976 = vcmp.gt.f32.partialorder %v2582, 0.0
        %vm2977 = vcmp.gt.f32.partialorder %v2587, 0.0
        %vm2978 = vcmp.gt.f32.partialorder %v2590, 0.0
        %vm2979 = vcmp.gt.f32.partialorder %v2595, 0.0
        %vm2980 = vcmp.gt.f32.partialorder %v2598, 0.0
        %vm2981 = vcmp.gt.f32.partialorder %v2603, 0.0
        %vm2982 = vcmp.gt.f32.partialorder %v2606, 0.0
        %vm2983 = vcmp.gt.f32.partialorder %v2611, 0.0
        %vm2984 = vcmp.gt.f32.partialorder %v2614, 0.0
        %vm2985 = vcmp.gt.f32.partialorder %v2619, 0.0
        %vm2986 = vcmp.gt.f32.partialorder %v2622, 0.0
        %vm2987 = vcmp.gt.f32.partialorder %v2627, 0.0
        %vm2988 = vcmp.gt.f32.partialorder %v2630, 0.0
        %vm2989 = vcmp.gt.f32.partialorder %v2635, 0.0
        %vm2990 = vcmp.gt.f32.partialorder %v2638, 0.0
        %vm2991 = vcmp.gt.f32.partialorder %v2643, 0.0
        %vm2992 = vcmp.gt.f32.partialorder %v2646, 0.0
        %vm2993 = vcmp.gt.f32.partialorder %v2651, 0.0
        %vm2994 = vcmp.gt.f32.partialorder %v2654, 0.0
        %vm2995 = vcmp.gt.f32.partialorder %v2659, 0.0
        %vm2996 = vcmp.gt.f32.partialorder %v2662, 0.0
        %vm2997 = vcmp.gt.f32.partialorder %v2667, 0.0
        %vm2998 = vcmp.gt.f32.partialorder %v2670, 0.0
        %vm2999 = vcmp.gt.f32.partialorder %v2675, 0.0
        %vm3000 = vcmp.gt.f32.partialorder %v2678, 0.0
        %vm3001 = vcmp.gt.f32.partialorder %v2683, 0.0
        %vm3002 = vcmp.gt.f32.partialorder %v2686, 0.0
        %vm3003 = vcmp.gt.f32.partialorder %v2691, 0.0
        %vm3004 = vcmp.gt.f32.partialorder %v2694, 0.0
        %vm3005 = vcmp.gt.f32.partialorder %v2699, 0.0
        %vm3006 = vcmp.gt.f32.partialorder %v2702, 0.0
        %vm3007 = vcmp.gt.f32.partialorder %v2707, 0.0
        %vm3008 = vcmp.gt.f32.partialorder %v2710, 0.0
        %vm3009 = vcmp.gt.f32.partialorder %v2715, 0.0
        %vm3010 = vcmp.gt.f32.partialorder %v2718, 0.0
        %vm3011 = vcmp.gt.f32.partialorder %v2723, 0.0
        %vm3012 = vcmp.gt.f32.partialorder %v2726, 0.0
        %vm3013 = vcmp.gt.f32.partialorder %v2731, 0.0
        %vm3014 = vcmp.gt.f32.partialorder %v2734, 0.0
        %vm3015 = vcmp.gt.f32.partialorder %v2739, 0.0
        %vm3016 = vcmp.gt.f32.partialorder %v2742, 0.0
        %vm3017 = vcmp.gt.f32.partialorder %v2747, 0.0
        %vm3018 = vcmp.gt.f32.partialorder %v2750, 0.0
        %vm3019 = vcmp.gt.f32.partialorder %v2755, 0.0
        %vm3020 = vcmp.gt.f32.partialorder %v2758, 0.0
        %vm3021 = vcmp.gt.f32.partialorder %v2763, 0.0
        %vm3022 = vcmp.gt.f32.partialorder %v2766, 0.0
        %vm3023 = vcmp.gt.f32.partialorder %v2771, 0.0
        %vm3024 = vcmp.gt.f32.partialorder %v2774, 0.0
        %vm3025 = vcmp.gt.f32.partialorder %v2779, 0.0
        %vm3026 = vcmp.gt.f32.partialorder %v2782, 0.0
        %vm3027 = vcmp.gt.f32.partialorder %v2787, 0.0
        %vm3028 = vcmp.gt.f32.partialorder %v2790, 0.0
        %vm3029 = vcmp.gt.f32.partialorder %v2795, 0.0
        %vm3030 = vcmp.gt.f32.partialorder %v2798, 0.0
        %vm3031 = vcmp.gt.f32.partialorder %v2803, 0.0
        %vm3032 = vcmp.gt.f32.partialorder %v2806, 0.0
        %v3033 = vmul.f32 %v1915, 0.1
        %v3034 = vmul.f32 %v1918, 0.1
        %v3035 = vmul.f32 %v1923, 0.1
        %v3036 = vmul.f32 %v1926, 0.1
        %v3037 = vmul.f32 %v1931, 0.1
        %v3038 = vmul.f32 %v1934, 0.1
        %v3039 = vmul.f32 %v1939, 0.1
        %v3040 = vmul.f32 %v1942, 0.1
        %v3041 = vmul.f32 %v1947, 0.1
        %v3042 = vmul.f32 %v1950, 0.1
        %v3043 = vmul.f32 %v1955, 0.1
        %v3044 = vmul.f32 %v1958, 0.1
        %v3045 = vmul.f32 %v1963, 0.1
        %v3046 = vmul.f32 %v1966, 0.1
        %v3047 = vmul.f32 %v1971, 0.1
        %v3048 = vmul.f32 %v1974, 0.1
        %v3049 = vmul.f32 %v1979, 0.1
        %v3050 = vmul.f32 %v1982, 0.1
        %v3051 = vmul.f32 %v1987, 0.1
        %v3052 = vmul.f32 %v1990, 0.1
        %v3053 = vmul.f32 %v1995, 0.1
        %v3054 = vmul.f32 %v1998, 0.1
        %v3055 = vmul.f32 %v2003, 0.1
        %v3056 = vmul.f32 %v2006, 0.1
        %v3057 = vmul.f32 %v2011, 0.1
        %v3058 = vmul.f32 %v2014, 0.1
        %v3059 = vmul.f32 %v2019, 0.1
        %v3060 = vmul.f32 %v2022, 0.1
        %v3061 = vmul.f32 %v2027, 0.1
        %v3062 = vmul.f32 %v2030, 0.1
        %v3063 = vmul.f32 %v2035, 0.1
        %v3064 = vmul.f32 %v2038, 0.1
        %v3065 = vmul.f32 %v2043, 0.1
        %v3066 = vmul.f32 %v2046, 0.1
        %v3067 = vmul.f32 %v2051, 0.1
        %v3068 = vmul.f32 %v2054, 0.1
        %v3069 = vmul.f32 %v2059, 0.1
        %v3070 = vmul.f32 %v2062, 0.1
        %v3071 = vmul.f32 %v2067, 0.1
        %v3072 = vmul.f32 %v2070, 0.1
        %v3073 = vmul.f32 %v2075, 0.1
        %v3074 = vmul.f32 %v2078, 0.1
        %v3075 = vmul.f32 %v2083, 0.1
        %v3076 = vmul.f32 %v2086, 0.1
        %v3077 = vmul.f32 %v2091, 0.1
        %v3078 = vmul.f32 %v2094, 0.1
        %v3079 = vmul.f32 %v2099, 0.1
        %v3080 = vmul.f32 %v2102, 0.1
        %v3081 = vmul.f32 %v2107, 0.1
        %v3082 = vmul.f32 %v2110, 0.1
        %v3083 = vmul.f32 %v2115, 0.1
        %v3084 = vmul.f32 %v2118, 0.1
        %v3085 = vmul.f32 %v2123, 0.1
        %v3086 = vmul.f32 %v2126, 0.1
        %v3087 = vmul.f32 %v2131, 0.1
        %v3088 = vmul.f32 %v2134, 0.1
        %v3089 = vmul.f32 %v2139, 0.1
        %v3090 = vmul.f32 %v2142, 0.1
        %v3091 = vmul.f32 %v2147, 0.1
        %v3092 = vmul.f32 %v2150, 0.1
        %v3093 = vmul.f32 %v2155, 0.1
        %v3094 = vmul.f32 %v2158, 0.1
        %v3095 = vmul.f32 %v2163, 0.1
        %v3096 = vmul.f32 %v2166, 0.1
        %v3097 = vmul.f32 %v2171, 0.1
        %v3098 = vmul.f32 %v2174, 0.1
        %v3099 = vmul.f32 %v2179, 0.1
        %v3100 = vmul.f32 %v2182, 0.1
        %v3101 = vmul.f32 %v2187, 0.1
        %v3102 = vmul.f32 %v2190, 0.1
        %v3103 = vmul.f32 %v2195, 0.1
        %v3104 = vmul.f32 %v2198, 0.1
        %v3105 = vmul.f32 %v2203, 0.1
        %v3106 = vmul.f32 %v2206, 0.1
        %v3107 = vmul.f32 %v2211, 0.1
        %v3108 = vmul.f32 %v2214, 0.1
        %v3109 = vmul.f32 %v2219, 0.1
        %v3110 = vmul.f32 %v2222, 0.1
        %v3111 = vmul.f32 %v2227, 0.1
        %v3112 = vmul.f32 %v2230, 0.1
        %v3113 = vmul.f32 %v2235, 0.1
        %v3114 = vmul.f32 %v2238, 0.1
        %v3115 = vmul.f32 %v2243, 0.1
        %v3116 = vmul.f32 %v2246, 0.1
        %v3117 = vmul.f32 %v2251, 0.1
        %v3118 = vmul.f32 %v2254, 0.1
        %v3119 = vmul.f32 %v2259, 0.1
        %v3120 = vmul.f32 %v2262, 0.1
        %v3121 = vmul.f32 %v2267, 0.1
        %v3122 = vmul.f32 %v2270, 0.1
        %v3123 = vmul.f32 %v2275, 0.1
        %v3124 = vmul.f32 %v2278, 0.1
        %v3125 = vmul.f32 %v2283, 0.1
        %v3126 = vmul.f32 %v2286, 0.1
        %v3127 = vmul.f32 %v2291, 0.1
        %v3128 = vmul.f32 %v2294, 0.1
        %v3129 = vmul.f32 %v2299, 0.1
        %v3130 = vmul.f32 %v2302, 0.1
        %v3131 = vmul.f32 %v2307, 0.1
        %v3132 = vmul.f32 %v2310, 0.1
        %v3133 = vmul.f32 %v2315, 0.1
        %v3134 = vmul.f32 %v2318, 0.1
        %v3135 = vmul.f32 %v2323, 0.1
        %v3136 = vmul.f32 %v2326, 0.1
        %v3137 = vmul.f32 %v2331, 0.1
        %v3138 = vmul.f32 %v2334, 0.1
        %v3139 = vmul.f32 %v2339, 0.1
        %v3140 = vmul.f32 %v2342, 0.1
        %v3141 = vmul.f32 %v2347, 0.1
        %v3142 = vmul.f32 %v2350, 0.1
        %v3143 = vmul.f32 %v2355, 0.1
        %v3144 = vmul.f32 %v2358, 0.1
        %v3145 = vmul.f32 %v2363, 0.1
        %v3146 = vmul.f32 %v2366, 0.1
        %v3147 = vmul.f32 %v2371, 0.1
        %v3148 = vmul.f32 %v2374, 0.1
        %v3149 = vmul.f32 %v2379, 0.1
        %v3150 = vmul.f32 %v2382, 0.1
        %v3151 = vmul.f32 %v2387, 0.1
        %v3152 = vmul.f32 %v2390, 0.1
        %v3153 = vmul.f32 %v2395, 0.1
        %v3154 = vmul.f32 %v2398, 0.1
        %v3155 = vmul.f32 %v2403, 0.1
        %v3156 = vmul.f32 %v2406, 0.1
        %v3157 = vmul.f32 %v2411, 0.1
        %v3158 = vmul.f32 %v2414, 0.1
        %v3159 = vmul.f32 %v2419, 0.1
        %v3160 = vmul.f32 %v2422, 0.1
        %v3161 = vmul.f32 %v2427, 0.1
        %v3162 = vmul.f32 %v2430, 0.1
        %v3163 = vmul.f32 %v2435, 0.1
        %v3164 = vmul.f32 %v2438, 0.1
        %v3165 = vmul.f32 %v2443, 0.1
        %v3166 = vmul.f32 %v2446, 0.1
        %v3167 = vmul.f32 %v2451, 0.1
        %v3168 = vmul.f32 %v2454, 0.1
        %v3169 = vmul.f32 %v2459, 0.1
        %v3170 = vmul.f32 %v2462, 0.1
        %v3171 = vmul.f32 %v2467, 0.1
        %v3172 = vmul.f32 %v2470, 0.1
        %v3173 = vmul.f32 %v2475, 0.1
        %v3174 = vmul.f32 %v2478, 0.1
        %v3175 = vmul.f32 %v2483, 0.1
        %v3176 = vmul.f32 %v2486, 0.1
        %v3177 = vmul.f32 %v2491, 0.1
        %v3178 = vmul.f32 %v2494, 0.1
        %v3179 = vmul.f32 %v2499, 0.1
        %v3180 = vmul.f32 %v2502, 0.1
        %v3181 = vmul.f32 %v2507, 0.1
        %v3182 = vmul.f32 %v2510, 0.1
        %v3183 = vmul.f32 %v2515, 0.1
        %v3184 = vmul.f32 %v2518, 0.1
        %v3185 = vmul.f32 %v2523, 0.1
        %v3186 = vmul.f32 %v2526, 0.1
        %v3187 = vmul.f32 %v2531, 0.1
        %v3188 = vmul.f32 %v2534, 0.1
        %v3189 = vmul.f32 %v2539, 0.1
        %v3190 = vmul.f32 %v2542, 0.1
        %v3191 = vmul.f32 %v2547, 0.1
        %v3192 = vmul.f32 %v2550, 0.1
        %v3193 = vmul.f32 %v2555, 0.1
        %v3194 = vmul.f32 %v2558, 0.1
        %v3195 = vmul.f32 %v2563, 0.1
        %v3196 = vmul.f32 %v2566, 0.1
        %v3197 = vmul.f32 %v2571, 0.1
        %v3198 = vmul.f32 %v2574, 0.1
        %v3199 = vmul.f32 %v2579, 0.1
        %v3200 = vmul.f32 %v2582, 0.1
        %v3201 = vmul.f32 %v2587, 0.1
        %v3202 = vmul.f32 %v2590, 0.1
        %v3203 = vmul.f32 %v2595, 0.1
        %v3204 = vmul.f32 %v2598, 0.1
        %v3205 = vmul.f32 %v2603, 0.1
        %v3206 = vmul.f32 %v2606, 0.1
        %v3207 = vmul.f32 %v2611, 0.1
        %v3208 = vmul.f32 %v2614, 0.1
        %v3209 = vmul.f32 %v2619, 0.1
        %v3210 = vmul.f32 %v2622, 0.1
        %v3211 = vmul.f32 %v2627, 0.1
        %v3212 = vmul.f32 %v2630, 0.1
        %v3213 = vmul.f32 %v2635, 0.1
        %v3214 = vmul.f32 %v2638, 0.1
        %v3215 = vmul.f32 %v2643, 0.1
        %v3216 = vmul.f32 %v2646, 0.1
        %v3217 = vmul.f32 %v2651, 0.1
        %v3218 = vmul.f32 %v2654, 0.1
        %v3219 = vmul.f32 %v2659, 0.1
        %v3220 = vmul.f32 %v2662, 0.1
        %v3221 = vmul.f32 %v2667, 0.1
        %v3222 = vmul.f32 %v2670, 0.1
        %v3223 = vmul.f32 %v2675, 0.1
        %v3224 = vmul.f32 %v2678, 0.1
        %v3225 = vmul.f32 %v2683, 0.1
        %v3226 = vmul.f32 %v2686, 0.1
        %v3227 = vmul.f32 %v2691, 0.1
        %v3228 = vmul.f32 %v2694, 0.1
        %v3229 = vmul.f32 %v2699, 0.1
        %v3230 = vmul.f32 %v2702, 0.1
        %v3231 = vmul.f32 %v2707, 0.1
        %v3232 = vmul.f32 %v2710, 0.1
        %v3233 = vmul.f32 %v2715, 0.1
        %v3234 = vmul.f32 %v2718, 0.1
        %v3235 = vmul.f32 %v2723, 0.1
        %v3236 = vmul.f32 %v2726, 0.1
        %v3237 = vmul.f32 %v2731, 0.1
        %v3238 = vmul.f32 %v2734, 0.1
        %v3239 = vmul.f32 %v2739, 0.1
        %v3240 = vmul.f32 %v2742, 0.1
        %v3241 = vmul.f32 %v2747, 0.1
        %v3242 = vmul.f32 %v2750, 0.1
        %v3243 = vmul.f32 %v2755, 0.1
        %v3244 = vmul.f32 %v2758, 0.1
        %v3245 = vmul.f32 %v2763, 0.1
        %v3246 = vmul.f32 %v2766, 0.1
        %v3247 = vmul.f32 %v2771, 0.1
        %v3248 = vmul.f32 %v2774, 0.1
        %v3249 = vmul.f32 %v2779, 0.1
        %v3250 = vmul.f32 %v2782, 0.1
        %v3251 = vmul.f32 %v2787, 0.1
        %v3252 = vmul.f32 %v2790, 0.1
        %v3253 = vmul.f32 %v2795, 0.1
        %v3254 = vmul.f32 %v2798, 0.1
        %v3255 = vmul.f32 %v2803, 0.1
        %v3256 = vmul.f32 %v2806, 0.1
        %v3257 = vsel %vm2809, %v1915, %v3033
        %v3258 = vsel %vm2810, %v1918, %v3034
        %v3259 = vsel %vm2811, %v1923, %v3035
        %v3260 = vsel %vm2812, %v1926, %v3036
        %v3261 = vsel %vm2813, %v1931, %v3037
        %v3262 = vsel %vm2814, %v1934, %v3038
        %v3263 = vsel %vm2815, %v1939, %v3039
        %v3264 = vsel %vm2816, %v1942, %v3040
        %v3265 = vsel %vm2817, %v1947, %v3041
        %v3266 = vsel %vm2818, %v1950, %v3042
        %v3267 = vsel %vm2819, %v1955, %v3043
        %v3268 = vsel %vm2820, %v1958, %v3044
        %v3269 = vsel %vm2821, %v1963, %v3045
        %v3270 = vsel %vm2822, %v1966, %v3046
        %v3271 = vsel %vm2823, %v1971, %v3047
        %v3272 = vsel %vm2824, %v1974, %v3048
        %v3273 = vsel %vm2825, %v1979, %v3049
        %v3274 = vsel %vm2826, %v1982, %v3050
        %v3275 = vsel %vm2827, %v1987, %v3051
        %v3276 = vsel %vm2828, %v1990, %v3052
        %v3277 = vsel %vm2829, %v1995, %v3053
        %v3278 = vsel %vm2830, %v1998, %v3054
        %v3279 = vsel %vm2831, %v2003, %v3055
        %v3280 = vsel %vm2832, %v2006, %v3056
        %v3281 = vsel %vm2833, %v2011, %v3057
        %v3282 = vsel %vm2834, %v2014, %v3058
        %v3283 = vsel %vm2835, %v2019, %v3059
        %v3284 = vsel %vm2836, %v2022, %v3060
        %v3285 = vsel %vm2837, %v2027, %v3061
        %v3286 = vsel %vm2838, %v2030, %v3062
        %v3287 = vsel %vm2839, %v2035, %v3063
        %v3288 = vsel %vm2840, %v2038, %v3064
        %v3289 = vsel %vm2841, %v2043, %v3065
        %v3290 = vsel %vm2842, %v2046, %v3066
        %v3291 = vsel %vm2843, %v2051, %v3067
        %v3292 = vsel %vm2844, %v2054, %v3068
        %v3293 = vsel %vm2845, %v2059, %v3069
        %v3294 = vsel %vm2846, %v2062, %v3070
        %v3295 = vsel %vm2847, %v2067, %v3071
        %v3296 = vsel %vm2848, %v2070, %v3072
        %v3297 = vsel %vm2849, %v2075, %v3073
        %v3298 = vsel %vm2850, %v2078, %v3074
        %v3299 = vsel %vm2851, %v2083, %v3075
        %v3300 = vsel %vm2852, %v2086, %v3076
        %v3301 = vsel %vm2853, %v2091, %v3077
        %v3302 = vsel %vm2854, %v2094, %v3078
        %v3303 = vsel %vm2855, %v2099, %v3079
        %v3304 = vsel %vm2856, %v2102, %v3080
        %v3305 = vsel %vm2857, %v2107, %v3081
        %v3306 = vsel %vm2858, %v2110, %v3082
        %v3307 = vsel %vm2859, %v2115, %v3083
        %v3308 = vsel %vm2860, %v2118, %v3084
        %v3309 = vsel %vm2861, %v2123, %v3085
        %v3310 = vsel %vm2862, %v2126, %v3086
        %v3311 = vsel %vm2863, %v2131, %v3087
        %v3312 = vsel %vm2864, %v2134, %v3088
        %v3313 = vsel %vm2865, %v2139, %v3089
        %v3314 = vsel %vm2866, %v2142, %v3090
        %v3315 = vsel %vm2867, %v2147, %v3091
        %v3316 = vsel %vm2868, %v2150, %v3092
        %v3317 = vsel %vm2869, %v2155, %v3093
        %v3318 = vsel %vm2870, %v2158, %v3094
        %v3319 = vsel %vm2871, %v2163, %v3095
        %v3320 = vsel %vm2872, %v2166, %v3096
        %v3321 = vsel %vm2873, %v2171, %v3097
        %v3322 = vsel %vm2874, %v2174, %v3098
        %v3323 = vsel %vm2875, %v2179, %v3099
        %v3324 = vsel %vm2876, %v2182, %v3100
        %v3325 = vsel %vm2877, %v2187, %v3101
        %v3326 = vsel %vm2878, %v2190, %v3102
        %v3327 = vsel %vm2879, %v2195, %v3103
        %v3328 = vsel %vm2880, %v2198, %v3104
        %v3329 = vsel %vm2881, %v2203, %v3105
        %v3330 = vsel %vm2882, %v2206, %v3106
        %v3331 = vsel %vm2883, %v2211, %v3107
        %v3332 = vsel %vm2884, %v2214, %v3108
        %v3333 = vsel %vm2885, %v2219, %v3109
        %v3334 = vsel %vm2886, %v2222, %v3110
        %v3335 = vsel %vm2887, %v2227, %v3111
        %v3336 = vsel %vm2888, %v2230, %v3112
        %v3337 = vsel %vm2889, %v2235, %v3113
        %v3338 = vsel %vm2890, %v2238, %v3114
        %v3339 = vsel %vm2891, %v2243, %v3115
        %v3340 = vsel %vm2892, %v2246, %v3116
        %v3341 = vsel %vm2893, %v2251, %v3117
        %v3342 = vsel %vm2894, %v2254, %v3118
        %v3343 = vsel %vm2895, %v2259, %v3119
        %v3344 = vsel %vm2896, %v2262, %v3120
        %v3345 = vsel %vm2897, %v2267, %v3121
        %v3346 = vsel %vm2898, %v2270, %v3122
        %v3347 = vsel %vm2899, %v2275, %v3123
        %v3348 = vsel %vm2900, %v2278, %v3124
        %v3349 = vsel %vm2901, %v2283, %v3125
        %v3350 = vsel %vm2902, %v2286, %v3126
        %v3351 = vsel %vm2903, %v2291, %v3127
        %v3352 = vsel %vm2904, %v2294, %v3128
        %v3353 = vsel %vm2905, %v2299, %v3129
        %v3354 = vsel %vm2906, %v2302, %v3130
        %v3355 = vsel %vm2907, %v2307, %v3131
        %v3356 = vsel %vm2908, %v2310, %v3132
        %v3357 = vsel %vm2909, %v2315, %v3133
        %v3358 = vsel %vm2910, %v2318, %v3134
        %v3359 = vsel %vm2911, %v2323, %v3135
        %v3360 = vsel %vm2912, %v2326, %v3136
        %v3361 = vsel %vm2913, %v2331, %v3137
        %v3362 = vsel %vm2914, %v2334, %v3138
        %v3363 = vsel %vm2915, %v2339, %v3139
        %v3364 = vsel %vm2916, %v2342, %v3140
        %v3365 = vsel %vm2917, %v2347, %v3141
        %v3366 = vsel %vm2918, %v2350, %v3142
        %v3367 = vsel %vm2919, %v2355, %v3143
        %v3368 = vsel %vm2920, %v2358, %v3144
        %v3369 = vsel %vm2921, %v2363, %v3145
        %v3370 = vsel %vm2922, %v2366, %v3146
        %v3371 = vsel %vm2923, %v2371, %v3147
        %v3372 = vsel %vm2924, %v2374, %v3148
        %v3373 = vsel %vm2925, %v2379, %v3149
        %v3374 = vsel %vm2926, %v2382, %v3150
        %v3375 = vsel %vm2927, %v2387, %v3151
        %v3376 = vsel %vm2928, %v2390, %v3152
        %v3377 = vsel %vm2929, %v2395, %v3153
        %v3378 = vsel %vm2930, %v2398, %v3154
        %v3379 = vsel %vm2931, %v2403, %v3155
        %v3380 = vsel %vm2932, %v2406, %v3156
        %v3381 = vsel %vm2933, %v2411, %v3157
        %v3382 = vsel %vm2934, %v2414, %v3158
        %v3383 = vsel %vm2935, %v2419, %v3159
        %v3384 = vsel %vm2936, %v2422, %v3160
        %v3385 = vsel %vm2937, %v2427, %v3161
        %v3386 = vsel %vm2938, %v2430, %v3162
        %v3387 = vsel %vm2939, %v2435, %v3163
        %v3388 = vsel %vm2940, %v2438, %v3164
        %v3389 = vsel %vm2941, %v2443, %v3165
        %v3390 = vsel %vm2942, %v2446, %v3166
        %v3391 = vsel %vm2943, %v2451, %v3167
        %v3392 = vsel %vm2944, %v2454, %v3168
        %v3393 = vsel %vm2945, %v2459, %v3169
        %v3394 = vsel %vm2946, %v2462, %v3170
        %v3395 = vsel %vm2947, %v2467, %v3171
        %v3396 = vsel %vm2948, %v2470, %v3172
        %v3397 = vsel %vm2949, %v2475, %v3173
        %v3398 = vsel %vm2950, %v2478, %v3174
        %v3399 = vsel %vm2951, %v2483, %v3175
        %v3400 = vsel %vm2952, %v2486, %v3176
        %v3401 = vsel %vm2953, %v2491, %v3177
        %v3402 = vsel %vm2954, %v2494, %v3178
        %v3403 = vsel %vm2955, %v2499, %v3179
        %v3404 = vsel %vm2956, %v2502, %v3180
        %v3405 = vsel %vm2957, %v2507, %v3181
        %v3406 = vsel %vm2958, %v2510, %v3182
        %v3407 = vsel %vm2959, %v2515, %v3183
        %v3408 = vsel %vm2960, %v2518, %v3184
        %v3409 = vsel %vm2961, %v2523, %v3185
        %v3410 = vsel %vm2962, %v2526, %v3186
        %v3411 = vsel %vm2963, %v2531, %v3187
        %v3412 = vsel %vm2964, %v2534, %v3188
        %v3413 = vsel %vm2965, %v2539, %v3189
        %v3414 = vsel %vm2966, %v2542, %v3190
        %v3415 = vsel %vm2967, %v2547, %v3191
        %v3416 = vsel %vm2968, %v2550, %v3192
        %v3417 = vsel %vm2969, %v2555, %v3193
        %v3418 = vsel %vm2970, %v2558, %v3194
        %v3419 = vsel %vm2971, %v2563, %v3195
        %v3420 = vsel %vm2972, %v2566, %v3196
        %v3421 = vsel %vm2973, %v2571, %v3197
        %v3422 = vsel %vm2974, %v2574, %v3198
        %v3423 = vsel %vm2975, %v2579, %v3199
        %v3424 = vsel %vm2976, %v2582, %v3200
        %v3425 = vsel %vm2977, %v2587, %v3201
        %v3426 = vsel %vm2978, %v2590, %v3202
        %v3427 = vsel %vm2979, %v2595, %v3203
        %v3428 = vsel %vm2980, %v2598, %v3204
        %v3429 = vsel %vm2981, %v2603, %v3205
        %v3430 = vsel %vm2982, %v2606, %v3206
        %v3431 = vsel %vm2983, %v2611, %v3207
        %v3432 = vsel %vm2984, %v2614, %v3208
        %v3433 = vsel %vm2985, %v2619, %v3209
        %v3434 = vsel %vm2986, %v2622, %v3210
        %v3435 = vsel %vm2987, %v2627, %v3211
        %v3436 = vsel %vm2988, %v2630, %v3212
        %v3437 = vsel %vm2989, %v2635, %v3213
        %v3438 = vsel %vm2990, %v2638, %v3214
        %v3439 = vsel %vm2991, %v2643, %v3215
        %v3440 = vsel %vm2992, %v2646, %v3216
        %v3441 = vsel %vm2993, %v2651, %v3217
        %v3442 = vsel %vm2994, %v2654, %v3218
        %v3443 = vsel %vm2995, %v2659, %v3219
        %v3444 = vsel %vm2996, %v2662, %v3220
        %v3445 = vsel %vm2997, %v2667, %v3221
        %v3446 = vsel %vm2998, %v2670, %v3222
        %v3447 = vsel %vm2999, %v2675, %v3223
        %v3448 = vsel %vm3000, %v2678, %v3224
        %v3449 = vsel %vm3001, %v2683, %v3225
        %v3450 = vsel %vm3002, %v2686, %v3226
        %v3451 = vsel %vm3003, %v2691, %v3227
        %v3452 = vsel %vm3004, %v2694, %v3228
        %v3453 = vsel %vm3005, %v2699, %v3229
        %v3454 = vsel %vm3006, %v2702, %v3230
        %v3455 = vsel %vm3007, %v2707, %v3231
        %v3456 = vsel %vm3008, %v2710, %v3232
        %v3457 = vsel %vm3009, %v2715, %v3233
        %v3458 = vsel %vm3010, %v2718, %v3234
        %v3459 = vsel %vm3011, %v2723, %v3235
        %v3460 = vsel %vm3012, %v2726, %v3236
        %v3461 = vsel %vm3013, %v2731, %v3237
        %v3462 = vsel %vm3014, %v2734, %v3238
        %v3463 = vsel %vm3015, %v2739, %v3239
        %v3464 = vsel %vm3016, %v2742, %v3240
        %v3465 = vsel %vm3017, %v2747, %v3241
        %v3466 = vsel %vm3018, %v2750, %v3242
        %v3467 = vsel %vm3019, %v2755, %v3243
        %v3468 = vsel %vm3020, %v2758, %v3244
        %v3469 = vsel %vm3021, %v2763, %v3245
        %v3470 = vsel %vm3022, %v2766, %v3246
        %v3471 = vsel %vm3023, %v2771, %v3247
        %v3472 = vsel %vm3024, %v2774, %v3248
        %v3473 = vsel %vm3025, %v2779, %v3249
        %v3474 = vsel %vm3026, %v2782, %v3250
        %v3475 = vsel %vm3027, %v2787, %v3251
        %v3476 = vsel %vm3028, %v2790, %v3252
        %v3477 = vsel %vm3029, %v2795, %v3253
        %v3478 = vsel %vm3030, %v2798, %v3254
        %v3479 = vsel %vm3031, %v2803, %v3255
        %v3480 = vsel %vm3032, %v2806, %v3256
        %v3481 = vpack.c.bf16 %v3258, %v3257
        %v3482 = vpack.c.bf16 %v3260, %v3259
        %v3483 = vpack.c.bf16 %v3262, %v3261
        %v3484 = vpack.c.bf16 %v3264, %v3263
        %v3485 = vpack.c.bf16 %v3266, %v3265
        %v3486 = vpack.c.bf16 %v3268, %v3267
        %v3487 = vpack.c.bf16 %v3270, %v3269
        %v3488 = vpack.c.bf16 %v3272, %v3271
        %v3489 = vpack.c.bf16 %v3274, %v3273
        %v3490 = vpack.c.bf16 %v3276, %v3275
        %v3491 = vpack.c.bf16 %v3278, %v3277
        %v3492 = vpack.c.bf16 %v3280, %v3279
        %v3493 = vpack.c.bf16 %v3282, %v3281
        %v3494 = vpack.c.bf16 %v3284, %v3283
        %v3495 = vpack.c.bf16 %v3286, %v3285
        %v3496 = vpack.c.bf16 %v3288, %v3287
        %v3497 = vpack.c.bf16 %v3290, %v3289
        %v3498 = vpack.c.bf16 %v3292, %v3291
        %v3499 = vpack.c.bf16 %v3294, %v3293
        %v3500 = vpack.c.bf16 %v3296, %v3295
        %v3501 = vpack.c.bf16 %v3298, %v3297
        %v3502 = vpack.c.bf16 %v3300, %v3299
        %v3503 = vpack.c.bf16 %v3302, %v3301
        %v3504 = vpack.c.bf16 %v3304, %v3303
        %v3505 = vpack.c.bf16 %v3306, %v3305
        %v3506 = vpack.c.bf16 %v3308, %v3307
        %v3507 = vpack.c.bf16 %v3310, %v3309
        %v3508 = vpack.c.bf16 %v3312, %v3311
        %v3509 = vpack.c.bf16 %v3314, %v3313
        %v3510 = vpack.c.bf16 %v3316, %v3315
        %v3511 = vpack.c.bf16 %v3318, %v3317
        %v3512 = vpack.c.bf16 %v3320, %v3319
        %v3513 = vpack.c.bf16 %v3322, %v3321
        %v3514 = vpack.c.bf16 %v3324, %v3323
        %v3515 = vpack.c.bf16 %v3326, %v3325
        %v3516 = vpack.c.bf16 %v3328, %v3327
        %v3517 = vpack.c.bf16 %v3330, %v3329
        %v3518 = vpack.c.bf16 %v3332, %v3331
        %v3519 = vpack.c.bf16 %v3334, %v3333
        %v3520 = vpack.c.bf16 %v3336, %v3335
        %v3521 = vpack.c.bf16 %v3338, %v3337
        %v3522 = vpack.c.bf16 %v3340, %v3339
        %v3523 = vpack.c.bf16 %v3342, %v3341
        %v3524 = vpack.c.bf16 %v3344, %v3343
        %v3525 = vpack.c.bf16 %v3346, %v3345
        %v3526 = vpack.c.bf16 %v3348, %v3347
        %v3527 = vpack.c.bf16 %v3350, %v3349
        %v3528 = vpack.c.bf16 %v3352, %v3351
        %v3529 = vpack.c.bf16 %v3354, %v3353
        %v3530 = vpack.c.bf16 %v3356, %v3355
        %v3531 = vpack.c.bf16 %v3358, %v3357
        %v3532 = vpack.c.bf16 %v3360, %v3359
        %v3533 = vpack.c.bf16 %v3362, %v3361
        %v3534 = vpack.c.bf16 %v3364, %v3363
        %v3535 = vpack.c.bf16 %v3366, %v3365
        %v3536 = vpack.c.bf16 %v3368, %v3367
        %v3537 = vpack.c.bf16 %v3370, %v3369
        %v3538 = vpack.c.bf16 %v3372, %v3371
        %v3539 = vpack.c.bf16 %v3374, %v3373
        %v3540 = vpack.c.bf16 %v3376, %v3375
        %v3541 = vpack.c.bf16 %v3378, %v3377
        %v3542 = vpack.c.bf16 %v3380, %v3379
        %v3543 = vpack.c.bf16 %v3382, %v3381
        %v3544 = vpack.c.bf16 %v3384, %v3383
        %v3545 = vpack.c.bf16 %v3386, %v3385
        %v3546 = vpack.c.bf16 %v3388, %v3387
        %v3547 = vpack.c.bf16 %v3390, %v3389
        %v3548 = vpack.c.bf16 %v3392, %v3391
        %v3549 = vpack.c.bf16 %v3394, %v3393
        %v3550 = vpack.c.bf16 %v3396, %v3395
        %v3551 = vpack.c.bf16 %v3398, %v3397
        %v3552 = vpack.c.bf16 %v3400, %v3399
        %v3553 = vpack.c.bf16 %v3402, %v3401
        %v3554 = vpack.c.bf16 %v3404, %v3403
        %v3555 = vpack.c.bf16 %v3406, %v3405
        %v3556 = vpack.c.bf16 %v3408, %v3407
        %v3557 = vpack.c.bf16 %v3410, %v3409
        %v3558 = vpack.c.bf16 %v3412, %v3411
        %v3559 = vpack.c.bf16 %v3414, %v3413
        %v3560 = vpack.c.bf16 %v3416, %v3415
        %v3561 = vpack.c.bf16 %v3418, %v3417
        %v3562 = vpack.c.bf16 %v3420, %v3419
        %v3563 = vpack.c.bf16 %v3422, %v3421
        %v3564 = vpack.c.bf16 %v3424, %v3423
        %v3565 = vpack.c.bf16 %v3426, %v3425
        %v3566 = vpack.c.bf16 %v3428, %v3427
        %v3567 = vpack.c.bf16 %v3430, %v3429
        %v3568 = vpack.c.bf16 %v3432, %v3431
        %v3569 = vpack.c.bf16 %v3434, %v3433
        %v3570 = vpack.c.bf16 %v3436, %v3435
        %v3571 = vpack.c.bf16 %v3438, %v3437
        %v3572 = vpack.c.bf16 %v3440, %v3439
        %v3573 = vpack.c.bf16 %v3442, %v3441
        %v3574 = vpack.c.bf16 %v3444, %v3443
        %v3575 = vpack.c.bf16 %v3446, %v3445
        %v3576 = vpack.c.bf16 %v3448, %v3447
        %v3577 = vpack.c.bf16 %v3450, %v3449
        %v3578 = vpack.c.bf16 %v3452, %v3451
        %v3579 = vpack.c.bf16 %v3454, %v3453
        %v3580 = vpack.c.bf16 %v3456, %v3455
        %v3581 = vpack.c.bf16 %v3458, %v3457
        %v3582 = vpack.c.bf16 %v3460, %v3459
        %v3583 = vpack.c.bf16 %v3462, %v3461
        %v3584 = vpack.c.bf16 %v3464, %v3463
        %v3585 = vpack.c.bf16 %v3466, %v3465
        %v3586 = vpack.c.bf16 %v3468, %v3467
        %v3587 = vpack.c.bf16 %v3470, %v3469
        %v3588 = vpack.c.bf16 %v3472, %v3471
        %v3589 = vpack.c.bf16 %v3474, %v3473
        %v3590 = vpack.c.bf16 %v3476, %v3475
        %v3591 = vpack.c.bf16 %v3478, %v3477
        %v3592 = vpack.c.bf16 %v3480, %v3479
        %v3705 = vunpack.c.l.b16 %v3481
        %v3706 = vunpack.c.h.b16 %v3481
        %v3707 = vunpack.c.l.b16 %v3482
        %v3708 = vunpack.c.h.b16 %v3482
        %v3709 = vunpack.c.l.b16 %v3483
        %v3710 = vunpack.c.h.b16 %v3483
        %v3711 = vunpack.c.l.b16 %v3484
        %v3712 = vunpack.c.h.b16 %v3484
        %v3713 = vunpack.c.l.b16 %v3485
        %v3714 = vunpack.c.h.b16 %v3485
        %v3715 = vunpack.c.l.b16 %v3486
        %v3716 = vunpack.c.h.b16 %v3486
        %v3717 = vunpack.c.l.b16 %v3487
        %v3718 = vunpack.c.h.b16 %v3487
        %v3719 = vunpack.c.l.b16 %v3488
        %v3720 = vunpack.c.h.b16 %v3488
        %v3721 = vunpack.c.l.b16 %v3489
        %v3722 = vunpack.c.h.b16 %v3489
        %v3723 = vunpack.c.l.b16 %v3490
        %v3724 = vunpack.c.h.b16 %v3490
        %v3725 = vunpack.c.l.b16 %v3491
        %v3726 = vunpack.c.h.b16 %v3491
        %v3727 = vunpack.c.l.b16 %v3492
        %v3728 = vunpack.c.h.b16 %v3492
        %v3729 = vunpack.c.l.b16 %v3493
        %v3730 = vunpack.c.h.b16 %v3493
        %v3731 = vunpack.c.l.b16 %v3494
        %v3732 = vunpack.c.h.b16 %v3494
        %v3733 = vunpack.c.l.b16 %v3495
        %v3734 = vunpack.c.h.b16 %v3495
        %v3735 = vunpack.c.l.b16 %v3496
        %v3736 = vunpack.c.h.b16 %v3496
        %v3737 = vunpack.c.l.b16 %v3497
        %v3738 = vunpack.c.h.b16 %v3497
        %v3739 = vunpack.c.l.b16 %v3498
        %v3740 = vunpack.c.h.b16 %v3498
        %v3741 = vunpack.c.l.b16 %v3499
        %v3742 = vunpack.c.h.b16 %v3499
        %v3743 = vunpack.c.l.b16 %v3500
        %v3744 = vunpack.c.h.b16 %v3500
        %v3745 = vunpack.c.l.b16 %v3501
        %v3746 = vunpack.c.h.b16 %v3501
        %v3747 = vunpack.c.l.b16 %v3502
        %v3748 = vunpack.c.h.b16 %v3502
        %v3749 = vunpack.c.l.b16 %v3503
        %v3750 = vunpack.c.h.b16 %v3503
        %v3751 = vunpack.c.l.b16 %v3504
        %v3752 = vunpack.c.h.b16 %v3504
        %v3753 = vunpack.c.l.b16 %v3505
        %v3754 = vunpack.c.h.b16 %v3505
        %v3755 = vunpack.c.l.b16 %v3506
        %v3756 = vunpack.c.h.b16 %v3506
        %v3757 = vunpack.c.l.b16 %v3507
        %v3758 = vunpack.c.h.b16 %v3507
        %v3759 = vunpack.c.l.b16 %v3508
        %v3760 = vunpack.c.h.b16 %v3508
        %v3761 = vunpack.c.l.b16 %v3509
        %v3762 = vunpack.c.h.b16 %v3509
        %v3763 = vunpack.c.l.b16 %v3510
        %v3764 = vunpack.c.h.b16 %v3510
        %v3765 = vunpack.c.l.b16 %v3511
        %v3766 = vunpack.c.h.b16 %v3511
        %v3767 = vunpack.c.l.b16 %v3512
        %v3768 = vunpack.c.h.b16 %v3512
        %v3769 = vunpack.c.l.b16 %v3513
        %v3770 = vunpack.c.h.b16 %v3513
        %v3771 = vunpack.c.l.b16 %v3514
        %v3772 = vunpack.c.h.b16 %v3514
        %v3773 = vunpack.c.l.b16 %v3515
        %v3774 = vunpack.c.h.b16 %v3515
        %v3775 = vunpack.c.l.b16 %v3516
        %v3776 = vunpack.c.h.b16 %v3516
        %v3777 = vunpack.c.l.b16 %v3517
        %v3778 = vunpack.c.h.b16 %v3517
        %v3779 = vunpack.c.l.b16 %v3518
        %v3780 = vunpack.c.h.b16 %v3518
        %v3781 = vunpack.c.l.b16 %v3519
        %v3782 = vunpack.c.h.b16 %v3519
        %v3783 = vunpack.c.l.b16 %v3520
        %v3784 = vunpack.c.h.b16 %v3520
        %v3785 = vunpack.c.l.b16 %v3521
        %v3786 = vunpack.c.h.b16 %v3521
        %v3787 = vunpack.c.l.b16 %v3522
        %v3788 = vunpack.c.h.b16 %v3522
        %v3789 = vunpack.c.l.b16 %v3523
        %v3790 = vunpack.c.h.b16 %v3523
        %v3791 = vunpack.c.l.b16 %v3524
        %v3792 = vunpack.c.h.b16 %v3524
        %v3793 = vunpack.c.l.b16 %v3525
        %v3794 = vunpack.c.h.b16 %v3525
        %v3795 = vunpack.c.l.b16 %v3526
        %v3796 = vunpack.c.h.b16 %v3526
        %v3797 = vunpack.c.l.b16 %v3527
        %v3798 = vunpack.c.h.b16 %v3527
        %v3799 = vunpack.c.l.b16 %v3528
        %v3800 = vunpack.c.h.b16 %v3528
        %v3801 = vunpack.c.l.b16 %v3529
        %v3802 = vunpack.c.h.b16 %v3529
        %v3803 = vunpack.c.l.b16 %v3530
        %v3804 = vunpack.c.h.b16 %v3530
        %v3805 = vunpack.c.l.b16 %v3531
        %v3806 = vunpack.c.h.b16 %v3531
        %v3807 = vunpack.c.l.b16 %v3532
        %v3808 = vunpack.c.h.b16 %v3532
        %v3809 = vunpack.c.l.b16 %v3533
        %v3810 = vunpack.c.h.b16 %v3533
        %v3811 = vunpack.c.l.b16 %v3534
        %v3812 = vunpack.c.h.b16 %v3534
        %v3813 = vunpack.c.l.b16 %v3535
        %v3814 = vunpack.c.h.b16 %v3535
        %v3815 = vunpack.c.l.b16 %v3536
        %v3816 = vunpack.c.h.b16 %v3536
        %v3817 = vunpack.c.l.b16 %v3537
        %v3818 = vunpack.c.h.b16 %v3537
        %v3819 = vunpack.c.l.b16 %v3538
        %v3820 = vunpack.c.h.b16 %v3538
        %v3821 = vunpack.c.l.b16 %v3539
        %v3822 = vunpack.c.h.b16 %v3539
        %v3823 = vunpack.c.l.b16 %v3540
        %v3824 = vunpack.c.h.b16 %v3540
        %v3825 = vunpack.c.l.b16 %v3541
        %v3826 = vunpack.c.h.b16 %v3541
        %v3827 = vunpack.c.l.b16 %v3542
        %v3828 = vunpack.c.h.b16 %v3542
        %v3829 = vunpack.c.l.b16 %v3543
        %v3830 = vunpack.c.h.b16 %v3543
        %v3831 = vunpack.c.l.b16 %v3544
        %v3832 = vunpack.c.h.b16 %v3544
        %v3833 = vunpack.c.l.b16 %v3545
        %v3834 = vunpack.c.h.b16 %v3545
        %v3835 = vunpack.c.l.b16 %v3546
        %v3836 = vunpack.c.h.b16 %v3546
        %v3837 = vunpack.c.l.b16 %v3547
        %v3838 = vunpack.c.h.b16 %v3547
        %v3839 = vunpack.c.l.b16 %v3548
        %v3840 = vunpack.c.h.b16 %v3548
        %v3841 = vunpack.c.l.b16 %v3549
        %v3842 = vunpack.c.h.b16 %v3549
        %v3843 = vunpack.c.l.b16 %v3550
        %v3844 = vunpack.c.h.b16 %v3550
        %v3845 = vunpack.c.l.b16 %v3551
        %v3846 = vunpack.c.h.b16 %v3551
        %v3847 = vunpack.c.l.b16 %v3552
        %v3848 = vunpack.c.h.b16 %v3552
        %v3849 = vunpack.c.l.b16 %v3553
        %v3850 = vunpack.c.h.b16 %v3553
        %v3851 = vunpack.c.l.b16 %v3554
        %v3852 = vunpack.c.h.b16 %v3554
        %v3853 = vunpack.c.l.b16 %v3555
        %v3854 = vunpack.c.h.b16 %v3555
        %v3855 = vunpack.c.l.b16 %v3556
        %v3856 = vunpack.c.h.b16 %v3556
        %v3857 = vunpack.c.l.b16 %v3557
        %v3858 = vunpack.c.h.b16 %v3557
        %v3859 = vunpack.c.l.b16 %v3558
        %v3860 = vunpack.c.h.b16 %v3558
        %v3861 = vunpack.c.l.b16 %v3559
        %v3862 = vunpack.c.h.b16 %v3559
        %v3863 = vunpack.c.l.b16 %v3560
        %v3864 = vunpack.c.h.b16 %v3560
        %v3865 = vunpack.c.l.b16 %v3561
        %v3866 = vunpack.c.h.b16 %v3561
        %v3867 = vunpack.c.l.b16 %v3562
        %v3868 = vunpack.c.h.b16 %v3562
        %v3869 = vunpack.c.l.b16 %v3563
        %v3870 = vunpack.c.h.b16 %v3563
        %v3871 = vunpack.c.l.b16 %v3564
        %v3872 = vunpack.c.h.b16 %v3564
        %v3873 = vunpack.c.l.b16 %v3565
        %v3874 = vunpack.c.h.b16 %v3565
        %v3875 = vunpack.c.l.b16 %v3566
        %v3876 = vunpack.c.h.b16 %v3566
        %v3877 = vunpack.c.l.b16 %v3567
        %v3878 = vunpack.c.h.b16 %v3567
        %v3879 = vunpack.c.l.b16 %v3568
        %v3880 = vunpack.c.h.b16 %v3568
        %v3881 = vunpack.c.l.b16 %v3569
        %v3882 = vunpack.c.h.b16 %v3569
        %v3883 = vunpack.c.l.b16 %v3570
        %v3884 = vunpack.c.h.b16 %v3570
        %v3885 = vunpack.c.l.b16 %v3571
        %v3886 = vunpack.c.h.b16 %v3571
        %v3887 = vunpack.c.l.b16 %v3572
        %v3888 = vunpack.c.h.b16 %v3572
        %v3889 = vunpack.c.l.b16 %v3573
        %v3890 = vunpack.c.h.b16 %v3573
        %v3891 = vunpack.c.l.b16 %v3574
        %v3892 = vunpack.c.h.b16 %v3574
        %v3893 = vunpack.c.l.b16 %v3575
        %v3894 = vunpack.c.h.b16 %v3575
        %v3895 = vunpack.c.l.b16 %v3576
        %v3896 = vunpack.c.h.b16 %v3576
        %v3897 = vunpack.c.l.b16 %v3577
        %v3898 = vunpack.c.h.b16 %v3577
        %v3899 = vunpack.c.l.b16 %v3578
        %v3900 = vunpack.c.h.b16 %v3578
        %v3901 = vunpack.c.l.b16 %v3579
        %v3902 = vunpack.c.h.b16 %v3579
        %v3903 = vunpack.c.l.b16 %v3580
        %v3904 = vunpack.c.h.b16 %v3580
        %v3905 = vunpack.c.l.b16 %v3581
        %v3906 = vunpack.c.h.b16 %v3581
        %v3907 = vunpack.c.l.b16 %v3582
        %v3908 = vunpack.c.h.b16 %v3582
        %v3909 = vunpack.c.l.b16 %v3583
        %v3910 = vunpack.c.h.b16 %v3583
        %v3911 = vunpack.c.l.b16 %v3584
        %v3912 = vunpack.c.h.b16 %v3584
        %v3913 = vunpack.c.l.b16 %v3585
        %v3914 = vunpack.c.h.b16 %v3585
        %v3915 = vunpack.c.l.b16 %v3586
        %v3916 = vunpack.c.h.b16 %v3586
        %v3917 = vunpack.c.l.b16 %v3587
        %v3918 = vunpack.c.h.b16 %v3587
        %v3919 = vunpack.c.l.b16 %v3588
        %v3920 = vunpack.c.h.b16 %v3588
        %v3921 = vunpack.c.l.b16 %v3589
        %v3922 = vunpack.c.h.b16 %v3589
        %v3923 = vunpack.c.l.b16 %v3590
        %v3924 = vunpack.c.h.b16 %v3590
        %v3925 = vunpack.c.l.b16 %v3591
        %v3926 = vunpack.c.h.b16 %v3591
        %v3927 = vunpack.c.l.b16 %v3592
        %v3928 = vunpack.c.h.b16 %v3592
        %v3929 = vpack.c.b16 %v3705, %v3705
        %v3930 = vpack.c.b16 %v3706, %v3706
        %v3931 = vpack.c.b16 %v3707, %v3707
        %v3932 = vpack.c.b16 %v3708, %v3708
        %v3933 = vpack.c.b16 %v3709, %v3709
        %v3934 = vpack.c.b16 %v3710, %v3710
        %v3935 = vpack.c.b16 %v3711, %v3711
        %v3936 = vpack.c.b16 %v3712, %v3712
        %v3937 = vpack.c.b16 %v3713, %v3713
        %v3938 = vpack.c.b16 %v3714, %v3714
        %v3939 = vpack.c.b16 %v3715, %v3715
        %v3940 = vpack.c.b16 %v3716, %v3716
        %v3941 = vpack.c.b16 %v3717, %v3717
        %v3942 = vpack.c.b16 %v3718, %v3718
        %v3943 = vpack.c.b16 %v3719, %v3719
        %v3944 = vpack.c.b16 %v3720, %v3720
        %v3945 = vpack.c.b16 %v3721, %v3721
        %v3946 = vpack.c.b16 %v3722, %v3722
        %v3947 = vpack.c.b16 %v3723, %v3723
        %v3948 = vpack.c.b16 %v3724, %v3724
        %v3949 = vpack.c.b16 %v3725, %v3725
        %v3950 = vpack.c.b16 %v3726, %v3726
        %v3951 = vpack.c.b16 %v3727, %v3727
        %v3952 = vpack.c.b16 %v3728, %v3728
        %v3953 = vpack.c.b16 %v3729, %v3729
        %v3954 = vpack.c.b16 %v3730, %v3730
        %v3955 = vpack.c.b16 %v3731, %v3731
        %v3956 = vpack.c.b16 %v3732, %v3732
        %v3957 = vpack.c.b16 %v3733, %v3733
        %v3958 = vpack.c.b16 %v3734, %v3734
        %v3959 = vpack.c.b16 %v3735, %v3735
        %v3960 = vpack.c.b16 %v3736, %v3736
        %v3961 = vpack.c.b16 %v3737, %v3737
        %v3962 = vpack.c.b16 %v3738, %v3738
        %v3963 = vpack.c.b16 %v3739, %v3739
        %v3964 = vpack.c.b16 %v3740, %v3740
        %v3965 = vpack.c.b16 %v3741, %v3741
        %v3966 = vpack.c.b16 %v3742, %v3742
        %v3967 = vpack.c.b16 %v3743, %v3743
        %v3968 = vpack.c.b16 %v3744, %v3744
        %v3969 = vpack.c.b16 %v3745, %v3745
        %v3970 = vpack.c.b16 %v3746, %v3746
        %v3971 = vpack.c.b16 %v3747, %v3747
        %v3972 = vpack.c.b16 %v3748, %v3748
        %v3973 = vpack.c.b16 %v3749, %v3749
        %v3974 = vpack.c.b16 %v3750, %v3750
        %v3975 = vpack.c.b16 %v3751, %v3751
        %v3976 = vpack.c.b16 %v3752, %v3752
        %v3977 = vpack.c.b16 %v3753, %v3753
        %v3978 = vpack.c.b16 %v3754, %v3754
        %v3979 = vpack.c.b16 %v3755, %v3755
        %v3980 = vpack.c.b16 %v3756, %v3756
        %v3981 = vpack.c.b16 %v3757, %v3757
        %v3982 = vpack.c.b16 %v3758, %v3758
        %v3983 = vpack.c.b16 %v3759, %v3759
        %v3984 = vpack.c.b16 %v3760, %v3760
        %v3985 = vpack.c.b16 %v3761, %v3761
        %v3986 = vpack.c.b16 %v3762, %v3762
        %v3987 = vpack.c.b16 %v3763, %v3763
        %v3988 = vpack.c.b16 %v3764, %v3764
        %v3989 = vpack.c.b16 %v3765, %v3765
        %v3990 = vpack.c.b16 %v3766, %v3766
        %v3991 = vpack.c.b16 %v3767, %v3767
        %v3992 = vpack.c.b16 %v3768, %v3768
        %v3993 = vpack.c.b16 %v3769, %v3769
        %v3994 = vpack.c.b16 %v3770, %v3770
        %v3995 = vpack.c.b16 %v3771, %v3771
        %v3996 = vpack.c.b16 %v3772, %v3772
        %v3997 = vpack.c.b16 %v3773, %v3773
        %v3998 = vpack.c.b16 %v3774, %v3774
        %v3999 = vpack.c.b16 %v3775, %v3775
        %v4000 = vpack.c.b16 %v3776, %v3776
        %v4001 = vpack.c.b16 %v3777, %v3777
        %v4002 = vpack.c.b16 %v3778, %v3778
        %v4003 = vpack.c.b16 %v3779, %v3779
        %v4004 = vpack.c.b16 %v3780, %v3780
        %v4005 = vpack.c.b16 %v3781, %v3781
        %v4006 = vpack.c.b16 %v3782, %v3782
        %v4007 = vpack.c.b16 %v3783, %v3783
        %v4008 = vpack.c.b16 %v3784, %v3784
        %v4009 = vpack.c.b16 %v3785, %v3785
        %v4010 = vpack.c.b16 %v3786, %v3786
        %v4011 = vpack.c.b16 %v3787, %v3787
        %v4012 = vpack.c.b16 %v3788, %v3788
        %v4013 = vpack.c.b16 %v3789, %v3789
        %v4014 = vpack.c.b16 %v3790, %v3790
        %v4015 = vpack.c.b16 %v3791, %v3791
        %v4016 = vpack.c.b16 %v3792, %v3792
        %v4017 = vpack.c.b16 %v3793, %v3793
        %v4018 = vpack.c.b16 %v3794, %v3794
        %v4019 = vpack.c.b16 %v3795, %v3795
        %v4020 = vpack.c.b16 %v3796, %v3796
        %v4021 = vpack.c.b16 %v3797, %v3797
        %v4022 = vpack.c.b16 %v3798, %v3798
        %v4023 = vpack.c.b16 %v3799, %v3799
        %v4024 = vpack.c.b16 %v3800, %v3800
        %v4025 = vpack.c.b16 %v3801, %v3801
        %v4026 = vpack.c.b16 %v3802, %v3802
        %v4027 = vpack.c.b16 %v3803, %v3803
        %v4028 = vpack.c.b16 %v3804, %v3804
        %v4029 = vpack.c.b16 %v3805, %v3805
        %v4030 = vpack.c.b16 %v3806, %v3806
        %v4031 = vpack.c.b16 %v3807, %v3807
        %v4032 = vpack.c.b16 %v3808, %v3808
        %v4033 = vpack.c.b16 %v3809, %v3809
        %v4034 = vpack.c.b16 %v3810, %v3810
        %v4035 = vpack.c.b16 %v3811, %v3811
        %v4036 = vpack.c.b16 %v3812, %v3812
        %v4037 = vpack.c.b16 %v3813, %v3813
        %v4038 = vpack.c.b16 %v3814, %v3814
        %v4039 = vpack.c.b16 %v3815, %v3815
        %v4040 = vpack.c.b16 %v3816, %v3816
        %v4041 = vpack.c.b16 %v3817, %v3817
        %v4042 = vpack.c.b16 %v3818, %v3818
        %v4043 = vpack.c.b16 %v3819, %v3819
        %v4044 = vpack.c.b16 %v3820, %v3820
        %v4045 = vpack.c.b16 %v3821, %v3821
        %v4046 = vpack.c.b16 %v3822, %v3822
        %v4047 = vpack.c.b16 %v3823, %v3823
        %v4048 = vpack.c.b16 %v3824, %v3824
        %v4049 = vpack.c.b16 %v3825, %v3825
        %v4050 = vpack.c.b16 %v3826, %v3826
        %v4051 = vpack.c.b16 %v3827, %v3827
        %v4052 = vpack.c.b16 %v3828, %v3828
        %v4053 = vpack.c.b16 %v3829, %v3829
        %v4054 = vpack.c.b16 %v3830, %v3830
        %v4055 = vpack.c.b16 %v3831, %v3831
        %v4056 = vpack.c.b16 %v3832, %v3832
        %v4057 = vpack.c.b16 %v3833, %v3833
        %v4058 = vpack.c.b16 %v3834, %v3834
        %v4059 = vpack.c.b16 %v3835, %v3835
        %v4060 = vpack.c.b16 %v3836, %v3836
        %v4061 = vpack.c.b16 %v3837, %v3837
        %v4062 = vpack.c.b16 %v3838, %v3838
        %v4063 = vpack.c.b16 %v3839, %v3839
        %v4064 = vpack.c.b16 %v3840, %v3840
        %v4065 = vpack.c.b16 %v3841, %v3841
        %v4066 = vpack.c.b16 %v3842, %v3842
        %v4067 = vpack.c.b16 %v3843, %v3843
        %v4068 = vpack.c.b16 %v3844, %v3844
        %v4069 = vpack.c.b16 %v3845, %v3845
        %v4070 = vpack.c.b16 %v3846, %v3846
        %v4071 = vpack.c.b16 %v3847, %v3847
        %v4072 = vpack.c.b16 %v3848, %v3848
        %v4073 = vpack.c.b16 %v3849, %v3849
        %v4074 = vpack.c.b16 %v3850, %v3850
        %v4075 = vpack.c.b16 %v3851, %v3851
        %v4076 = vpack.c.b16 %v3852, %v3852
        %v4077 = vpack.c.b16 %v3853, %v3853
        %v4078 = vpack.c.b16 %v3854, %v3854
        %v4079 = vpack.c.b16 %v3855, %v3855
        %v4080 = vpack.c.b16 %v3856, %v3856
        %v4081 = vpack.c.b16 %v3857, %v3857
        %v4082 = vpack.c.b16 %v3858, %v3858
        %v4083 = vpack.c.b16 %v3859, %v3859
        %v4084 = vpack.c.b16 %v3860, %v3860
        %v4085 = vpack.c.b16 %v3861, %v3861
        %v4086 = vpack.c.b16 %v3862, %v3862
        %v4087 = vpack.c.b16 %v3863, %v3863
        %v4088 = vpack.c.b16 %v3864, %v3864
        %v4089 = vpack.c.b16 %v3865, %v3865
        %v4090 = vpack.c.b16 %v3866, %v3866
        %v4091 = vpack.c.b16 %v3867, %v3867
        %v4092 = vpack.c.b16 %v3868, %v3868
        %v4093 = vpack.c.b16 %v3869, %v3869
        %v4094 = vpack.c.b16 %v3870, %v3870
        %v4095 = vpack.c.b16 %v3871, %v3871
        %v4096 = vpack.c.b16 %v3872, %v3872
        %v4097 = vpack.c.b16 %v3873, %v3873
        %v4098 = vpack.c.b16 %v3874, %v3874
        %v4099 = vpack.c.b16 %v3875, %v3875
        %v4100 = vpack.c.b16 %v3876, %v3876
        %v4101 = vpack.c.b16 %v3877, %v3877
        %v4102 = vpack.c.b16 %v3878, %v3878
        %v4103 = vpack.c.b16 %v3879, %v3879
        %v4104 = vpack.c.b16 %v3880, %v3880
        %v4105 = vpack.c.b16 %v3881, %v3881
        %v4106 = vpack.c.b16 %v3882, %v3882
        %v4107 = vpack.c.b16 %v3883, %v3883
        %v4108 = vpack.c.b16 %v3884, %v3884
        %v4109 = vpack.c.b16 %v3885, %v3885
        %v4110 = vpack.c.b16 %v3886, %v3886
        %v4111 = vpack.c.b16 %v3887, %v3887
        %v4112 = vpack.c.b16 %v3888, %v3888
        %v4113 = vpack.c.b16 %v3889, %v3889
        %v4114 = vpack.c.b16 %v3890, %v3890
        %v4115 = vpack.c.b16 %v3891, %v3891
        %v4116 = vpack.c.b16 %v3892, %v3892
        %v4117 = vpack.c.b16 %v3893, %v3893
        %v4118 = vpack.c.b16 %v3894, %v3894
        %v4119 = vpack.c.b16 %v3895, %v3895
        %v4120 = vpack.c.b16 %v3896, %v3896
        %v4121 = vpack.c.b16 %v3897, %v3897
        %v4122 = vpack.c.b16 %v3898, %v3898
        %v4123 = vpack.c.b16 %v3899, %v3899
        %v4124 = vpack.c.b16 %v3900, %v3900
        %v4125 = vpack.c.b16 %v3901, %v3901
        %v4126 = vpack.c.b16 %v3902, %v3902
        %v4127 = vpack.c.b16 %v3903, %v3903
        %v4128 = vpack.c.b16 %v3904, %v3904
        %v4129 = vpack.c.b16 %v3905, %v3905
        %v4130 = vpack.c.b16 %v3906, %v3906
        %v4131 = vpack.c.b16 %v3907, %v3907
        %v4132 = vpack.c.b16 %v3908, %v3908
        %v4133 = vpack.c.b16 %v3909, %v3909
        %v4134 = vpack.c.b16 %v3910, %v3910
        %v4135 = vpack.c.b16 %v3911, %v3911
        %v4136 = vpack.c.b16 %v3912, %v3912
        %v4137 = vpack.c.b16 %v3913, %v3913
        %v4138 = vpack.c.b16 %v3914, %v3914
        %v4139 = vpack.c.b16 %v3915, %v3915
        %v4140 = vpack.c.b16 %v3916, %v3916
        %v4141 = vpack.c.b16 %v3917, %v3917
        %v4142 = vpack.c.b16 %v3918, %v3918
        %v4143 = vpack.c.b16 %v3919, %v3919
        %v4144 = vpack.c.b16 %v3920, %v3920
        %v4145 = vpack.c.b16 %v3921, %v3921
        %v4146 = vpack.c.b16 %v3922, %v3922
        %v4147 = vpack.c.b16 %v3923, %v3923
        %v4148 = vpack.c.b16 %v3924, %v3924
        %v4149 = vpack.c.b16 %v3925, %v3925
        %v4150 = vpack.c.b16 %v3926, %v3926
        %v4151 = vpack.c.b16 %v3927, %v3927
        %v4152 = vpack.c.b16 %v3928, %v3928
        %4377 = vst [vmem:[%s204] sm:$0xf] %v3929
        %4378 = vst [vmem:[%s204 + $0x4] sm:$0xf] %v3930
        %4379 = vst [vmem:[%s204 + $0x8] sm:$0xf] %v3931
        %4380 = vst [vmem:[%s204 + $0xc] sm:$0xf] %v3932
        %4381 = vst [vmem:[%s204 + $0x10] sm:$0xf] %v3933
        %4382 = vst [vmem:[%s204 + $0x14] sm:$0xf] %v3934
        %4383 = vst [vmem:[%s204 + $0x18] sm:$0xf] %v3935
        %4384 = vst [vmem:[%s204 + $0x1c] sm:$0xf] %v3936
        %4385 = vst [vmem:[%s204 + $0x20] sm:$0xf] %v3937
        %4386 = vst [vmem:[%s204 + $0x24] sm:$0xf] %v3938
        %4387 = vst [vmem:[%s204 + $0x28] sm:$0xf] %v3939
        %4388 = vst [vmem:[%s204 + $0x2c] sm:$0xf] %v3940
        %4389 = vst [vmem:[%s204 + $0x30] sm:$0xf] %v3941
        %4390 = vst [vmem:[%s204 + $0x34] sm:$0xf] %v3942
        %4391 = vst [vmem:[%s204 + $0x38] sm:$0xf] %v3943
        %4392 = vst [vmem:[%s204 + $0x3c] sm:$0xf] %v3944
        %4393 = vst [vmem:[%s204 + $0x40] sm:$0xf] %v3945
        %4394 = vst [vmem:[%s204 + $0x44] sm:$0xf] %v3946
        %4395 = vst [vmem:[%s204 + $0x48] sm:$0xf] %v3947
        %4396 = vst [vmem:[%s204 + $0x4c] sm:$0xf] %v3948
        %4397 = vst [vmem:[%s204 + $0x50] sm:$0xf] %v3949
        %4398 = vst [vmem:[%s204 + $0x54] sm:$0xf] %v3950
        %4399 = vst [vmem:[%s204 + $0x58] sm:$0xf] %v3951
        %4400 = vst [vmem:[%s204 + $0x5c] sm:$0xf] %v3952
        %4401 = vst [vmem:[%s204 + $0x60] sm:$0xf] %v3953
        %4402 = vst [vmem:[%s204 + $0x64] sm:$0xf] %v3954
        %4403 = vst [vmem:[%s204 + $0x68] sm:$0xf] %v3955
        %4404 = vst [vmem:[%s204 + $0x6c] sm:$0xf] %v3956
        %4405 = vst [vmem:[%s204 + $0x70] sm:$0xf] %v3957
        %4406 = vst [vmem:[%s204 + $0x74] sm:$0xf] %v3958
        %4407 = vst [vmem:[%s204 + $0x78] sm:$0xf] %v3959
        %4408 = vst [vmem:[%s204 + $0x7c] sm:$0xf] %v3960
        %4409 = vst [vmem:[%s204 + $0x80] sm:$0xf] %v3961
        %4410 = vst [vmem:[%s204 + $0x84] sm:$0xf] %v3962
        %4411 = vst [vmem:[%s204 + $0x88] sm:$0xf] %v3963
        %4412 = vst [vmem:[%s204 + $0x8c] sm:$0xf] %v3964
        %4413 = vst [vmem:[%s204 + $0x90] sm:$0xf] %v3965
        %4414 = vst [vmem:[%s204 + $0x94] sm:$0xf] %v3966
        %4415 = vst [vmem:[%s204 + $0x98] sm:$0xf] %v3967
        %4416 = vst [vmem:[%s204 + $0x9c] sm:$0xf] %v3968
        %4417 = vst [vmem:[%s204 + $0xa0] sm:$0xf] %v3969
        %4418 = vst [vmem:[%s204 + $0xa4] sm:$0xf] %v3970
        %4419 = vst [vmem:[%s204 + $0xa8] sm:$0xf] %v3971
        %4420 = vst [vmem:[%s204 + $0xac] sm:$0xf] %v3972
        %4421 = vst [vmem:[%s204 + $0xb0] sm:$0xf] %v3973
        %4422 = vst [vmem:[%s204 + $0xb4] sm:$0xf] %v3974
        %4423 = vst [vmem:[%s204 + $0xb8] sm:$0xf] %v3975
        %4424 = vst [vmem:[%s204 + $0xbc] sm:$0xf] %v3976
        %4425 = vst [vmem:[%s204 + $0xc0] sm:$0xf] %v3977
        %4426 = vst [vmem:[%s204 + $0xc4] sm:$0xf] %v3978
        %4427 = vst [vmem:[%s204 + $0xc8] sm:$0xf] %v3979
        %4428 = vst [vmem:[%s204 + $0xcc] sm:$0xf] %v3980
        %4429 = vst [vmem:[%s204 + $0xd0] sm:$0xf] %v3981
        %4430 = vst [vmem:[%s204 + $0xd4] sm:$0xf] %v3982
        %4431 = vst [vmem:[%s204 + $0xd8] sm:$0xf] %v3983
        %4432 = vst [vmem:[%s204 + $0xdc] sm:$0xf] %v3984
        %4433 = vst [vmem:[%s204 + $0xe0] sm:$0xf] %v3985
        %4434 = vst [vmem:[%s204 + $0xe4] sm:$0xf] %v3986
        %4435 = vst [vmem:[%s204 + $0xe8] sm:$0xf] %v3987
        %4436 = vst [vmem:[%s204 + $0xec] sm:$0xf] %v3988
        %4437 = vst [vmem:[%s204 + $0xf0] sm:$0xf] %v3989
        %4438 = vst [vmem:[%s204 + $0xf4] sm:$0xf] %v3990
        %4439 = vst [vmem:[%s204 + $0xf8] sm:$0xf] %v3991
        %4440 = vst [vmem:[%s204 + $0xfc] sm:$0xf] %v3992
        %4441 = vst [vmem:[%s204 + $0x100] sm:$0xf] %v3993
        %4442 = vst [vmem:[%s204 + $0x104] sm:$0xf] %v3994
        %4443 = vst [vmem:[%s204 + $0x108] sm:$0xf] %v3995
        %4444 = vst [vmem:[%s204 + $0x10c] sm:$0xf] %v3996
        %4445 = vst [vmem:[%s204 + $0x110] sm:$0xf] %v3997
        %4446 = vst [vmem:[%s204 + $0x114] sm:$0xf] %v3998
        %4447 = vst [vmem:[%s204 + $0x118] sm:$0xf] %v3999
        %4448 = vst [vmem:[%s204 + $0x11c] sm:$0xf] %v4000
        %4449 = vst [vmem:[%s204 + $0x120] sm:$0xf] %v4001
        %4450 = vst [vmem:[%s204 + $0x124] sm:$0xf] %v4002
        %4451 = vst [vmem:[%s204 + $0x128] sm:$0xf] %v4003
        %4452 = vst [vmem:[%s204 + $0x12c] sm:$0xf] %v4004
        %4453 = vst [vmem:[%s204 + $0x130] sm:$0xf] %v4005
        %4454 = vst [vmem:[%s204 + $0x134] sm:$0xf] %v4006
        %4455 = vst [vmem:[%s204 + $0x138] sm:$0xf] %v4007
        %4456 = vst [vmem:[%s204 + $0x13c] sm:$0xf] %v4008
        %4457 = vst [vmem:[%s204 + $0x140] sm:$0xf] %v4009
        %4458 = vst [vmem:[%s204 + $0x144] sm:$0xf] %v4010
        %4459 = vst [vmem:[%s204 + $0x148] sm:$0xf] %v4011
        %4460 = vst [vmem:[%s204 + $0x14c] sm:$0xf] %v4012
        %4461 = vst [vmem:[%s204 + $0x150] sm:$0xf] %v4013
        %4462 = vst [vmem:[%s204 + $0x154] sm:$0xf] %v4014
        %4463 = vst [vmem:[%s204 + $0x158] sm:$0xf] %v4015
        %4464 = vst [vmem:[%s204 + $0x15c] sm:$0xf] %v4016
        %4465 = vst [vmem:[%s204 + $0x160] sm:$0xf] %v4017
        %4466 = vst [vmem:[%s204 + $0x164] sm:$0xf] %v4018
        %4467 = vst [vmem:[%s204 + $0x168] sm:$0xf] %v4019
        %4468 = vst [vmem:[%s204 + $0x16c] sm:$0xf] %v4020
        %4469 = vst [vmem:[%s204 + $0x170] sm:$0xf] %v4021
        %4470 = vst [vmem:[%s204 + $0x174] sm:$0xf] %v4022
        %4471 = vst [vmem:[%s204 + $0x178] sm:$0xf] %v4023
        %4472 = vst [vmem:[%s204 + $0x17c] sm:$0xf] %v4024
        %4473 = vst [vmem:[%s204 + $0x180] sm:$0xf] %v4025
        %4474 = vst [vmem:[%s204 + $0x184] sm:$0xf] %v4026
        %4475 = vst [vmem:[%s204 + $0x188] sm:$0xf] %v4027
        %4476 = vst [vmem:[%s204 + $0x18c] sm:$0xf] %v4028
        %4477 = vst [vmem:[%s204 + $0x190] sm:$0xf] %v4029
        %4478 = vst [vmem:[%s204 + $0x194] sm:$0xf] %v4030
        %4479 = vst [vmem:[%s204 + $0x198] sm:$0xf] %v4031
        %4480 = vst [vmem:[%s204 + $0x19c] sm:$0xf] %v4032
        %4481 = vst [vmem:[%s204 + $0x1a0] sm:$0xf] %v4033
        %4482 = vst [vmem:[%s204 + $0x1a4] sm:$0xf] %v4034
        %4483 = vst [vmem:[%s204 + $0x1a8] sm:$0xf] %v4035
        %4484 = vst [vmem:[%s204 + $0x1ac] sm:$0xf] %v4036
        %4485 = vst [vmem:[%s204 + $0x1b0] sm:$0xf] %v4037
        %4486 = vst [vmem:[%s204 + $0x1b4] sm:$0xf] %v4038
        %4487 = vst [vmem:[%s204 + $0x1b8] sm:$0xf] %v4039
        %4488 = vst [vmem:[%s204 + $0x1bc] sm:$0xf] %v4040
        %4489 = vst [vmem:[%s204 + $0x1c0] sm:$0xf] %v4041
        %4490 = vst [vmem:[%s204 + $0x1c4] sm:$0xf] %v4042
        %4491 = vst [vmem:[%s204 + $0x1c8] sm:$0xf] %v4043
        %4492 = vst [vmem:[%s204 + $0x1cc] sm:$0xf] %v4044
        %4493 = vst [vmem:[%s204 + $0x1d0] sm:$0xf] %v4045
        %4494 = vst [vmem:[%s204 + $0x1d4] sm:$0xf] %v4046
        %4495 = vst [vmem:[%s204 + $0x1d8] sm:$0xf] %v4047
        %4496 = vst [vmem:[%s204 + $0x1dc] sm:$0xf] %v4048
        %4497 = vst [vmem:[%s204 + $0x1e0] sm:$0xf] %v4049
        %4498 = vst [vmem:[%s204 + $0x1e4] sm:$0xf] %v4050
        %4499 = vst [vmem:[%s204 + $0x1e8] sm:$0xf] %v4051
        %4500 = vst [vmem:[%s204 + $0x1ec] sm:$0xf] %v4052
        %4501 = vst [vmem:[%s204 + $0x1f0] sm:$0xf] %v4053
        %4502 = vst [vmem:[%s204 + $0x1f4] sm:$0xf] %v4054
        %4503 = vst [vmem:[%s204 + $0x1f8] sm:$0xf] %v4055
        %4504 = vst [vmem:[%s204 + $0x1fc] sm:$0xf] %v4056
        %4505 = vst [vmem:[%s204 + $0x200] sm:$0xf] %v4057
        %4506 = vst [vmem:[%s204 + $0x204] sm:$0xf] %v4058
        %4507 = vst [vmem:[%s204 + $0x208] sm:$0xf] %v4059
        %4508 = vst [vmem:[%s204 + $0x20c] sm:$0xf] %v4060
        %4509 = vst [vmem:[%s204 + $0x210] sm:$0xf] %v4061
        %4510 = vst [vmem:[%s204 + $0x214] sm:$0xf] %v4062
        %4511 = vst [vmem:[%s204 + $0x218] sm:$0xf] %v4063
        %4512 = vst [vmem:[%s204 + $0x21c] sm:$0xf] %v4064
        %4513 = vst [vmem:[%s204 + $0x220] sm:$0xf] %v4065
        %4514 = vst [vmem:[%s204 + $0x224] sm:$0xf] %v4066
        %4515 = vst [vmem:[%s204 + $0x228] sm:$0xf] %v4067
        %4516 = vst [vmem:[%s204 + $0x22c] sm:$0xf] %v4068
        %4517 = vst [vmem:[%s204 + $0x230] sm:$0xf] %v4069
        %4518 = vst [vmem:[%s204 + $0x234] sm:$0xf] %v4070
        %4519 = vst [vmem:[%s204 + $0x238] sm:$0xf] %v4071
        %4520 = vst [vmem:[%s204 + $0x23c] sm:$0xf] %v4072
        %4521 = vst [vmem:[%s204 + $0x240] sm:$0xf] %v4073
        %4522 = vst [vmem:[%s204 + $0x244] sm:$0xf] %v4074
        %4523 = vst [vmem:[%s204 + $0x248] sm:$0xf] %v4075
        %4524 = vst [vmem:[%s204 + $0x24c] sm:$0xf] %v4076
        %4525 = vst [vmem:[%s204 + $0x250] sm:$0xf] %v4077
        %4526 = vst [vmem:[%s204 + $0x254] sm:$0xf] %v4078
        %4527 = vst [vmem:[%s204 + $0x258] sm:$0xf] %v4079
        %4528 = vst [vmem:[%s204 + $0x25c] sm:$0xf] %v4080
        %4529 = vst [vmem:[%s204 + $0x260] sm:$0xf] %v4081
        %4530 = vst [vmem:[%s204 + $0x264] sm:$0xf] %v4082
        %4531 = vst [vmem:[%s204 + $0x268] sm:$0xf] %v4083
        %4532 = vst [vmem:[%s204 + $0x26c] sm:$0xf] %v4084
        %4533 = vst [vmem:[%s204 + $0x270] sm:$0xf] %v4085
        %4534 = vst [vmem:[%s204 + $0x274] sm:$0xf] %v4086
        %4535 = vst [vmem:[%s204 + $0x278] sm:$0xf] %v4087
        %4536 = vst [vmem:[%s204 + $0x27c] sm:$0xf] %v4088
        %4537 = vst [vmem:[%s204 + $0x280] sm:$0xf] %v4089
        %4538 = vst [vmem:[%s204 + $0x284] sm:$0xf] %v4090
        %4539 = vst [vmem:[%s204 + $0x288] sm:$0xf] %v4091
        %4540 = vst [vmem:[%s204 + $0x28c] sm:$0xf] %v4092
        %4541 = vst [vmem:[%s204 + $0x290] sm:$0xf] %v4093
        %4542 = vst [vmem:[%s204 + $0x294] sm:$0xf] %v4094
        %4543 = vst [vmem:[%s204 + $0x298] sm:$0xf] %v4095
        %4544 = vst [vmem:[%s204 + $0x29c] sm:$0xf] %v4096
        %4545 = vst [vmem:[%s204 + $0x2a0] sm:$0xf] %v4097
        %4546 = vst [vmem:[%s204 + $0x2a4] sm:$0xf] %v4098
        %4547 = vst [vmem:[%s204 + $0x2a8] sm:$0xf] %v4099
        %4548 = vst [vmem:[%s204 + $0x2ac] sm:$0xf] %v4100
        %4549 = vst [vmem:[%s204 + $0x2b0] sm:$0xf] %v4101
        %4550 = vst [vmem:[%s204 + $0x2b4] sm:$0xf] %v4102
        %4551 = vst [vmem:[%s204 + $0x2b8] sm:$0xf] %v4103
        %4552 = vst [vmem:[%s204 + $0x2bc] sm:$0xf] %v4104
        %4553 = vst [vmem:[%s204 + $0x2c0] sm:$0xf] %v4105
        %4554 = vst [vmem:[%s204 + $0x2c4] sm:$0xf] %v4106
        %4555 = vst [vmem:[%s204 + $0x2c8] sm:$0xf] %v4107
        %4556 = vst [vmem:[%s204 + $0x2cc] sm:$0xf] %v4108
        %4557 = vst [vmem:[%s204 + $0x2d0] sm:$0xf] %v4109
        %4558 = vst [vmem:[%s204 + $0x2d4] sm:$0xf] %v4110
        %4559 = vst [vmem:[%s204 + $0x2d8] sm:$0xf] %v4111
        %4560 = vst [vmem:[%s204 + $0x2dc] sm:$0xf] %v4112
        %4561 = vst [vmem:[%s204 + $0x2e0] sm:$0xf] %v4113
        %4562 = vst [vmem:[%s204 + $0x2e4] sm:$0xf] %v4114
        %4563 = vst [vmem:[%s204 + $0x2e8] sm:$0xf] %v4115
        %4564 = vst [vmem:[%s204 + $0x2ec] sm:$0xf] %v4116
        %4565 = vst [vmem:[%s204 + $0x2f0] sm:$0xf] %v4117
        %4566 = vst [vmem:[%s204 + $0x2f4] sm:$0xf] %v4118
        %4567 = vst [vmem:[%s204 + $0x2f8] sm:$0xf] %v4119
        %4568 = vst [vmem:[%s204 + $0x2fc] sm:$0xf] %v4120
        %4569 = vst [vmem:[%s204 + $0x300] sm:$0xf] %v4121
        %4570 = vst [vmem:[%s204 + $0x304] sm:$0xf] %v4122
        %4571 = vst [vmem:[%s204 + $0x308] sm:$0xf] %v4123
        %4572 = vst [vmem:[%s204 + $0x30c] sm:$0xf] %v4124
        %4573 = vst [vmem:[%s204 + $0x310] sm:$0xf] %v4125
        %4574 = vst [vmem:[%s204 + $0x314] sm:$0xf] %v4126
        %4575 = vst [vmem:[%s204 + $0x318] sm:$0xf] %v4127
        %4576 = vst [vmem:[%s204 + $0x31c] sm:$0xf] %v4128
        %4577 = vst [vmem:[%s204 + $0x320] sm:$0xf] %v4129
        %4578 = vst [vmem:[%s204 + $0x324] sm:$0xf] %v4130
        %4579 = vst [vmem:[%s204 + $0x328] sm:$0xf] %v4131
        %4580 = vst [vmem:[%s204 + $0x32c] sm:$0xf] %v4132
        %4581 = vst [vmem:[%s204 + $0x330] sm:$0xf] %v4133
        %4582 = vst [vmem:[%s204 + $0x334] sm:$0xf] %v4134
        %4583 = vst [vmem:[%s204 + $0x338] sm:$0xf] %v4135
        %4584 = vst [vmem:[%s204 + $0x33c] sm:$0xf] %v4136
        %4585 = vst [vmem:[%s204 + $0x340] sm:$0xf] %v4137
        %4586 = vst [vmem:[%s204 + $0x344] sm:$0xf] %v4138
        %4587 = vst [vmem:[%s204 + $0x348] sm:$0xf] %v4139
        %4588 = vst [vmem:[%s204 + $0x34c] sm:$0xf] %v4140
        %4589 = vst [vmem:[%s204 + $0x350] sm:$0xf] %v4141
        %4590 = vst [vmem:[%s204 + $0x354] sm:$0xf] %v4142
        %4591 = vst [vmem:[%s204 + $0x358] sm:$0xf] %v4143
        %4592 = vst [vmem:[%s204 + $0x35c] sm:$0xf] %v4144
        %4593 = vst [vmem:[%s204 + $0x360] sm:$0xf] %v4145
        %4594 = vst [vmem:[%s204 + $0x364] sm:$0xf] %v4146
        %4595 = vst [vmem:[%s204 + $0x368] sm:$0xf] %v4147
        %4596 = vst [vmem:[%s204 + $0x36c] sm:$0xf] %v4148
        %4597 = vst [vmem:[%s204 + $0x370] sm:$0xf] %v4149
        %4598 = vst [vmem:[%s204 + $0x374] sm:$0xf] %v4150
        %4599 = vst [vmem:[%s204 + $0x378] sm:$0xf] %v4151
        %4600 = vst [vmem:[%s204 + $0x37c] sm:$0xf] %v4152
        %s4601 = sand.u32 %s117, 1
        %s4602 = scalar_lea.sflag [#allocation3], %s4601
        %s4603 = sand.u32 %s117, 1
        %s4604 = smul.addr %s4603, 896
        %s4605 = scalar_lea.vmem [#allocation2], %s4604
        // Predicated region
        $region33: #{tpu_custom_call.1} parent=31 // pred_check
          %p4606 = pneg %p127
        $region34: #{tpu_custom_call.1} parent=31 // pred_check_branch
          %4608 = sbr.rel (%p4606) target = $region36
        $region35: #{tpu_custom_call.1} parent=31 // pred_region
          %s4609 = smul.u32 224, %s21
          %s4611 = ssub.s32 14336, 14336
          %4612 = vsyncadd %s4602, %s4611
          %s4613 = sadd.s32 %s22, %s4609
          %s4614 = smul.addr %s4613, 64
          %s4615 = scalar_lea.hbm %s3, %s4614
          %s4616 = sshll.u32 %s4605, 4
          %s4617 = int_to_ptr.vmem [resolvable:$true] %s4616
          %4622 = dma.vmem_to_hbm [thread:$0]  %s4617, 14336, %s4615, %s4602, 64, 64, 4
        $region36: #{tpu_custom_call.1} parent=31 // pred_fallthru
          _
      $region32: #{tpu_custom_call.1} parent=5 // pred_fallthru
        _
      %p4623 = scmp.le.s32.totalorder 2, %s12
      // Predicated region
      $region37: #{tpu_custom_call.1} parent=5 // pred_check
        %p4624 = pneg %p4623
      $region38: #{tpu_custom_call.1} parent=5 // pred_check_branch
        %4626 = sbr.rel (%p4624) target = $region40
      $region39: #{tpu_custom_call.1} parent=5 // pred_region
        %s4627 = ssub.s32 %s12, 2
        // Predicated region
        $region41: #{tpu_custom_call.1} parent=39 // pred_check
          %p4628 = pneg %p133
        $region42: #{tpu_custom_call.1} parent=39 // pred_check_branch
          %4630 = sbr.rel (%p4628) target = $region44
        $region43: #{tpu_custom_call.1} parent=39 // pred_region
          %s4631 = sand.u32 %s118, 1
          %s4632 = scalar_lea.sflag [#allocation3], %s4631
          %s4633 = sand.u32 %s118, 1
          %s4634 = smul.addr %s4633, 896
          %s4635 = scalar_lea.vmem [#allocation2], %s4634
          %4636 = dma.done %s4632, 14336
        $region44: #{tpu_custom_call.1} parent=39 // pred_fallthru
          _
      $region40: #{tpu_custom_call.1} parent=5 // pred_fallthru
        _
    $region6: #{tpu_custom_call.1} parent=1 // loop_footer
      %s16 = sadd.s32 1, %s12
    $region7: #{tpu_custom_call.1} parent=1 // loop_footer_branch
      %11 = sbr.rel target = $region3
    $region8: #{tpu_custom_call.1} parent=1 // loop_exit
      _
    %4637 = vsyncpa [#allocation3], 1
    %s4638 = scalar_lea.sflag [#allocation3], 1
    %4639 = vsyncpa %s4638, 1

</llo_original>
